<compile_context>
chip_gen: v7x
topology: tpu7x:2x2x1
jax: 0.10.0
libtpu: 0.0.40
codegen_flags: <defaults>
</compile_context>

<pallas_src>
import functools

import jax
import jax.numpy as jnp
import numpy as np
from jax.experimental import pallas as pl
from jax.experimental.pallas import tpu as pltpu


def _cbam_kernel(x_ref, w1_ref, b1_ref, w2_ref, b2_ref, bwm_ref, bwx_ref,
                 o_ref):
    Bt = x_ref.shape[0]
    mdt = w1_ref.dtype                                   # MXU operand dtype
    x = x_ref[...].astype(jnp.float32)                   # (Bt, C, HW)

    # ---- Channel attention --------------------------------------------------
    avg = jnp.mean(x, axis=2)                            # (Bt, C) lane reduce
    mx = jnp.max(x, axis=2)                              # (Bt, C)
    pooled = jnp.concatenate([avg, mx], axis=0)          # (2*Bt, C)

    # One MLP pass over the stacked pooled matrix (two MXU matmuls total).
    h = jnp.dot(pooled.astype(mdt), w1_ref[...],
                preferred_element_type=jnp.float32) + b1_ref[...]
    h = jnp.maximum(h, 0.0)                              # (2*Bt, Cr)
    z = jnp.dot(h.astype(mdt), w2_ref[...],
                preferred_element_type=jnp.float32) + b2_ref[...]  # (2*Bt, C)
    ca = jax.nn.sigmoid(z[:Bt] + z[Bt:])                 # (Bt, C)

    xc = x * ca[:, :, None]                              # channel-gated input

    # ---- Spatial attention --------------------------------------------------
    # Cross-channel reductions run on the XLU (sublane reduce), leaving the
    # MXU free; no M=1 batched matmul needed for the mean map.
    mean_map = jnp.mean(xc, axis=1)                      # (Bt, HW)
    max_map = jnp.max(xc, axis=1)                        # (Bt, HW)

    # 7x7 SAME conv over the two pooled maps == two banded matmuls,
    # accumulated in f32 (avoids a (Bt, 2*HW) lane-concat relayout).
    conv = (jnp.dot(mean_map.astype(mdt), bwm_ref[...],
                    preferred_element_type=jnp.float32)
            + jnp.dot(max_map.astype(mdt), bwx_ref[...],
                      preferred_element_type=jnp.float32))   # (Bt, HW)
    sa = jax.nn.sigmoid(conv)

    o_ref[...] = (xc * sa[:, None, :]).astype(o_ref.dtype)


def _spatial_conv_matrices(conv_w, H, W, dtype):
    """Banded matrices (Wm, Wx), each (H*W, H*W), such that
    mean_flat @ Wm + max_flat @ Wx == SAME KxK conv over the 2 pooled maps.
    Zero padding is encoded by simply omitting out-of-bounds taps."""
    conv_w = np.asarray(conv_w, dtype=np.float32)        # (1, 2, K, K) OIHW
    K = conv_w.shape[-1]
    P = K // 2
    w = conv_w[0]                                        # (2, K, K)
    HW = H * W
    M = np.zeros((2, HW, HW), dtype=np.float32)
    for ch in range(2):
        for kh in range(K):
            for kw in range(K):
                val = w[ch, kh, kw]
                for i in range(H):
                    ii = i + kh - P
                    if ii < 0 or ii >= H:
                        continue
                    for j in range(W):
                        jj = j + kw - P
                        if jj < 0 or jj >= W:
                            continue
                        M[ch, ii * W + jj, i * W + j] += val
    # TODO(synk): for large H*W the dense 2*HW*HW operand outgrows v7x VMEM;
    # switch to a block-banded (+-P rows) decomposition there.
    return jnp.asarray(M[0], dtype), jnp.asarray(M[1], dtype)


def _vmem_budget_bytes():
    """~Half of physical per-core VMEM (64 MiB on v5e/v6e, 32 MiB on v7x),
    leaving headroom for compiler-managed temporaries and semaphores."""
    try:
        info = pltpu.get_tpu_info()
        cap = int(getattr(info, "vmem_capacity_bytes", 0)) or (64 << 20)
    except Exception:
        cap = 64 << 20                      # conservative: fits every gen
    return min(cap // 2, 96 << 20)


def _vmem_bytes_for_tile(bt, C, HW, Cr, x_item, out_item, w_item, param_bufs):
    """Honest per-step VMEM estimate: pipelined in/out blocks, full-block f32
    temporaries (x cast, xc, gated output), banded conv operands, MLP params."""
    io = 2 * bt * C * HW * (x_item + out_item)           # double-buffered
    temps = 3 * bt * C * HW * 4
    band = param_bufs * 2 * HW * HW * w_item
    mlp = param_bufs * (C * Cr + Cr + Cr * C + C) * 4
    return io + temps + band + mlp + (1 << 20)           # +1 MiB slack


def _pick_batch_tile(B, bytes_for_tile, budget):
    divisors = [t for t in range(1, B + 1) if B % t == 0]
    # Keep >=2 grid steps so v7x's two TensorCores each get a share.
    cands = [t for t in divisors if t <= max(1, B // 2)] or [1]
    fitting = [t for t in cands if t <= 128 and bytes_for_tile(t) <= budget]
    if not fitting:
        fitting = [min(cands)]
    mult8 = [t for t in fitting if t % 8 == 0]
    return max(mult8) if mult8 else max(fitting)


def cbam_pallas(x, w1, b1, w2, b2, conv_w, *, kernel_size=7,
                batch_tile=None, mxu_bf16=True):
    """x: (B, C, H, W) float32, NCHW (same convention as the PyTorch module).
    w1: (C, Cr), b1: (Cr,), w2: (Cr, C), b2: (C,), conv_w: (1, 2, K, K)."""
    del kernel_size  # implied by conv_w
    B, C, H, W = x.shape
    Cr = w1.shape[1]
    HW = H * W
    mdt = jnp.bfloat16 if mxu_bf16 else jnp.float32

    x_flat = x.reshape(B, C, HW)                         # lane-dense last dim
    w1_m = w1.astype(mdt)
    w2_m = w2.astype(mdt)
    b1_2d = b1.reshape(1, Cr).astype(jnp.float32)
    b2_2d = b2.reshape(1, C).astype(jnp.float32)
    band_mean, band_max = _spatial_conv_matrices(conv_w, H, W, mdt)

    budget = _vmem_budget_bytes()
    bytes_for_tile = functools.partial(
        _vmem_bytes_for_tile, C=C, HW=HW, Cr=Cr,
        x_item=x.dtype.itemsize, out_item=x.dtype.itemsize,
        w_item=jnp.dtype(mdt).itemsize, param_bufs=2)
    if batch_tile is None:
        batch_tile = _pick_batch_tile(B, bytes_for_tile, budget)
    Bt = batch_tile
    assert B % Bt == 0, "batch_tile must divide B"
    # Scoped VMEM limit sized to the chosen tile, never above ~physical.
    vmem_limit = int(min(max(budget, bytes_for_tile(Bt) + (4 << 20)),
                         2 * budget))

    param_arrays = (w1_m, b1_2d, w2_m, b2_2d, band_mean, band_max)
    param_shapes = [tuple(a.shape) for a in param_arrays]  # all 2-D

    def build(buffered_params):
        def pspec(shape):
            if buffered_params:
                # Constant index map -> one resident buffer is enough;
                # frees VMEM otherwise spent double-buffering parameters.
                return pl.BlockSpec(shape, lambda b: (0, 0),
                                    pipeline_mode=pl.Buffered(1))
            return pl.BlockSpec(shape, lambda b: (0, 0))

        return pl.pallas_call(
            _cbam_kernel,
            out_shape=jax.ShapeDtypeStruct((B, C, HW), x.dtype),
            grid_spec=pltpu.PrefetchScalarGridSpec(
                num_scalar_prefetch=0,
                grid=(B // Bt,),
                in_specs=[pl.BlockSpec((Bt, C, HW), lambda b: (b, 0, 0))]
                         + [pspec(s) for s in param_shapes],
                out_specs=pl.BlockSpec((Bt, C, HW), lambda b: (b, 0, 0)),
            ),
            compiler_params=pltpu.CompilerParams(
                dimension_semantics=("parallel",),
                vmem_limit_bytes=vmem_limit),
        )

    try:
        out_flat = build(True)(x_flat, *param_arrays)
    except Exception:
        # Some JAX versions reject pl.Buffered(1); default double-buffering of
        # the (small) parameter blocks is an acceptable fallback.
        out_flat = build(False)(x_flat, *param_arrays)

    return out_flat.reshape(B, C, H, W)


def cbam_reference(x, w1, b1, w2, b2, conv_w):
    """Pure-JAX reference matching the PyTorch CBAM forward semantics."""
    hp = jax.lax.Precision.HIGHEST
    avg = x.mean(axis=(2, 3))
    mx = x.max(axis=(2, 3))

    def fc(v):
        h = jnp.maximum(jnp.dot(v, w1, precision=hp) + b1, 0.0)
        return jnp.dot(h, w2, precision=hp) + b2

    ca = jax.nn.sigmoid(fc(avg) + fc(mx))[:, :, None, None]
    xc = x * ca

    mean_map = xc.mean(axis=1, keepdims=True)
    max_map = xc.max(axis=1, keepdims=True)
    cat = jnp.concatenate([mean_map, max_map], axis=1)
    conv = jax.lax.conv_general_dilated(
        cat, conv_w, window_strides=(1, 1), padding="SAME",
        dimension_numbers=("NCHW", "OIHW", "NCHW"), precision=hp)
    return xc * jax.nn.sigmoid(conv)


if __name__ == "__main__":
    B, C, H, W = 16, 32, 16, 16           # small, but exercises batch tiling
    reduction_ratio = 16
    Cr = C // reduction_ratio
    K = 7

    key = jax.random.PRNGKey(0)
    kx, k1, k2, k3, k4, k5 = jax.random.split(key, 6)

    x = jax.random.normal(kx, (B, C, H, W), dtype=jnp.float32)
    # Deterministic synthetic parameters (shapes match nn.Linear / nn.Conv2d).
    w1 = jax.random.normal(k1, (C, Cr), dtype=jnp.float32) * 0.1   # fc[0].weight^T
    b1 = jax.random.normal(k2, (Cr,), dtype=jnp.float32) * 0.1     # fc[0].bias
    w2 = jax.random.normal(k3, (Cr, C), dtype=jnp.float32) * 0.1   # fc[2].weight^T
    b2 = jax.random.normal(k4, (C,), dtype=jnp.float32) * 0.1      # fc[2].bias
    conv_w = jax.random.normal(k5, (1, 2, K, K), dtype=jnp.float32) * 0.1  # SA conv

    ref = cbam_reference(x, w1, b1, w2, b2, conv_w)

    # 1) Structural-correctness check with f32 MXU operands (tight tolerance).
    out_f32 = jax.block_until_ready(
        cbam_pallas(x, w1, b1, w2, b2, conv_w, mxu_bf16=False))
    assert out_f32.shape == (B, C, H, W)
    assert jnp.allclose(out_f32, ref, atol=2e-3, rtol=2e-3), \
        f"f32 max err {jnp.max(jnp.abs(out_f32 - ref))}"

    # 2) Performance mode: bf16 MXU operands (band matrices, MLP weights,
    #    pooled/map activations). Looser tolerance covers bf16 operand
    #    quantization across the ~98-tap spatial conv.
    out_bf16 = jax.block_until_ready(
        cbam_pallas(x, w1, b1, w2, b2, conv_w, mxu_bf16=True))
    assert out_bf16.shape == (B, C, H, W)
    assert jnp.allclose(out_bf16, ref, atol=2e-2, rtol=2e-2), \
        f"bf16 max err {jnp.max(jnp.abs(out_bf16 - ref))}"

    print("KERNEL_OK")
</pallas_src>

<mosaic_0001>
module attributes {stable_mosaic.version = 11 : i64} {
  func.func @_cbam_kernel(%arg0: i32, %arg1: memref<8x32x256xf32, #tpu.memory_space<vmem>>, %arg2: memref<32x2xf32, #tpu.memory_space<vmem>>, %arg3: memref<1x2xf32, #tpu.memory_space<vmem>>, %arg4: memref<2x32xf32, #tpu.memory_space<vmem>>, %arg5: memref<1x32xf32, #tpu.memory_space<vmem>>, %arg6: memref<256x256xf32, #tpu.memory_space<vmem>>, %arg7: memref<256x256xf32, #tpu.memory_space<vmem>>, %arg8: memref<8x32x256xf32, #tpu.memory_space<vmem>>) attributes {dimension_semantics = [#tpu.dimension_semantics<parallel>], iteration_bounds = array<i64: 2>, scalar_prefetch = 0 : i64, scratch_operands = 0 : i64, tpu.core_type = #tpu.core_type<tc>, window_params = [{transform_indices = @transform_0, window_bounds = array<i64: 8, 32, 256>}, {pipeline_mode = #tpu.pipeline_mode<synchronous>, transform_indices = @transform_1, window_bounds = array<i64: 32, 2>}, {pipeline_mode = #tpu.pipeline_mode<synchronous>, transform_indices = @transform_2, window_bounds = array<i64: 1, 2>}, {pipeline_mode = #tpu.pipeline_mode<synchronous>, transform_indices = @transform_3, window_bounds = array<i64: 2, 32>}, {pipeline_mode = #tpu.pipeline_mode<synchronous>, transform_indices = @transform_4, window_bounds = array<i64: 1, 32>}, {pipeline_mode = #tpu.pipeline_mode<synchronous>, transform_indices = @transform_5, window_bounds = array<i64: 256, 256>}, {pipeline_mode = #tpu.pipeline_mode<synchronous>, transform_indices = @transform_6, window_bounds = array<i64: 256, 256>}, {transform_indices = @transform_7, window_bounds = array<i64: 8, 32, 256>}]} {
    %c0 = arith.constant 0 : index
    %c0_0 = arith.constant 0 : index
    %c0_1 = arith.constant 0 : index
    %0 = vector.load %arg1[%c0, %c0_0, %c0_1] : memref<8x32x256xf32, #tpu.memory_space<vmem>>, vector<8x32x256xf32>
    %cst = arith.constant dense<0.000000e+00> : vector<8x32xf32>
    %1 = vector.multi_reduction <add>, %0, %cst [2] : vector<8x32x256xf32> to vector<8x32xf32>
    %cst_2 = arith.constant 2.560000e+02 : f32
    %2 = vector.broadcast %cst_2 : f32 to vector<8x32xf32>
    %3 = arith.divf %1, %2 : vector<8x32xf32>
    %cst_3 = arith.constant dense<0xFF800000> : vector<8x32xf32>
    %4 = vector.multi_reduction <maximumf>, %0, %cst_3 [2] : vector<8x32x256xf32> to vector<8x32xf32>
    %5 = tpu.concatenate %3, %4 in 0 : vector<8x32xf32>, vector<8x32xf32> -> vector<16x32xf32>
    %c0_4 = arith.constant 0 : index
    %c0_5 = arith.constant 0 : index
    %6 = vector.load %arg2[%c0_4, %c0_5] : memref<32x2xf32, #tpu.memory_space<vmem>>, vector<32x2xf32>
    %cst_6 = arith.constant dense<0.000000e+00> : vector<16x2xf32>
    %7 = tpu.matmul %5, %6, %cst_6 {dimension_numbers = #tpu.dot_dimension_numbers<[1], [0], [0], [1], [0, 0, 1, 1], [], []>} : vector<16x32xf32>, vector<32x2xf32>, vector<16x2xf32> -> vector<16x2xf32>
    %c0_7 = arith.constant 0 : index
    %c0_8 = arith.constant 0 : index
    %8 = vector.load %arg3[%c0_7, %c0_8] : memref<1x2xf32, #tpu.memory_space<vmem>>, vector<1x2xf32>
    %9 = vector.broadcast %8 : vector<1x2xf32> to vector<16x2xf32>
    %10 = arith.addf %7, %9 : vector<16x2xf32>
    %cst_9 = arith.constant 0.000000e+00 : f32
    %11 = vector.broadcast %cst_9 : f32 to vector<16x2xf32>
    %12 = arith.maximumf %10, %11 : vector<16x2xf32>
    %c0_10 = arith.constant 0 : index
    %c0_11 = arith.constant 0 : index
    %13 = vector.load %arg4[%c0_10, %c0_11] : memref<2x32xf32, #tpu.memory_space<vmem>>, vector<2x32xf32>
    %cst_12 = arith.constant dense<0.000000e+00> : vector<16x32xf32>
    %14 = tpu.matmul %12, %13, %cst_12 {dimension_numbers = #tpu.dot_dimension_numbers<[1], [0], [0], [1], [0, 0, 1, 1], [], []>} : vector<16x2xf32>, vector<2x32xf32>, vector<16x32xf32> -> vector<16x32xf32>
    %c0_13 = arith.constant 0 : index
    %c0_14 = arith.constant 0 : index
    %15 = vector.load %arg5[%c0_13, %c0_14] : memref<1x32xf32, #tpu.memory_space<vmem>>, vector<1x32xf32>
    %16 = vector.broadcast %15 : vector<1x32xf32> to vector<16x32xf32>
    %17 = arith.addf %14, %16 : vector<16x32xf32>
    %18 = vector.extract_strided_slice %17 {offsets = [0, 0], sizes = [8, 32], strides = [1, 1]} : vector<16x32xf32> to vector<8x32xf32>
    %19 = vector.extract_strided_slice %17 {offsets = [8, 0], sizes = [8, 32], strides = [1, 1]} : vector<16x32xf32> to vector<8x32xf32>
    %20 = arith.addf %18, %19 : vector<8x32xf32>
    %21 = arith.negf %20 : vector<8x32xf32>
    %22 = math.exp %21 : vector<8x32xf32>
    %cst_15 = arith.constant 1.000000e+00 : f32
    %23 = vector.broadcast %cst_15 : f32 to vector<8x32xf32>
    %24 = arith.addf %23, %22 : vector<8x32xf32>
    %25 = arith.divf %23, %24 : vector<8x32xf32>
    %26 = vector.shape_cast %25 : vector<8x32xf32> to vector<8x32x1xf32>
    %27 = vector.broadcast %26 : vector<8x32x1xf32> to vector<8x32x256xf32>
    %28 = arith.mulf %0, %27 : vector<8x32x256xf32>
    %cst_16 = arith.constant dense<0.000000e+00> : vector<8x256xf32>
    %29 = vector.multi_reduction <add>, %28, %cst_16 [1] : vector<8x32x256xf32> to vector<8x256xf32>
    %cst_17 = arith.constant 3.200000e+01 : f32
    %30 = vector.broadcast %cst_17 : f32 to vector<8x256xf32>
    %31 = arith.divf %29, %30 : vector<8x256xf32>
    %cst_18 = arith.constant dense<0xFF800000> : vector<8x256xf32>
    %32 = vector.multi_reduction <maximumf>, %28, %cst_18 [1] : vector<8x32x256xf32> to vector<8x256xf32>
    %c0_19 = arith.constant 0 : index
    %c0_20 = arith.constant 0 : index
    %33 = vector.load %arg6[%c0_19, %c0_20] : memref<256x256xf32, #tpu.memory_space<vmem>>, vector<256x256xf32>
    %cst_21 = arith.constant dense<0.000000e+00> : vector<8x256xf32>
    %34 = tpu.matmul %31, %33, %cst_21 {dimension_numbers = #tpu.dot_dimension_numbers<[1], [0], [0], [1], [0, 0, 1, 1], [], []>} : vector<8x256xf32>, vector<256x256xf32>, vector<8x256xf32> -> vector<8x256xf32>
    %c0_22 = arith.constant 0 : index
    %c0_23 = arith.constant 0 : index
    %35 = vector.load %arg7[%c0_22, %c0_23] : memref<256x256xf32, #tpu.memory_space<vmem>>, vector<256x256xf32>
    %cst_24 = arith.constant dense<0.000000e+00> : vector<8x256xf32>
    %36 = tpu.matmul %32, %35, %cst_24 {dimension_numbers = #tpu.dot_dimension_numbers<[1], [0], [0], [1], [0, 0, 1, 1], [], []>} : vector<8x256xf32>, vector<256x256xf32>, vector<8x256xf32> -> vector<8x256xf32>
    %37 = arith.addf %34, %36 : vector<8x256xf32>
    %38 = arith.negf %37 : vector<8x256xf32>
    %39 = math.exp %38 : vector<8x256xf32>
    %cst_25 = arith.constant 1.000000e+00 : f32
    %40 = vector.broadcast %cst_25 : f32 to vector<8x256xf32>
    %41 = arith.addf %40, %39 : vector<8x256xf32>
    %42 = arith.divf %40, %41 : vector<8x256xf32>
    %43 = vector.shape_cast %42 : vector<8x256xf32> to vector<8x1x256xf32>
    %44 = vector.broadcast %43 : vector<8x1x256xf32> to vector<8x32x256xf32>
    %45 = arith.mulf %28, %44 : vector<8x32x256xf32>
    %c0_26 = arith.constant 0 : index
    %c0_27 = arith.constant 0 : index
    %c0_28 = arith.constant 0 : index
    %46 = vector.load %arg8[%c0_26, %c0_27, %c0_28] : memref<8x32x256xf32, #tpu.memory_space<vmem>>, vector<8x32x256xf32>
    tpu.vector_store %arg8[%c0_26, %c0_27, %c0_28], %45 {strides = array<i32>} : memref<8x32x256xf32, #tpu.memory_space<vmem>>, vector<8x32x256xf32>,
    return
  }
  func.func @transform_0(%arg0: i32) -> (i32, i32, i32) {
    %c0_i32 = arith.constant 0 : i32
    %c0_i32_0 = arith.constant 0 : i32
    %c0_i32_1 = arith.constant 0 : i32
    return %arg0, %c0_i32, %c0_i32_0 : i32, i32, i32
  }
  func.func @transform_1(%arg0: i32) -> (i32, i32) {
    %c0_i32 = arith.constant 0 : i32
    %c0_i32_0 = arith.constant 0 : i32
    %c0_i32_1 = arith.constant 0 : i32
    return %c0_i32, %c0_i32_0 : i32, i32
  }
  func.func @transform_2(%arg0: i32) -> (i32, i32) {
    %c0_i32 = arith.constant 0 : i32
    %c0_i32_0 = arith.constant 0 : i32
    %c0_i32_1 = arith.constant 0 : i32
    return %c0_i32, %c0_i32_0 : i32, i32
  }
  func.func @transform_3(%arg0: i32) -> (i32, i32) {
    %c0_i32 = arith.constant 0 : i32
    %c0_i32_0 = arith.constant 0 : i32
    %c0_i32_1 = arith.constant 0 : i32
    return %c0_i32, %c0_i32_0 : i32, i32
  }
  func.func @transform_4(%arg0: i32) -> (i32, i32) {
    %c0_i32 = arith.constant 0 : i32
    %c0_i32_0 = arith.constant 0 : i32
    %c0_i32_1 = arith.constant 0 : i32
    return %c0_i32, %c0_i32_0 : i32, i32
  }
  func.func @transform_5(%arg0: i32) -> (i32, i32) {
    %c0_i32 = arith.constant 0 : i32
    %c0_i32_0 = arith.constant 0 : i32
    %c0_i32_1 = arith.constant 0 : i32
    return %c0_i32, %c0_i32_0 : i32, i32
  }
  func.func @transform_6(%arg0: i32) -> (i32, i32) {
    %c0_i32 = arith.constant 0 : i32
    %c0_i32_0 = arith.constant 0 : i32
    %c0_i32_1 = arith.constant 0 : i32
    return %c0_i32, %c0_i32_0 : i32, i32
  }
  func.func @transform_7(%arg0: i32) -> (i32, i32, i32) {
    %c0_i32 = arith.constant 0 : i32
    %c0_i32_0 = arith.constant 0 : i32
    %c0_i32_1 = arith.constant 0 : i32
    return %arg0, %c0_i32, %c0_i32_0 : i32, i32, i32
  }
}

module attributes {stable_mosaic.version = 11 : i64} {
  func.func @_cbam_kernel(%arg0: i32, %arg1: memref<8x32x256xf32, #tpu.memory_space<vmem>>, %arg2: memref<32x2xf32, #tpu.memory_space<vmem>>, %arg3: memref<1x2xf32, #tpu.memory_space<vmem>>, %arg4: memref<2x32xf32, #tpu.memory_space<vmem>>, %arg5: memref<1x32xf32, #tpu.memory_space<vmem>>, %arg6: memref<256x256xf32, #tpu.memory_space<vmem>>, %arg7: memref<256x256xf32, #tpu.memory_space<vmem>>, %arg8: memref<8x32x256xf32, #tpu.memory_space<vmem>>) attributes {dimension_semantics = [#tpu.dimension_semantics<parallel>], iteration_bounds = array<i64: 2>, scalar_prefetch = 0 : i64, scratch_operands = 0 : i64, tpu.core_type = #tpu.core_type<tc>, window_params = [{transform_indices = @transform_0, window_bounds = array<i64: 8, 32, 256>}, {pipeline_mode = #tpu.pipeline_mode<synchronous>, transform_indices = @transform_1, window_bounds = array<i64: 32, 2>}, {pipeline_mode = #tpu.pipeline_mode<synchronous>, transform_indices = @transform_2, window_bounds = array<i64: 1, 2>}, {pipeline_mode = #tpu.pipeline_mode<synchronous>, transform_indices = @transform_3, window_bounds = array<i64: 2, 32>}, {pipeline_mode = #tpu.pipeline_mode<synchronous>, transform_indices = @transform_4, window_bounds = array<i64: 1, 32>}, {pipeline_mode = #tpu.pipeline_mode<synchronous>, transform_indices = @transform_5, window_bounds = array<i64: 256, 256>}, {pipeline_mode = #tpu.pipeline_mode<synchronous>, transform_indices = @transform_6, window_bounds = array<i64: 256, 256>}, {transform_indices = @transform_7, window_bounds = array<i64: 8, 32, 256>}]} {
    %c0 = arith.constant 0 : index
    %c0_0 = arith.constant 0 : index
    %c0_1 = arith.constant 0 : index
    %0 = vector.load %arg1[%c0, %c0_0, %c0_1] : memref<8x32x256xf32, #tpu.memory_space<vmem>>, vector<8x32x256xf32>
    %cst = arith.constant dense<0.000000e+00> : vector<8x32xf32>
    %1 = vector.multi_reduction <add>, %0, %cst [2] : vector<8x32x256xf32> to vector<8x32xf32>
    %cst_2 = arith.constant 2.560000e+02 : f32
    %2 = vector.broadcast %cst_2 : f32 to vector<8x32xf32>
    %3 = arith.divf %1, %2 : vector<8x32xf32>
    %cst_3 = arith.constant dense<0xFF800000> : vector<8x32xf32>
    %4 = vector.multi_reduction <maximumf>, %0, %cst_3 [2] : vector<8x32x256xf32> to vector<8x32xf32>
    %5 = tpu.concatenate %3, %4 in 0 : vector<8x32xf32>, vector<8x32xf32> -> vector<16x32xf32>
    %c0_4 = arith.constant 0 : index
    %c0_5 = arith.constant 0 : index
    %6 = vector.load %arg2[%c0_4, %c0_5] : memref<32x2xf32, #tpu.memory_space<vmem>>, vector<32x2xf32>
    %cst_6 = arith.constant dense<0.000000e+00> : vector<16x2xf32>
    %7 = tpu.matmul %5, %6, %cst_6 {dimension_numbers = #tpu.dot_dimension_numbers<[1], [0], [0], [1], [0, 0, 1, 1], [], []>} : vector<16x32xf32>, vector<32x2xf32>, vector<16x2xf32> -> vector<16x2xf32>
    %c0_7 = arith.constant 0 : index
    %c0_8 = arith.constant 0 : index
    %8 = vector.load %arg3[%c0_7, %c0_8] : memref<1x2xf32, #tpu.memory_space<vmem>>, vector<1x2xf32>
    %9 = vector.broadcast %8 : vector<1x2xf32> to vector<16x2xf32>
    %10 = arith.addf %7, %9 : vector<16x2xf32>
    %cst_9 = arith.constant 0.000000e+00 : f32
    %11 = vector.broadcast %cst_9 : f32 to vector<16x2xf32>
    %12 = arith.maximumf %10, %11 : vector<16x2xf32>
    %c0_10 = arith.constant 0 : index
    %c0_11 = arith.constant 0 : index
    %13 = vector.load %arg4[%c0_10, %c0_11] : memref<2x32xf32, #tpu.memory_space<vmem>>, vector<2x32xf32>
    %cst_12 = arith.constant dense<0.000000e+00> : vector<16x32xf32>
    %14 = tpu.matmul %12, %13, %cst_12 {dimension_numbers = #tpu.dot_dimension_numbers<[1], [0], [0], [1], [0, 0, 1, 1], [], []>} : vector<16x2xf32>, vector<2x32xf32>, vector<16x32xf32> -> vector<16x32xf32>
    %c0_13 = arith.constant 0 : index
    %c0_14 = arith.constant 0 : index
    %15 = vector.load %arg5[%c0_13, %c0_14] : memref<1x32xf32, #tpu.memory_space<vmem>>, vector<1x32xf32>
    %16 = vector.broadcast %15 : vector<1x32xf32> to vector<16x32xf32>
    %17 = arith.addf %14, %16 : vector<16x32xf32>
    %18 = vector.extract_strided_slice %17 {offsets = [0, 0], sizes = [8, 32], strides = [1, 1]} : vector<16x32xf32> to vector<8x32xf32>
    %19 = vector.extract_strided_slice %17 {offsets = [8, 0], sizes = [8, 32], strides = [1, 1]} : vector<16x32xf32> to vector<8x32xf32>
    %20 = arith.addf %18, %19 : vector<8x32xf32>
    %21 = arith.negf %20 : vector<8x32xf32>
    %22 = math.exp %21 : vector<8x32xf32>
    %cst_15 = arith.constant 1.000000e+00 : f32
    %23 = vector.broadcast %cst_15 : f32 to vector<8x32xf32>
    %24 = arith.addf %23, %22 : vector<8x32xf32>
    %25 = arith.divf %23, %24 : vector<8x32xf32>
    %26 = vector.shape_cast %25 : vector<8x32xf32> to vector<8x32x1xf32>
    %27 = vector.broadcast %26 : vector<8x32x1xf32> to vector<8x32x256xf32>
    %28 = arith.mulf %0, %27 : vector<8x32x256xf32>
    %cst_16 = arith.constant dense<0.000000e+00> : vector<8x256xf32>
    %29 = vector.multi_reduction <add>, %28, %cst_16 [1] : vector<8x32x256xf32> to vector<8x256xf32>
    %cst_17 = arith.constant 3.200000e+01 : f32
    %30 = vector.broadcast %cst_17 : f32 to vector<8x256xf32>
    %31 = arith.divf %29, %30 : vector<8x256xf32>
    %cst_18 = arith.constant dense<0xFF800000> : vector<8x256xf32>
    %32 = vector.multi_reduction <maximumf>, %28, %cst_18 [1] : vector<8x32x256xf32> to vector<8x256xf32>
    %c0_19 = arith.constant 0 : index
    %c0_20 = arith.constant 0 : index
    %33 = vector.load %arg6[%c0_19, %c0_20] : memref<256x256xf32, #tpu.memory_space<vmem>>, vector<256x256xf32>
    %cst_21 = arith.constant dense<0.000000e+00> : vector<8x256xf32>
    %34 = tpu.matmul %31, %33, %cst_21 {dimension_numbers = #tpu.dot_dimension_numbers<[1], [0], [0], [1], [0, 0, 1, 1], [], []>} : vector<8x256xf32>, vector<256x256xf32>, vector<8x256xf32> -> vector<8x256xf32>
    %c0_22 = arith.constant 0 : index
    %c0_23 = arith.constant 0 : index
    %35 = vector.load %arg7[%c0_22, %c0_23] : memref<256x256xf32, #tpu.memory_space<vmem>>, vector<256x256xf32>
    %cst_24 = arith.constant dense<0.000000e+00> : vector<8x256xf32>
    %36 = tpu.matmul %32, %35, %cst_24 {dimension_numbers = #tpu.dot_dimension_numbers<[1], [0], [0], [1], [0, 0, 1, 1], [], []>} : vector<8x256xf32>, vector<256x256xf32>, vector<8x256xf32> -> vector<8x256xf32>
    %37 = arith.addf %34, %36 : vector<8x256xf32>
    %38 = arith.negf %37 : vector<8x256xf32>
    %39 = math.exp %38 : vector<8x256xf32>
    %cst_25 = arith.constant 1.000000e+00 : f32
    %40 = vector.broadcast %cst_25 : f32 to vector<8x256xf32>
    %41 = arith.addf %40, %39 : vector<8x256xf32>
    %42 = arith.divf %40, %41 : vector<8x256xf32>
    %43 = vector.shape_cast %42 : vector<8x256xf32> to vector<8x1x256xf32>
    %44 = vector.broadcast %43 : vector<8x1x256xf32> to vector<8x32x256xf32>
    %45 = arith.mulf %28, %44 : vector<8x32x256xf32>
    %c0_26 = arith.constant 0 : index
    %c0_27 = arith.constant 0 : index
    %c0_28 = arith.constant 0 : index
    %46 = vector.load %arg8[%c0_26, %c0_27, %c0_28] : memref<8x32x256xf32, #tpu.memory_space<vmem>>, vector<8x32x256xf32>
    tpu.vector_store %arg8[%c0_26, %c0_27, %c0_28], %45 {strides = array<i32>} : memref<8x32x256xf32, #tpu.memory_space<vmem>>, vector<8x32x256xf32>,
    return
  }
  func.func @transform_0(%arg0: i32) -> (i32, i32, i32) {
    %c0_i32 = arith.constant 0 : i32
    %c0_i32_0 = arith.constant 0 : i32
    %c0_i32_1 = arith.constant 0 : i32
    return %arg0, %c0_i32, %c0_i32_0 : i32, i32, i32
  }
  func.func @transform_1(%arg0: i32) -> (i32, i32) {
    %c0_i32 = arith.constant 0 : i32
    %c0_i32_0 = arith.constant 0 : i32
    %c0_i32_1 = arith.constant 0 : i32
    return %c0_i32, %c0_i32_0 : i32, i32
  }
  func.func @transform_2(%arg0: i32) -> (i32, i32) {
    %c0_i32 = arith.constant 0 : i32
    %c0_i32_0 = arith.constant 0 : i32
    %c0_i32_1 = arith.constant 0 : i32
    return %c0_i32, %c0_i32_0 : i32, i32
  }
  func.func @transform_3(%arg0: i32) -> (i32, i32) {
    %c0_i32 = arith.constant 0 : i32
    %c0_i32_0 = arith.constant 0 : i32
    %c0_i32_1 = arith.constant 0 : i32
    return %c0_i32, %c0_i32_0 : i32, i32
  }
  func.func @transform_4(%arg0: i32) -> (i32, i32) {
    %c0_i32 = arith.constant 0 : i32
    %c0_i32_0 = arith.constant 0 : i32
    %c0_i32_1 = arith.constant 0 : i32
    return %c0_i32, %c0_i32_0 : i32, i32
  }
  func.func @transform_5(%arg0: i32) -> (i32, i32) {
    %c0_i32 = arith.constant 0 : i32
    %c0_i32_0 = arith.constant 0 : i32
    %c0_i32_1 = arith.constant 0 : i32
    return %c0_i32, %c0_i32_0 : i32, i32
  }
  func.func @transform_6(%arg0: i32) -> (i32, i32) {
    %c0_i32 = arith.constant 0 : i32
    %c0_i32_0 = arith.constant 0 : i32
    %c0_i32_1 = arith.constant 0 : i32
    return %c0_i32, %c0_i32_0 : i32, i32
  }
  func.func @transform_7(%arg0: i32) -> (i32, i32, i32) {
    %c0_i32 = arith.constant 0 : i32
    %c0_i32_0 = arith.constant 0 : i32
    %c0_i32_1 = arith.constant 0 : i32
    return %arg0, %c0_i32, %c0_i32_0 : i32, i32, i32
  }
}

</mosaic_0001>

<llo_original>
// kernel: tpu_custom_call.1
$region0: #{tpu_custom_call.1}
  #allocation0 [shape = 'u32[]', space=smem, size = 0x4, offset = 0x4, fixed_abs, tag = 'smem constant byte address 0x4 - core index']
  #allocation1 [shape = 'u32[144,128]{1,0:T(1,128)}', space=vmem, size = 0x12000, scoped, tag = 'internal scratch']
  %s0 = inlined_call_operand.hbm [shape: f32[16,32,256], index: 0, kind: input, shape index: {}]
  %s1 = inlined_call_operand.vmem [shape: f32[32,2], index: 1, kind: input, shape index: {}]
  %s2 = inlined_call_operand.vmem [shape: f32[1,2], index: 2, kind: input, shape index: {}]
  %s3 = inlined_call_operand.vmem [shape: f32[2,32], index: 3, kind: input, shape index: {}]
  %s4 = inlined_call_operand.vmem [shape: f32[1,32], index: 4, kind: input, shape index: {}]
  %s5 = inlined_call_operand.hbm [shape: f32[256,256], index: 5, kind: input, shape index: {}]
  %s6 = inlined_call_operand.hbm [shape: f32[256,256], index: 6, kind: input, shape index: {}]
  %s7 = inlined_call_operand.hbm [shape: f32[16,32,256], index: 7, kind: output, shape index: {}]
  %s8 = sld [smem:[#allocation0]]
  $region73: #{tpu_custom_call.1} parent=0
    _
  %s10 = ssub.s32 1, %s8
  %s11 = scalar_select 0, %s10, %s8
  $region1: #{tpu_custom_call.1} parent=0
    #allocation2 [shape = 'u8[524288]{0}', space=vmem, size = 0x80000, scoped, tag = 'input window, operand 0']
    #allocation3 [shape = 's32[2]{0}', space=sflag, size = 0x8, scoped, tag = 'scoped memory for tpu_custom_call.1']
    #allocation4 [shape = 's32[2]{0}', space=sflag, size = 0x8, scoped, tag = 'scoped memory for tpu_custom_call.1']
    #allocation5 [shape = 'u8[262144]{0}', space=vmem, size = 0x40000, scoped, tag = 'input window, operand 5, single buffered']
    #allocation6 [shape = 's32[1]{0}', space=sflag, size = 0x4, scoped, tag = 'scoped memory for tpu_custom_call.1']
    #allocation7 [shape = 'u8[262144]{0}', space=vmem, size = 0x40000, scoped, tag = 'input window, operand 6, single buffered']
    #allocation8 [shape = 'u8[524288]{0}', space=vmem, size = 0x80000, scoped, tag = 'output window, operand 0']
    %12 = vsyncpa [#allocation3], 0
    %s13 = scalar_lea.sflag [#allocation3], 1
    %14 = vsyncpa %s13, 0
    %15 = vsyncpa [#allocation6], 0
    %16 = vsyncpa [#allocation4], 0
    %s17 = scalar_lea.sflag [#allocation4], 1
    %18 = vsyncpa %s17, 0
    loop: start=0, step=1, limit=4
    $region2: #{tpu_custom_call.1} parent=1 // loop_pre_header
      _
    $region3: #{tpu_custom_call.1} parent=1 // loop_header
      %s20 = sphi 0, %s24
      %p21 = scmp.ge.s32.totalorder %s20, 4
      %s30 = sphi 0, %s32
      %s33 = sphi 0, %s30
      %s34 = sphi 0, %s33
      %s50 = sphi 0, %s34
      %s54 = sphi 0, %s54
      %s56 = sphi 0, %s54
      %s57 = sphi 0, %s56
      %s71 = sphi 0, %s57
      %s75 = sphi 0, %s75
      %s77 = sphi 0, %s75
      %s78 = sphi 0, %s77
      %s92 = sphi 0, %s78
      %s96 = sphi 0, %s96
      %s98 = sphi 0, %s96
      %s99 = sphi 0, %s98
      %s113 = sphi 0, %s99
      %s117 = sphi 0, %s117
      %s119 = sphi 0, %s117
      %s120 = sphi 0, %s119
      %s134 = sphi 0, %s120
      %s138 = sphi 0, %s138
      %s140 = sphi 0, %s138
      %s141 = sphi 0, %s140
      %s155 = sphi 0, %s141
      %s159 = sphi 0, %s159
      %s161 = sphi 0, %s159
      %s162 = sphi 0, %s161
      %s176 = sphi 0, %s162
      %s182 = sphi 0, %s184
      %s185 = sphi 0, %s182
      %s186 = sphi 0, %s185
      %s202 = sphi 0, %s186
    $region4: #{tpu_custom_call.1} parent=1 // loop_header_branch
      %23 = sbr.rel (%p21) target = $region8
    $region5: #{tpu_custom_call.1} parent=1 // loop_body
      %s25 = ssub.s32 %s20, 1
      %s26 = ssub.s32 %s20, 2
      %s27 = sadd.s32 %s20, 1
      %s28 = ssub.s32 %s20, %s27
      %p29 = scmp.eq.s32.totalorder %s28, 0
      %s31 = sadd.s32 %s30, 1
      %s32 = scalar_select %p29, %s30, %s31
      %p35 = pneg %p29
      %p36 = scmp.eq.s32.totalorder %s20, 1
      %p37 = por %p35, %p36
      %p38 = scmp.ne.s32.totalorder %s30, %s33
      %p39 = scmp.eq.s32.totalorder %s20, 0
      %p40 = por %p38, %p39
      %p41 = scmp.ne.s32.totalorder %s30, %s33
      %p42 = scmp.eq.s32.totalorder %s25, 1
      %p43 = por %p41, %p42
      %p44 = scmp.ne.s32.totalorder %s33, %s34
      %p45 = scmp.eq.s32.totalorder %s25, 0
      %p46 = por %p44, %p45
      %p47 = scmp.ne.s32.totalorder %s33, %s34
      %p48 = scmp.eq.s32.totalorder %s26, 1
      %p49 = por %p47, %p48
      %p51 = scmp.ne.s32.totalorder %s34, %s50
      %p52 = scmp.eq.s32.totalorder %s26, 0
      %p53 = por %p51, %p52
      %s55 = sadd.s32 %s54, 1
      %p58 = scmp.eq.s32.totalorder %s20, 1
      %p59 = scmp.ne.s32.totalorder %s54, %s56
      %p60 = scmp.eq.s32.totalorder %s20, 0
      %p61 = por %p59, %p60
      %p62 = scmp.ne.s32.totalorder %s54, %s56
      %p63 = scmp.eq.s32.totalorder %s25, 1
      %p64 = por %p62, %p63
      %p65 = scmp.ne.s32.totalorder %s56, %s57
      %p66 = scmp.eq.s32.totalorder %s25, 0
      %p67 = por %p65, %p66
      %p68 = scmp.ne.s32.totalorder %s56, %s57
      %p69 = scmp.eq.s32.totalorder %s26, 1
      %p70 = por %p68, %p69
      %p72 = scmp.ne.s32.totalorder %s57, %s71
      %p73 = scmp.eq.s32.totalorder %s26, 0
      %p74 = por %p72, %p73
      %s76 = sadd.s32 %s75, 1
      %p79 = scmp.eq.s32.totalorder %s20, 1
      %p80 = scmp.ne.s32.totalorder %s75, %s77
      %p81 = scmp.eq.s32.totalorder %s20, 0
      %p82 = por %p80, %p81
      %p83 = scmp.ne.s32.totalorder %s75, %s77
      %p84 = scmp.eq.s32.totalorder %s25, 1
      %p85 = por %p83, %p84
      %p86 = scmp.ne.s32.totalorder %s77, %s78
      %p87 = scmp.eq.s32.totalorder %s25, 0
      %p88 = por %p86, %p87
      %p89 = scmp.ne.s32.totalorder %s77, %s78
      %p90 = scmp.eq.s32.totalorder %s26, 1
      %p91 = por %p89, %p90
      %p93 = scmp.ne.s32.totalorder %s78, %s92
      %p94 = scmp.eq.s32.totalorder %s26, 0
      %p95 = por %p93, %p94
      %s97 = sadd.s32 %s96, 1
      %p100 = scmp.eq.s32.totalorder %s20, 1
      %p101 = scmp.ne.s32.totalorder %s96, %s98
      %p102 = scmp.eq.s32.totalorder %s20, 0
      %p103 = por %p101, %p102
      %p104 = scmp.ne.s32.totalorder %s96, %s98
      %p105 = scmp.eq.s32.totalorder %s25, 1
      %p106 = por %p104, %p105
      %p107 = scmp.ne.s32.totalorder %s98, %s99
      %p108 = scmp.eq.s32.totalorder %s25, 0
      %p109 = por %p107, %p108
      %p110 = scmp.ne.s32.totalorder %s98, %s99
      %p111 = scmp.eq.s32.totalorder %s26, 1
      %p112 = por %p110, %p111
      %p114 = scmp.ne.s32.totalorder %s99, %s113
      %p115 = scmp.eq.s32.totalorder %s26, 0
      %p116 = por %p114, %p115
      %s118 = sadd.s32 %s117, 1
      %p121 = scmp.eq.s32.totalorder %s20, 1
      %p122 = scmp.ne.s32.totalorder %s117, %s119
      %p123 = scmp.eq.s32.totalorder %s20, 0
      %p124 = por %p122, %p123
      %p125 = scmp.ne.s32.totalorder %s117, %s119
      %p126 = scmp.eq.s32.totalorder %s25, 1
      %p127 = por %p125, %p126
      %p128 = scmp.ne.s32.totalorder %s119, %s120
      %p129 = scmp.eq.s32.totalorder %s25, 0
      %p130 = por %p128, %p129
      %p131 = scmp.ne.s32.totalorder %s119, %s120
      %p132 = scmp.eq.s32.totalorder %s26, 1
      %p133 = por %p131, %p132
      %p135 = scmp.ne.s32.totalorder %s120, %s134
      %p136 = scmp.eq.s32.totalorder %s26, 0
      %p137 = por %p135, %p136
      %s139 = sadd.s32 %s138, 1
      %p142 = scmp.eq.s32.totalorder %s20, 1
      %p143 = scmp.ne.s32.totalorder %s138, %s140
      %p144 = scmp.eq.s32.totalorder %s20, 0
      %p145 = por %p143, %p144
      %p146 = scmp.ne.s32.totalorder %s138, %s140
      %p147 = scmp.eq.s32.totalorder %s25, 1
      %p148 = por %p146, %p147
      %p149 = scmp.ne.s32.totalorder %s140, %s141
      %p150 = scmp.eq.s32.totalorder %s25, 0
      %p151 = por %p149, %p150
      %p152 = scmp.ne.s32.totalorder %s140, %s141
      %p153 = scmp.eq.s32.totalorder %s26, 1
      %p154 = por %p152, %p153
      %p156 = scmp.ne.s32.totalorder %s141, %s155
      %p157 = scmp.eq.s32.totalorder %s26, 0
      %p158 = por %p156, %p157
      %s160 = sadd.s32 %s159, 1
      %p163 = scmp.eq.s32.totalorder %s20, 1
      %p164 = scmp.ne.s32.totalorder %s159, %s161
      %p165 = scmp.eq.s32.totalorder %s20, 0
      %p166 = por %p164, %p165
      %p167 = scmp.ne.s32.totalorder %s159, %s161
      %p168 = scmp.eq.s32.totalorder %s25, 1
      %p169 = por %p167, %p168
      %p170 = scmp.ne.s32.totalorder %s161, %s162
      %p171 = scmp.eq.s32.totalorder %s25, 0
      %p172 = por %p170, %p171
      %p173 = scmp.ne.s32.totalorder %s161, %s162
      %p174 = scmp.eq.s32.totalorder %s26, 1
      %p175 = por %p173, %p174
      %p177 = scmp.ne.s32.totalorder %s162, %s176
      %p178 = scmp.eq.s32.totalorder %s26, 0
      %p179 = por %p177, %p178
      %s180 = ssub.s32 %s20, %s27
      %p181 = scmp.eq.s32.totalorder %s180, 0
      %s183 = sadd.s32 %s182, 1
      %s184 = scalar_select %p181, %s182, %s183
      %p187 = pneg %p181
      %p188 = scmp.eq.s32.totalorder %s20, 1
      %p189 = por %p187, %p188
      %p190 = scmp.ne.s32.totalorder %s182, %s185
      %p191 = scmp.eq.s32.totalorder %s20, 0
      %p192 = por %p190, %p191
      %p193 = scmp.ne.s32.totalorder %s182, %s185
      %p194 = scmp.eq.s32.totalorder %s25, 1
      %p195 = por %p193, %p194
      %p196 = scmp.ne.s32.totalorder %s185, %s186
      %p197 = scmp.eq.s32.totalorder %s25, 0
      %p198 = por %p196, %p197
      %p199 = scmp.ne.s32.totalorder %s185, %s186
      %p200 = scmp.eq.s32.totalorder %s26, 1
      %p201 = por %p199, %p200
      %p203 = scmp.ne.s32.totalorder %s186, %s202
      %p204 = scmp.eq.s32.totalorder %s26, 0
      %p205 = por %p203, %p204
      %p206 = scmp.le.s32.totalorder 1, %s20
      %p207 = scmp.lt.s32.totalorder %s20, 3
      %p208 = pnand %p206, %p207
      %p209 = pneg %p208
      // Predicated region
      $region9: #{tpu_custom_call.1} parent=5 // pred_check
        _
      $region10: #{tpu_custom_call.1} parent=5 // pred_check_branch
        %211 = sbr.rel (%p208) target = $region12
      $region11: #{tpu_custom_call.1} parent=5 // pred_region
        %s212 = ssub.s32 %s20, 1
        // Predicated region
        $region13: #{tpu_custom_call.1} parent=11 // pred_check
          %p213 = pneg %p67
        $region14: #{tpu_custom_call.1} parent=11 // pred_check_branch
          %215 = sbr.rel (%p213) target = $region16
        $region15: #{tpu_custom_call.1} parent=11 // pred_region
          _
        $region16: #{tpu_custom_call.1} parent=11 // pred_fallthru
          _
        // Predicated region
        $region17: #{tpu_custom_call.1} parent=11 // pred_check
          %p216 = pneg %p88
        $region18: #{tpu_custom_call.1} parent=11 // pred_check_branch
          %218 = sbr.rel (%p216) target = $region20
        $region19: #{tpu_custom_call.1} parent=11 // pred_region
          _
        $region20: #{tpu_custom_call.1} parent=11 // pred_fallthru
          _
        // Predicated region
        $region21: #{tpu_custom_call.1} parent=11 // pred_check
          %p219 = pneg %p109
        $region22: #{tpu_custom_call.1} parent=11 // pred_check_branch
          %221 = sbr.rel (%p219) target = $region24
        $region23: #{tpu_custom_call.1} parent=11 // pred_region
          _
        $region24: #{tpu_custom_call.1} parent=11 // pred_fallthru
          _
        // Predicated region
        $region25: #{tpu_custom_call.1} parent=11 // pred_check
          %p222 = pneg %p130
        $region26: #{tpu_custom_call.1} parent=11 // pred_check_branch
          %224 = sbr.rel (%p222) target = $region28
        $region27: #{tpu_custom_call.1} parent=11 // pred_region
          _
        $region28: #{tpu_custom_call.1} parent=11 // pred_fallthru
          _
        // Predicated region
        $region29: #{tpu_custom_call.1} parent=11 // pred_check
          %p225 = pneg %p151
        $region30: #{tpu_custom_call.1} parent=11 // pred_check_branch
          %227 = sbr.rel (%p225) target = $region32
        $region31: #{tpu_custom_call.1} parent=11 // pred_region
          %s229 = ssub.s32 8192, 8192
          %230 = vsyncadd [#allocation6], %s229
          %s231 = sshll.u32 [#allocation5], 4
          %s232 = int_to_ptr.vmem [resolvable:$true] %s231
          %237 = dma.hbm_to_vmem [thread:$0]  %s5, 8192, %s232, [#allocation6], 256, 256, 16
        $region32: #{tpu_custom_call.1} parent=11 // pred_fallthru
          _
        // Predicated region
        $region33: #{tpu_custom_call.1} parent=11 // pred_check
          %p238 = pneg %p172
        $region34: #{tpu_custom_call.1} parent=11 // pred_check_branch
          %240 = sbr.rel (%p238) target = $region36
        $region35: #{tpu_custom_call.1} parent=11 // pred_region
          %s242 = ssub.s32 8192, 8192
          %243 = vsyncadd [#allocation6], %s242
          %s244 = sshll.u32 [#allocation7], 4
          %s245 = int_to_ptr.vmem [resolvable:$true] %s244
          %250 = dma.hbm_to_vmem [thread:$0]  %s6, 8192, %s245, [#allocation6], 256, 256, 16
        $region36: #{tpu_custom_call.1} parent=11 // pred_fallthru
          _
      $region12: #{tpu_custom_call.1} parent=5 // pred_fallthru
        _
      %p251 = scmp.lt.s32.totalorder %s20, 2
      // Predicated region
      $region37: #{tpu_custom_call.1} parent=5 // pred_check
        %p252 = pneg %p251
      $region38: #{tpu_custom_call.1} parent=5 // pred_check_branch
        %254 = sbr.rel (%p252) target = $region40
      $region39: #{tpu_custom_call.1} parent=5 // pred_region
        // Predicated region
        $region41: #{tpu_custom_call.1} parent=39 // pred_check
          %p255 = pneg %p40
        $region42: #{tpu_custom_call.1} parent=39 // pred_check_branch
          %257 = sbr.rel (%p255) target = $region44
        $region43: #{tpu_custom_call.1} parent=39 // pred_region
          %s258 = sand.u32 %s30, 1
          %s259 = scalar_lea.sflag [#allocation3], %s258
          %s260 = sand.u32 %s30, 1
          %s261 = smul.addr %s260, 512
          %s262 = scalar_lea.vmem [#allocation2], %s261
          %s263 = smul.u32 8, %s20
          %s265 = ssub.s32 8192, 8192
          %266 = vsyncadd %s259, %s265
          %s267 = smul.addr %s263, 8
          %s268 = smul.addr %s267, 128
          %s269 = scalar_lea.hbm %s0, %s268
          %s270 = sshll.u32 %s262, 4
          %s271 = int_to_ptr.vmem [resolvable:$true] %s270
          %276 = dma.hbm_to_vmem [thread:$0]  %s269, 8192, %s271, %s259, 256, 256, 16
        $region44: #{tpu_custom_call.1} parent=39 // pred_fallthru
          _
      $region40: #{tpu_custom_call.1} parent=5 // pred_fallthru
        _
      %p277 = scmp.le.s32.totalorder 1, %s20
      %p278 = scmp.lt.s32.totalorder %s20, 3
      %p279 = pnand %p277, %p278
      %p280 = pneg %p279
      // Predicated region
      $region45: #{tpu_custom_call.1} parent=5 // pred_check
        _
      $region46: #{tpu_custom_call.1} parent=5 // pred_check_branch
        %282 = sbr.rel (%p279) target = $region48
      $region47: #{tpu_custom_call.1} parent=5 // pred_region
        %s283 = ssub.s32 %s20, 1
        %s284 = sand.u32 %s33, 1
        %s285 = scalar_lea.sflag [#allocation3], %s284
        %s286 = sand.u32 %s33, 1
        %s287 = smul.addr %s286, 512
        %s288 = scalar_lea.vmem [#allocation2], %s287
        // Predicated region
        $region49: #{tpu_custom_call.1} parent=47 // pred_check
          %p289 = pneg %p46
        $region50: #{tpu_custom_call.1} parent=47 // pred_check_branch
          %291 = sbr.rel (%p289) target = $region52
        $region51: #{tpu_custom_call.1} parent=47 // pred_region
          %292 = dma.done %s285, 8192
        $region52: #{tpu_custom_call.1} parent=47 // pred_fallthru
          _
        // Predicated region
        $region53: #{tpu_custom_call.1} parent=47 // pred_check
          %p293 = pneg %p151
        $region54: #{tpu_custom_call.1} parent=47 // pred_check_branch
          %295 = sbr.rel (%p293) target = $region56
        $region55: #{tpu_custom_call.1} parent=47 // pred_region
          %296 = dma.done [#allocation6], 8192
        $region56: #{tpu_custom_call.1} parent=47 // pred_fallthru
          _
        // Predicated region
        $region57: #{tpu_custom_call.1} parent=47 // pred_check
          %p297 = pneg %p172
        $region58: #{tpu_custom_call.1} parent=47 // pred_check_branch
          %299 = sbr.rel (%p297) target = $region60
        $region59: #{tpu_custom_call.1} parent=47 // pred_region
          %300 = dma.done [#allocation6], 8192
        $region60: #{tpu_custom_call.1} parent=47 // pred_fallthru
          _
        %s301 = sand.u32 %s33, 1
        %s302 = scalar_lea.sflag [#allocation3], %s301
        %s303 = sand.u32 %s33, 1
        %s304 = smul.addr %s303, 512
        %s305 = scalar_lea.vmem [#allocation2], %s304
        %p306 = pneg %p46
        %p307 = pneg %p43
        %p308 = pneg %p67
        %p309 = pneg %p64
        %p310 = pneg %p88
        %p311 = pneg %p85
        %p312 = pneg %p109
        %p313 = pneg %p106
        %p314 = pneg %p130
        %p315 = pneg %p127
        %p316 = pneg %p151
        %p317 = pneg %p148
        %p318 = pneg %p172
        %p319 = pneg %p169
        %p320 = pneg %p198
        %p321 = pneg %p195
        %s322 = sand.u32 %s185, 1
        %s323 = scalar_lea.sflag [#allocation4], %s322
        %s324 = sand.u32 %s185, 1
        %s325 = smul.addr %s324, 512
        %s326 = scalar_lea.vmem [#allocation8], %s325
        %s327 = smul.u32 8, %s25
        %s328 = smul.u32 8, %s25
        %v329 = vld [vmem:[%s288] sm:$0xff]
        %v330 = vld [vmem:[%s288 + $0x8] sm:$0xff]
        %v331 = vld [vmem:[%s288 + $0x10] sm:$0xff]
        %v332 = vld [vmem:[%s288 + $0x18] sm:$0xff]
        %v333 = vld [vmem:[%s288 + $0x20] sm:$0xff]
        %v334 = vld [vmem:[%s288 + $0x28] sm:$0xff]
        %v335 = vld [vmem:[%s288 + $0x30] sm:$0xff]
        %v336 = vld [vmem:[%s288 + $0x38] sm:$0xff]
        %v337 = vld [vmem:[%s288 + $0x40] sm:$0xff]
        %v338 = vld [vmem:[%s288 + $0x48] sm:$0xff]
        %v339 = vld [vmem:[%s288 + $0x50] sm:$0xff]
        %v340 = vld [vmem:[%s288 + $0x58] sm:$0xff]
        %v341 = vld [vmem:[%s288 + $0x60] sm:$0xff]
        %v342 = vld [vmem:[%s288 + $0x68] sm:$0xff]
        %v343 = vld [vmem:[%s288 + $0x70] sm:$0xff]
        %v344 = vld [vmem:[%s288 + $0x78] sm:$0xff]
        %v345 = vld [vmem:[%s288 + $0x80] sm:$0xff]
        %v346 = vld [vmem:[%s288 + $0x88] sm:$0xff]
        %v347 = vld [vmem:[%s288 + $0x90] sm:$0xff]
        %v348 = vld [vmem:[%s288 + $0x98] sm:$0xff]
        %v349 = vld [vmem:[%s288 + $0xa0] sm:$0xff]
        %v350 = vld [vmem:[%s288 + $0xa8] sm:$0xff]
        %v351 = vld [vmem:[%s288 + $0xb0] sm:$0xff]
        %v352 = vld [vmem:[%s288 + $0xb8] sm:$0xff]
        %v353 = vld [vmem:[%s288 + $0xc0] sm:$0xff]
        %v354 = vld [vmem:[%s288 + $0xc8] sm:$0xff]
        %v355 = vld [vmem:[%s288 + $0xd0] sm:$0xff]
        %v356 = vld [vmem:[%s288 + $0xd8] sm:$0xff]
        %v357 = vld [vmem:[%s288 + $0xe0] sm:$0xff]
        %v358 = vld [vmem:[%s288 + $0xe8] sm:$0xff]
        %v359 = vld [vmem:[%s288 + $0xf0] sm:$0xff]
        %v360 = vld [vmem:[%s288 + $0xf8] sm:$0xff]
        %v361 = vld [vmem:[%s288 + $0x100] sm:$0xff]
        %v362 = vld [vmem:[%s288 + $0x108] sm:$0xff]
        %v363 = vld [vmem:[%s288 + $0x110] sm:$0xff]
        %v364 = vld [vmem:[%s288 + $0x118] sm:$0xff]
        %v365 = vld [vmem:[%s288 + $0x120] sm:$0xff]
        %v366 = vld [vmem:[%s288 + $0x128] sm:$0xff]
        %v367 = vld [vmem:[%s288 + $0x130] sm:$0xff]
        %v368 = vld [vmem:[%s288 + $0x138] sm:$0xff]
        %v369 = vld [vmem:[%s288 + $0x140] sm:$0xff]
        %v370 = vld [vmem:[%s288 + $0x148] sm:$0xff]
        %v371 = vld [vmem:[%s288 + $0x150] sm:$0xff]
        %v372 = vld [vmem:[%s288 + $0x158] sm:$0xff]
        %v373 = vld [vmem:[%s288 + $0x160] sm:$0xff]
        %v374 = vld [vmem:[%s288 + $0x168] sm:$0xff]
        %v375 = vld [vmem:[%s288 + $0x170] sm:$0xff]
        %v376 = vld [vmem:[%s288 + $0x178] sm:$0xff]
        %v377 = vld [vmem:[%s288 + $0x180] sm:$0xff]
        %v378 = vld [vmem:[%s288 + $0x188] sm:$0xff]
        %v379 = vld [vmem:[%s288 + $0x190] sm:$0xff]
        %v380 = vld [vmem:[%s288 + $0x198] sm:$0xff]
        %v381 = vld [vmem:[%s288 + $0x1a0] sm:$0xff]
        %v382 = vld [vmem:[%s288 + $0x1a8] sm:$0xff]
        %v383 = vld [vmem:[%s288 + $0x1b0] sm:$0xff]
        %v384 = vld [vmem:[%s288 + $0x1b8] sm:$0xff]
        %v385 = vld [vmem:[%s288 + $0x1c0] sm:$0xff]
        %v386 = vld [vmem:[%s288 + $0x1c8] sm:$0xff]
        %v387 = vld [vmem:[%s288 + $0x1d0] sm:$0xff]
        %v388 = vld [vmem:[%s288 + $0x1d8] sm:$0xff]
        %v389 = vld [vmem:[%s288 + $0x1e0] sm:$0xff]
        %v390 = vld [vmem:[%s288 + $0x1e8] sm:$0xff]
        %v391 = vld [vmem:[%s288 + $0x1f0] sm:$0xff]
        %v392 = vld [vmem:[%s288 + $0x1f8] sm:$0xff]
        %v393 = vadd.f32 %v329, %v330
        %394 = vadd.xlane.f32.xlu0 %v393
        %v395 = vpop.xlane.xlu0 %394
        %v396 = vadd.f32 %v331, %v332
        %397 = vadd.xlane.f32.xlu0 %v396
        %v398 = vpop.xlane.xlu0 %397
        %v399 = vadd.f32 %v333, %v334
        %400 = vadd.xlane.f32.xlu0 %v399
        %v401 = vpop.xlane.xlu0 %400
        %v402 = vadd.f32 %v335, %v336
        %403 = vadd.xlane.f32.xlu0 %v402
        %v404 = vpop.xlane.xlu0 %403
        %v405 = vadd.f32 %v337, %v338
        %406 = vadd.xlane.f32.xlu0 %v405
        %v407 = vpop.xlane.xlu0 %406
        %v408 = vadd.f32 %v339, %v340
        %409 = vadd.xlane.f32.xlu0 %v408
        %v410 = vpop.xlane.xlu0 %409
        %v411 = vadd.f32 %v341, %v342
        %412 = vadd.xlane.f32.xlu0 %v411
        %v413 = vpop.xlane.xlu0 %412
        %v414 = vadd.f32 %v343, %v344
        %415 = vadd.xlane.f32.xlu0 %v414
        %v416 = vpop.xlane.xlu0 %415
        %v417 = vadd.f32 %v345, %v346
        %418 = vadd.xlane.f32.xlu0 %v417
        %v419 = vpop.xlane.xlu0 %418
        %v420 = vadd.f32 %v347, %v348
        %421 = vadd.xlane.f32.xlu0 %v420
        %v422 = vpop.xlane.xlu0 %421
        %v423 = vadd.f32 %v349, %v350
        %424 = vadd.xlane.f32.xlu0 %v423
        %v425 = vpop.xlane.xlu0 %424
        %v426 = vadd.f32 %v351, %v352
        %427 = vadd.xlane.f32.xlu0 %v426
        %v428 = vpop.xlane.xlu0 %427
        %v429 = vadd.f32 %v353, %v354
        %430 = vadd.xlane.f32.xlu0 %v429
        %v431 = vpop.xlane.xlu0 %430
        %v432 = vadd.f32 %v355, %v356
        %433 = vadd.xlane.f32.xlu0 %v432
        %v434 = vpop.xlane.xlu0 %433
        %v435 = vadd.f32 %v357, %v358
        %436 = vadd.xlane.f32.xlu0 %v435
        %v437 = vpop.xlane.xlu0 %436
        %v438 = vadd.f32 %v359, %v360
        %439 = vadd.xlane.f32.xlu0 %v438
        %v440 = vpop.xlane.xlu0 %439
        %v441 = vadd.f32 %v361, %v362
        %442 = vadd.xlane.f32.xlu0 %v441
        %v443 = vpop.xlane.xlu0 %442
        %v444 = vadd.f32 %v363, %v364
        %445 = vadd.xlane.f32.xlu0 %v444
        %v446 = vpop.xlane.xlu0 %445
        %v447 = vadd.f32 %v365, %v366
        %448 = vadd.xlane.f32.xlu0 %v447
        %v449 = vpop.xlane.xlu0 %448
        %v450 = vadd.f32 %v367, %v368
        %451 = vadd.xlane.f32.xlu0 %v450
        %v452 = vpop.xlane.xlu0 %451
        %v453 = vadd.f32 %v369, %v370
        %454 = vadd.xlane.f32.xlu0 %v453
        %v455 = vpop.xlane.xlu0 %454
        %v456 = vadd.f32 %v371, %v372
        %457 = vadd.xlane.f32.xlu0 %v456
        %v458 = vpop.xlane.xlu0 %457
        %v459 = vadd.f32 %v373, %v374
        %460 = vadd.xlane.f32.xlu0 %v459
        %v461 = vpop.xlane.xlu0 %460
        %v462 = vadd.f32 %v375, %v376
        %463 = vadd.xlane.f32.xlu0 %v462
        %v464 = vpop.xlane.xlu0 %463
        %v465 = vadd.f32 %v377, %v378
        %466 = vadd.xlane.f32.xlu0 %v465
        %v467 = vpop.xlane.xlu0 %466
        %v468 = vadd.f32 %v379, %v380
        %469 = vadd.xlane.f32.xlu0 %v468
        %v470 = vpop.xlane.xlu0 %469
        %v471 = vadd.f32 %v381, %v382
        %472 = vadd.xlane.f32.xlu0 %v471
        %v473 = vpop.xlane.xlu0 %472
        %v474 = vadd.f32 %v383, %v384
        %475 = vadd.xlane.f32.xlu0 %v474
        %v476 = vpop.xlane.xlu0 %475
        %v477 = vadd.f32 %v385, %v386
        %478 = vadd.xlane.f32.xlu0 %v477
        %v479 = vpop.xlane.xlu0 %478
        %v480 = vadd.f32 %v387, %v388
        %481 = vadd.xlane.f32.xlu0 %v480
        %v482 = vpop.xlane.xlu0 %481
        %v483 = vadd.f32 %v389, %v390
        %484 = vadd.xlane.f32.xlu0 %v483
        %v485 = vpop.xlane.xlu0 %484
        %v486 = vadd.f32 %v391, %v392
        %487 = vadd.xlane.f32.xlu0 %v486
        %v488 = vpop.xlane.xlu0 %487
        %v489 = vrcp.pop 256.0
        %v490 = vmul.f32 %v395, %v489
        %v491 = vmul.f32 %v398, %v489
        %v492 = vmul.f32 %v401, %v489
        %v493 = vmul.f32 %v404, %v489
        %v494 = vmul.f32 %v407, %v489
        %v495 = vmul.f32 %v410, %v489
        %v496 = vmul.f32 %v413, %v489
        %v497 = vmul.f32 %v416, %v489
        %v498 = vmul.f32 %v419, %v489
        %v499 = vmul.f32 %v422, %v489
        %v500 = vmul.f32 %v425, %v489
        %v501 = vmul.f32 %v428, %v489
        %v502 = vmul.f32 %v431, %v489
        %v503 = vmul.f32 %v434, %v489
        %v504 = vmul.f32 %v437, %v489
        %v505 = vmul.f32 %v440, %v489
        %v506 = vmul.f32 %v443, %v489
        %v507 = vmul.f32 %v446, %v489
        %v508 = vmul.f32 %v449, %v489
        %v509 = vmul.f32 %v452, %v489
        %v510 = vmul.f32 %v455, %v489
        %v511 = vmul.f32 %v458, %v489
        %v512 = vmul.f32 %v461, %v489
        %v513 = vmul.f32 %v464, %v489
        %v514 = vmul.f32 %v467, %v489
        %v515 = vmul.f32 %v470, %v489
        %v516 = vmul.f32 %v473, %v489
        %v517 = vmul.f32 %v476, %v489
        %v518 = vmul.f32 %v479, %v489
        %v519 = vmul.f32 %v482, %v489
        %v520 = vmul.f32 %v485, %v489
        %v521 = vmul.f32 %v488, %v489
        %v522 = vmax.f32 %v329, %v330
        %523 = vmax.xlane.f32.xlu0 %v522
        %v524 = vpop.xlane.xlu0 %523
        %v525 = vmax.f32 %v331, %v332
        %526 = vmax.xlane.f32.xlu0 %v525
        %v527 = vpop.xlane.xlu0 %526
        %v528 = vmax.f32 %v333, %v334
        %529 = vmax.xlane.f32.xlu0 %v528
        %v530 = vpop.xlane.xlu0 %529
        %v531 = vmax.f32 %v335, %v336
        %532 = vmax.xlane.f32.xlu0 %v531
        %v533 = vpop.xlane.xlu0 %532
        %v534 = vmax.f32 %v337, %v338
        %535 = vmax.xlane.f32.xlu0 %v534
        %v536 = vpop.xlane.xlu0 %535
        %v537 = vmax.f32 %v339, %v340
        %538 = vmax.xlane.f32.xlu0 %v537
        %v539 = vpop.xlane.xlu0 %538
        %v540 = vmax.f32 %v341, %v342
        %541 = vmax.xlane.f32.xlu0 %v540
        %v542 = vpop.xlane.xlu0 %541
        %v543 = vmax.f32 %v343, %v344
        %544 = vmax.xlane.f32.xlu0 %v543
        %v545 = vpop.xlane.xlu0 %544
        %v546 = vmax.f32 %v345, %v346
        %547 = vmax.xlane.f32.xlu0 %v546
        %v548 = vpop.xlane.xlu0 %547
        %v549 = vmax.f32 %v347, %v348
        %550 = vmax.xlane.f32.xlu0 %v549
        %v551 = vpop.xlane.xlu0 %550
        %v552 = vmax.f32 %v349, %v350
        %553 = vmax.xlane.f32.xlu0 %v552
        %v554 = vpop.xlane.xlu0 %553
        %v555 = vmax.f32 %v351, %v352
        %556 = vmax.xlane.f32.xlu0 %v555
        %v557 = vpop.xlane.xlu0 %556
        %v558 = vmax.f32 %v353, %v354
        %559 = vmax.xlane.f32.xlu0 %v558
        %v560 = vpop.xlane.xlu0 %559
        %v561 = vmax.f32 %v355, %v356
        %562 = vmax.xlane.f32.xlu0 %v561
        %v563 = vpop.xlane.xlu0 %562
        %v564 = vmax.f32 %v357, %v358
        %565 = vmax.xlane.f32.xlu0 %v564
        %v566 = vpop.xlane.xlu0 %565
        %v567 = vmax.f32 %v359, %v360
        %568 = vmax.xlane.f32.xlu0 %v567
        %v569 = vpop.xlane.xlu0 %568
        %v570 = vmax.f32 %v361, %v362
        %571 = vmax.xlane.f32.xlu0 %v570
        %v572 = vpop.xlane.xlu0 %571
        %v573 = vmax.f32 %v363, %v364
        %574 = vmax.xlane.f32.xlu0 %v573
        %v575 = vpop.xlane.xlu0 %574
        %v576 = vmax.f32 %v365, %v366
        %577 = vmax.xlane.f32.xlu0 %v576
        %v578 = vpop.xlane.xlu0 %577
        %v579 = vmax.f32 %v367, %v368
        %580 = vmax.xlane.f32.xlu0 %v579
        %v581 = vpop.xlane.xlu0 %580
        %v582 = vmax.f32 %v369, %v370
        %583 = vmax.xlane.f32.xlu0 %v582
        %v584 = vpop.xlane.xlu0 %583
        %v585 = vmax.f32 %v371, %v372
        %586 = vmax.xlane.f32.xlu0 %v585
        %v587 = vpop.xlane.xlu0 %586
        %v588 = vmax.f32 %v373, %v374
        %589 = vmax.xlane.f32.xlu0 %v588
        %v590 = vpop.xlane.xlu0 %589
        %v591 = vmax.f32 %v375, %v376
        %592 = vmax.xlane.f32.xlu0 %v591
        %v593 = vpop.xlane.xlu0 %592
        %v594 = vmax.f32 %v377, %v378
        %595 = vmax.xlane.f32.xlu0 %v594
        %v596 = vpop.xlane.xlu0 %595
        %v597 = vmax.f32 %v379, %v380
        %598 = vmax.xlane.f32.xlu0 %v597
        %v599 = vpop.xlane.xlu0 %598
        %v600 = vmax.f32 %v381, %v382
        %601 = vmax.xlane.f32.xlu0 %v600
        %v602 = vpop.xlane.xlu0 %601
        %v603 = vmax.f32 %v383, %v384
        %604 = vmax.xlane.f32.xlu0 %v603
        %v605 = vpop.xlane.xlu0 %604
        %v606 = vmax.f32 %v385, %v386
        %607 = vmax.xlane.f32.xlu0 %v606
        %v608 = vpop.xlane.xlu0 %607
        %v609 = vmax.f32 %v387, %v388
        %610 = vmax.xlane.f32.xlu0 %v609
        %v611 = vpop.xlane.xlu0 %610
        %v612 = vmax.f32 %v389, %v390
        %613 = vmax.xlane.f32.xlu0 %v612
        %v614 = vpop.xlane.xlu0 %613
        %v615 = vmax.f32 %v391, %v392
        %616 = vmax.xlane.f32.xlu0 %v615
        %v617 = vpop.xlane.xlu0 %616
        %v650 = vlaneseq
        %v651 = vand.u32 %v650, 127
        %v652 = vlaneseq
        %v653 = vshrl.u32 %v652, 7
        %v654 = vsub.s32 %v651, %v653
        %v655 = vrot.slane %v490, %v654
        %v656 = vadd.s32 %v651, 4294967288
        %v657 = vlaneseq
        %v658 = vshrl.u32 %v657, 7
        %v659 = vsub.s32 %v656, %v658
        %v660 = vrot.slane %v491, %v659
        %vm661 = vcmask 130112
        %v662 = vsel %vm661, %v660, %v655
        %v663 = vadd.s32 %v651, 4294967280
        %v664 = vlaneseq
        %v665 = vshrl.u32 %v664, 7
        %v666 = vsub.s32 %v663, %v665
        %v667 = vrot.slane %v492, %v666
        %vm668 = vcmask 195712
        %v669 = vsel %vm668, %v667, %v662
        %v670 = vadd.s32 %v651, 4294967272
        %v671 = vlaneseq
        %v672 = vshrl.u32 %v671, 7
        %v673 = vsub.s32 %v670, %v672
        %v674 = vrot.slane %v493, %v673
        %vm675 = vcmask 261312
        %v676 = vsel %vm675, %v674, %v669
        %v677 = vlaneseq
        %v678 = vshrl.u32 %v677, 7
        %v679 = vsub.s32 %v651, %v678
        %v680 = vrot.slane %v494, %v679
        %v681 = vlaneseq
        %v682 = vshrl.u32 %v681, 7
        %v683 = vsub.s32 %v656, %v682
        %v684 = vrot.slane %v495, %v683
        %v685 = vsel %vm661, %v684, %v680
        %v686 = vlaneseq
        %v687 = vshrl.u32 %v686, 7
        %v688 = vsub.s32 %v663, %v687
        %v689 = vrot.slane %v496, %v688
        %v690 = vsel %vm668, %v689, %v685
        %v691 = vlaneseq
        %v692 = vshrl.u32 %v691, 7
        %v693 = vsub.s32 %v670, %v692
        %v694 = vrot.slane %v497, %v693
        %v695 = vsel %vm675, %v694, %v690
        %v696 = vlaneseq
        %v697 = vshrl.u32 %v696, 7
        %v698 = vsub.s32 %v651, %v697
        %v699 = vrot.slane %v498, %v698
        %v700 = vlaneseq
        %v701 = vshrl.u32 %v700, 7
        %v702 = vsub.s32 %v656, %v701
        %v703 = vrot.slane %v499, %v702
        %v704 = vsel %vm661, %v703, %v699
        %v705 = vlaneseq
        %v706 = vshrl.u32 %v705, 7
        %v707 = vsub.s32 %v663, %v706
        %v708 = vrot.slane %v500, %v707
        %v709 = vsel %vm668, %v708, %v704
        %v710 = vlaneseq
        %v711 = vshrl.u32 %v710, 7
        %v712 = vsub.s32 %v670, %v711
        %v713 = vrot.slane %v501, %v712
        %v714 = vsel %vm675, %v713, %v709
        %v715 = vlaneseq
        %v716 = vshrl.u32 %v715, 7
        %v717 = vsub.s32 %v651, %v716
        %v718 = vrot.slane %v502, %v717
        %v719 = vlaneseq
        %v720 = vshrl.u32 %v719, 7
        %v721 = vsub.s32 %v656, %v720
        %v722 = vrot.slane %v503, %v721
        %v723 = vsel %vm661, %v722, %v718
        %v724 = vlaneseq
        %v725 = vshrl.u32 %v724, 7
        %v726 = vsub.s32 %v663, %v725
        %v727 = vrot.slane %v504, %v726
        %v728 = vsel %vm668, %v727, %v723
        %v729 = vlaneseq
        %v730 = vshrl.u32 %v729, 7
        %v731 = vsub.s32 %v670, %v730
        %v732 = vrot.slane %v505, %v731
        %v733 = vsel %vm675, %v732, %v728
        %v734 = vlaneseq
        %v735 = vshrl.u32 %v734, 7
        %v736 = vsub.s32 %v651, %v735
        %v737 = vrot.slane %v506, %v736
        %v738 = vlaneseq
        %v739 = vshrl.u32 %v738, 7
        %v740 = vsub.s32 %v656, %v739
        %v741 = vrot.slane %v507, %v740
        %v742 = vsel %vm661, %v741, %v737
        %v743 = vlaneseq
        %v744 = vshrl.u32 %v743, 7
        %v745 = vsub.s32 %v663, %v744
        %v746 = vrot.slane %v508, %v745
        %v747 = vsel %vm668, %v746, %v742
        %v748 = vlaneseq
        %v749 = vshrl.u32 %v748, 7
        %v750 = vsub.s32 %v670, %v749
        %v751 = vrot.slane %v509, %v750
        %v752 = vsel %vm675, %v751, %v747
        %v753 = vlaneseq
        %v754 = vshrl.u32 %v753, 7
        %v755 = vsub.s32 %v651, %v754
        %v756 = vrot.slane %v510, %v755
        %v757 = vlaneseq
        %v758 = vshrl.u32 %v757, 7
        %v759 = vsub.s32 %v656, %v758
        %v760 = vrot.slane %v511, %v759
        %v761 = vsel %vm661, %v760, %v756
        %v762 = vlaneseq
        %v763 = vshrl.u32 %v762, 7
        %v764 = vsub.s32 %v663, %v763
        %v765 = vrot.slane %v512, %v764
        %v766 = vsel %vm668, %v765, %v761
        %v767 = vlaneseq
        %v768 = vshrl.u32 %v767, 7
        %v769 = vsub.s32 %v670, %v768
        %v770 = vrot.slane %v513, %v769
        %v771 = vsel %vm675, %v770, %v766
        %v772 = vlaneseq
        %v773 = vshrl.u32 %v772, 7
        %v774 = vsub.s32 %v651, %v773
        %v775 = vrot.slane %v514, %v774
        %v776 = vlaneseq
        %v777 = vshrl.u32 %v776, 7
        %v778 = vsub.s32 %v656, %v777
        %v779 = vrot.slane %v515, %v778
        %v780 = vsel %vm661, %v779, %v775
        %v781 = vlaneseq
        %v782 = vshrl.u32 %v781, 7
        %v783 = vsub.s32 %v663, %v782
        %v784 = vrot.slane %v516, %v783
        %v785 = vsel %vm668, %v784, %v780
        %v786 = vlaneseq
        %v787 = vshrl.u32 %v786, 7
        %v788 = vsub.s32 %v670, %v787
        %v789 = vrot.slane %v517, %v788
        %v790 = vsel %vm675, %v789, %v785
        %v791 = vlaneseq
        %v792 = vshrl.u32 %v791, 7
        %v793 = vsub.s32 %v651, %v792
        %v794 = vrot.slane %v518, %v793
        %v795 = vlaneseq
        %v796 = vshrl.u32 %v795, 7
        %v797 = vsub.s32 %v656, %v796
        %v798 = vrot.slane %v519, %v797
        %v799 = vsel %vm661, %v798, %v794
        %v800 = vlaneseq
        %v801 = vshrl.u32 %v800, 7
        %v802 = vsub.s32 %v663, %v801
        %v803 = vrot.slane %v520, %v802
        %v804 = vsel %vm668, %v803, %v799
        %v805 = vlaneseq
        %v806 = vshrl.u32 %v805, 7
        %v807 = vsub.s32 %v670, %v806
        %v808 = vrot.slane %v521, %v807
        %v809 = vsel %vm675, %v808, %v804
        %vm810 = vcmask 1041409
        %v811 = vsel %vm810, %v695, %v676
        %vm812 = vcmask 1042434
        %v813 = vsel %vm812, %v714, %v811
        %vm814 = vcmask 1043459
        %v815 = vsel %vm814, %v733, %v813
        %vm816 = vcmask 1044484
        %v817 = vsel %vm816, %v752, %v815
        %vm818 = vcmask 1045509
        %v819 = vsel %vm818, %v771, %v817
        %vm820 = vcmask 1046534
        %v821 = vsel %vm820, %v790, %v819
        %vm822 = vcmask 1047559
        %v823 = vsel %vm822, %v809, %v821
        %v856 = vlaneseq
        %v857 = vshrl.u32 %v856, 7
        %v858 = vsub.s32 %v651, %v857
        %v859 = vrot.slane %v524, %v858
        %v860 = vlaneseq
        %v861 = vshrl.u32 %v860, 7
        %v862 = vsub.s32 %v656, %v861
        %v863 = vrot.slane %v527, %v862
        %v864 = vsel %vm661, %v863, %v859
        %v865 = vlaneseq
        %v866 = vshrl.u32 %v865, 7
        %v867 = vsub.s32 %v663, %v866
        %v868 = vrot.slane %v530, %v867
        %v869 = vsel %vm668, %v868, %v864
        %v870 = vlaneseq
        %v871 = vshrl.u32 %v870, 7
        %v872 = vsub.s32 %v670, %v871
        %v873 = vrot.slane %v533, %v872
        %v874 = vsel %vm675, %v873, %v869
        %v875 = vlaneseq
        %v876 = vshrl.u32 %v875, 7
        %v877 = vsub.s32 %v651, %v876
        %v878 = vrot.slane %v536, %v877
        %v879 = vlaneseq
        %v880 = vshrl.u32 %v879, 7
        %v881 = vsub.s32 %v656, %v880
        %v882 = vrot.slane %v539, %v881
        %v883 = vsel %vm661, %v882, %v878
        %v884 = vlaneseq
        %v885 = vshrl.u32 %v884, 7
        %v886 = vsub.s32 %v663, %v885
        %v887 = vrot.slane %v542, %v886
        %v888 = vsel %vm668, %v887, %v883
        %v889 = vlaneseq
        %v890 = vshrl.u32 %v889, 7
        %v891 = vsub.s32 %v670, %v890
        %v892 = vrot.slane %v545, %v891
        %v893 = vsel %vm675, %v892, %v888
        %v894 = vlaneseq
        %v895 = vshrl.u32 %v894, 7
        %v896 = vsub.s32 %v651, %v895
        %v897 = vrot.slane %v548, %v896
        %v898 = vlaneseq
        %v899 = vshrl.u32 %v898, 7
        %v900 = vsub.s32 %v656, %v899
        %v901 = vrot.slane %v551, %v900
        %v902 = vsel %vm661, %v901, %v897
        %v903 = vlaneseq
        %v904 = vshrl.u32 %v903, 7
        %v905 = vsub.s32 %v663, %v904
        %v906 = vrot.slane %v554, %v905
        %v907 = vsel %vm668, %v906, %v902
        %v908 = vlaneseq
        %v909 = vshrl.u32 %v908, 7
        %v910 = vsub.s32 %v670, %v909
        %v911 = vrot.slane %v557, %v910
        %v912 = vsel %vm675, %v911, %v907
        %v913 = vlaneseq
        %v914 = vshrl.u32 %v913, 7
        %v915 = vsub.s32 %v651, %v914
        %v916 = vrot.slane %v560, %v915
        %v917 = vlaneseq
        %v918 = vshrl.u32 %v917, 7
        %v919 = vsub.s32 %v656, %v918
        %v920 = vrot.slane %v563, %v919
        %v921 = vsel %vm661, %v920, %v916
        %v922 = vlaneseq
        %v923 = vshrl.u32 %v922, 7
        %v924 = vsub.s32 %v663, %v923
        %v925 = vrot.slane %v566, %v924
        %v926 = vsel %vm668, %v925, %v921
        %v927 = vlaneseq
        %v928 = vshrl.u32 %v927, 7
        %v929 = vsub.s32 %v670, %v928
        %v930 = vrot.slane %v569, %v929
        %v931 = vsel %vm675, %v930, %v926
        %v932 = vlaneseq
        %v933 = vshrl.u32 %v932, 7
        %v934 = vsub.s32 %v651, %v933
        %v935 = vrot.slane %v572, %v934
        %v936 = vlaneseq
        %v937 = vshrl.u32 %v936, 7
        %v938 = vsub.s32 %v656, %v937
        %v939 = vrot.slane %v575, %v938
        %v940 = vsel %vm661, %v939, %v935
        %v941 = vlaneseq
        %v942 = vshrl.u32 %v941, 7
        %v943 = vsub.s32 %v663, %v942
        %v944 = vrot.slane %v578, %v943
        %v945 = vsel %vm668, %v944, %v940
        %v946 = vlaneseq
        %v947 = vshrl.u32 %v946, 7
        %v948 = vsub.s32 %v670, %v947
        %v949 = vrot.slane %v581, %v948
        %v950 = vsel %vm675, %v949, %v945
        %v951 = vlaneseq
        %v952 = vshrl.u32 %v951, 7
        %v953 = vsub.s32 %v651, %v952
        %v954 = vrot.slane %v584, %v953
        %v955 = vlaneseq
        %v956 = vshrl.u32 %v955, 7
        %v957 = vsub.s32 %v656, %v956
        %v958 = vrot.slane %v587, %v957
        %v959 = vsel %vm661, %v958, %v954
        %v960 = vlaneseq
        %v961 = vshrl.u32 %v960, 7
        %v962 = vsub.s32 %v663, %v961
        %v963 = vrot.slane %v590, %v962
        %v964 = vsel %vm668, %v963, %v959
        %v965 = vlaneseq
        %v966 = vshrl.u32 %v965, 7
        %v967 = vsub.s32 %v670, %v966
        %v968 = vrot.slane %v593, %v967
        %v969 = vsel %vm675, %v968, %v964
        %v970 = vlaneseq
        %v971 = vshrl.u32 %v970, 7
        %v972 = vsub.s32 %v651, %v971
        %v973 = vrot.slane %v596, %v972
        %v974 = vlaneseq
        %v975 = vshrl.u32 %v974, 7
        %v976 = vsub.s32 %v656, %v975
        %v977 = vrot.slane %v599, %v976
        %v978 = vsel %vm661, %v977, %v973
        %v979 = vlaneseq
        %v980 = vshrl.u32 %v979, 7
        %v981 = vsub.s32 %v663, %v980
        %v982 = vrot.slane %v602, %v981
        %v983 = vsel %vm668, %v982, %v978
        %v984 = vlaneseq
        %v985 = vshrl.u32 %v984, 7
        %v986 = vsub.s32 %v670, %v985
        %v987 = vrot.slane %v605, %v986
        %v988 = vsel %vm675, %v987, %v983
        %v989 = vlaneseq
        %v990 = vshrl.u32 %v989, 7
        %v991 = vsub.s32 %v651, %v990
        %v992 = vrot.slane %v608, %v991
        %v993 = vlaneseq
        %v994 = vshrl.u32 %v993, 7
        %v995 = vsub.s32 %v656, %v994
        %v996 = vrot.slane %v611, %v995
        %v997 = vsel %vm661, %v996, %v992
        %v998 = vlaneseq
        %v999 = vshrl.u32 %v998, 7
        %v1000 = vsub.s32 %v663, %v999
        %v1001 = vrot.slane %v614, %v1000
        %v1002 = vsel %vm668, %v1001, %v997
        %v1003 = vlaneseq
        %v1004 = vshrl.u32 %v1003, 7
        %v1005 = vsub.s32 %v670, %v1004
        %v1006 = vrot.slane %v617, %v1005
        %v1007 = vsel %vm675, %v1006, %v1002
        %v1008 = vsel %vm810, %v893, %v874
        %v1009 = vsel %vm812, %v912, %v1008
        %v1010 = vsel %vm814, %v931, %v1009
        %v1011 = vsel %vm816, %v950, %v1010
        %v1012 = vsel %vm818, %v969, %v1011
        %v1013 = vsel %vm820, %v988, %v1012
        %v1014 = vsel %vm822, %v1007, %v1013
        %v1015 = vld [vmem:[%s1] sm:$0xff]
        %v1016 = vld [vmem:[%s1 + $0x8] sm:$0xff]
        %v1017 = vld [vmem:[%s1 + $0x10] sm:$0xff]
        %v1018 = vld [vmem:[%s1 + $0x18] sm:$0xff]
        %v1019 = vld [vmem:[%s2] sm:$0x1]
        %v1021 = vlaneseq
        %v1022 = vshrl.u32 %v1021, 7
        %v1023 = vsub.s32 0, %v1022
        %v1024 = vrot.slane %v1019, %v1023
        %vm1026 = vcmask 261120
        %v1027 = vsel %vm1026, %v823, 0
        %v1029 = vsel %vm1026, %v1014, 0
        %1031 = vmatprep.subr.mxu0 0.0
        %1032 = vmatpush1.msra.mxu0 %v1015
        %1033 = vmatprep.subr.mxu0 0.0
        %1034 = vmatpush1.msra.mxu0 %v1016
        %1035 = vmatprep.subr.mxu0 0.0
        %1036 = vmatpush1.msra.mxu0 %v1017
        %1037 = vmatprep.subr.mxu0 0.0
        %1038 = vmatpush1.msra.mxu0 %v1018
        %1039 = vmatprep.subr.mxu0 0.0
        %1040 = vmatpush1.msra.mxu0 0.0
        %1041 = vmatprep.subr.mxu0 0.0
        %1042 = vmatpush1.msra.mxu0 0.0
        %1043 = vmatprep.subr.mxu0 0.0
        %1044 = vmatpush1.msra.mxu0 0.0
        %1045 = vmatprep.subr.mxu0 0.0
        %1046 = vmatpush1.msra.mxu0 0.0
        %1047 = vmatprep.subr.mxu0 0.0
        %1048 = vmatpush1.msra.mxu0 0.0
        %1049 = vmatprep.subr.mxu0 0.0
        %1050 = vmatpush1.msra.mxu0 0.0
        %1051 = vmatprep.subr.mxu0 0.0
        %1052 = vmatpush1.msra.mxu0 0.0
        %1053 = vmatprep.subr.mxu0 0.0
        %1054 = vmatpush1.msra.mxu0 0.0
        %1055 = vmatprep.subr.mxu0 0.0
        %1056 = vmatpush1.msra.mxu0 0.0
        %1057 = vmatprep.subr.mxu0 0.0
        %1058 = vmatpush1.msra.mxu0 0.0
        %1059 = vmatprep.subr.mxu0 0.0
        %1060 = vmatpush1.msra.mxu0 0.0
        %1061 = vmatprep.subr.mxu0 0.0
        %1062 = vmatpush1.msra.mxu0 0.0
        %1063 = vmatprep.subr.mxu0 0.0
        %1064 = vmatpush1.msra.mxu0 0.0
        %1065 = vmatprep.subr.mxu0 0.0
        %1066 = vmatpush1.msra.mxu0 0.0
        %1067 = vmatprep.subr.mxu0 0.0
        %1068 = vmatpush1.msra.mxu0 0.0
        %1069 = vmatprep.subr.mxu0 0.0
        %1070 = vmatpush1.msra.mxu0 0.0
        %1071 = vmatprep.subr.mxu0 0.0
        %1072 = vmatpush1.msra.mxu0 0.0
        %1073 = vmatprep.subr.mxu0 0.0
        %1074 = vmatpush1.msra.mxu0 0.0
        %1075 = vmatprep.subr.mxu0 0.0
        %1076 = vmatpush1.msra.mxu0 0.0
        %1077 = vmatprep.subr.mxu0 0.0
        %1078 = vmatpush1.msra.mxu0 0.0
        %1079 = vmatprep.subr.mxu0 0.0
        %1080 = vmatpush1.msra.mxu0 0.0
        %1081 = vmatprep.subr.mxu0 0.0
        %1082 = vmatpush1.msra.mxu0 0.0
        %1083 = vmatprep.subr.mxu0 0.0
        %1084 = vmatpush1.msra.mxu0 0.0
        %1085 = vmatprep.subr.mxu0 0.0
        %1086 = vmatpush1.msra.mxu0 0.0
        %1087 = vmatprep.subr.mxu0 0.0
        %1088 = vmatpush1.msra.mxu0 0.0
        %1089 = vmatprep.subr.mxu0 0.0
        %1090 = vmatpush1.msra.mxu0 0.0
        %1091 = vmatprep.subr.mxu0 0.0
        %1092 = vmatpush1.msra.mxu0 0.0
        %1093 = vmatprep.subr.mxu0 0.0
        %1094 = vmatpush1.msra.mxu0 0.0
        %1095 = vmatprep.mubr.f32.mxu0 0.0
        %1096 = vmatmul.mubr.f32.gmra.mrb[0].mxu0 %v1027
        %v1097 = vpop.f32.mrb[0].mxu0
        %v1098 = vadd.f32 %v1024, %v1097
        %v1099 = vpop.f32.mrb[0].mxu0
        %1100 = vmatprep.mubr.f32.mxu0 0.0
        %1101 = vmatmul.mubr.f32.gmra.mrb[0].mxu0 %v1029
        %v1102 = vpop.f32.mrb[0].mxu0
        %v1103 = vadd.f32 %v1024, %v1102
        %v1104 = vpop.f32.mrb[0].mxu0
        %1105 = vdwg.mxu0
        %v1106 = vmax.f32 %v1098, 0.0
        %v1107 = vmax.f32 %v1103, 0.0
        %v1108 = vld [vmem:[%s3] sm:$0x3]
        %v1109 = vld [vmem:[%s4] sm:$0x1]
        %v1111 = vlaneseq
        %v1112 = vshrl.u32 %v1111, 7
        %v1113 = vsub.s32 0, %v1112
        %v1114 = vrot.slane %v1109, %v1113
        %vm1116 = vcmask 15360
        %v1118 = vsel %vm1116, %v1106, 0
        %v1121 = vsel %vm1116, %v1107, 0
        %vm1123 = vcmask 1041408
        %v1125 = vsel %vm1123, %v1108, 0
        %1127 = vmatprep.subr.mxu0 0.0
        %1128 = vmatpush1.msra.mxu0 %v1125
        %1129 = vmatprep.subr.mxu0 0.0
        %1130 = vmatpush1.msra.mxu0 0.0
        %1131 = vmatprep.subr.mxu0 0.0
        %1132 = vmatpush1.msra.mxu0 0.0
        %1133 = vmatprep.subr.mxu0 0.0
        %1134 = vmatpush1.msra.mxu0 0.0
        %1135 = vmatprep.subr.mxu0 0.0
        %1136 = vmatpush1.msra.mxu0 0.0
        %1137 = vmatprep.subr.mxu0 0.0
        %1138 = vmatpush1.msra.mxu0 0.0
        %1139 = vmatprep.subr.mxu0 0.0
        %1140 = vmatpush1.msra.mxu0 0.0
        %1141 = vmatprep.subr.mxu0 0.0
        %1142 = vmatpush1.msra.mxu0 0.0
        %1143 = vmatprep.subr.mxu0 0.0
        %1144 = vmatpush1.msra.mxu0 0.0
        %1145 = vmatprep.subr.mxu0 0.0
        %1146 = vmatpush1.msra.mxu0 0.0
        %1147 = vmatprep.subr.mxu0 0.0
        %1148 = vmatpush1.msra.mxu0 0.0
        %1149 = vmatprep.subr.mxu0 0.0
        %1150 = vmatpush1.msra.mxu0 0.0
        %1151 = vmatprep.subr.mxu0 0.0
        %1152 = vmatpush1.msra.mxu0 0.0
        %1153 = vmatprep.subr.mxu0 0.0
        %1154 = vmatpush1.msra.mxu0 0.0
        %1155 = vmatprep.subr.mxu0 0.0
        %1156 = vmatpush1.msra.mxu0 0.0
        %1157 = vmatprep.subr.mxu0 0.0
        %1158 = vmatpush1.msra.mxu0 0.0
        %1159 = vmatprep.subr.mxu0 0.0
        %1160 = vmatpush1.msra.mxu0 0.0
        %1161 = vmatprep.subr.mxu0 0.0
        %1162 = vmatpush1.msra.mxu0 0.0
        %1163 = vmatprep.subr.mxu0 0.0
        %1164 = vmatpush1.msra.mxu0 0.0
        %1165 = vmatprep.subr.mxu0 0.0
        %1166 = vmatpush1.msra.mxu0 0.0
        %1167 = vmatprep.subr.mxu0 0.0
        %1168 = vmatpush1.msra.mxu0 0.0
        %1169 = vmatprep.subr.mxu0 0.0
        %1170 = vmatpush1.msra.mxu0 0.0
        %1171 = vmatprep.subr.mxu0 0.0
        %1172 = vmatpush1.msra.mxu0 0.0
        %1173 = vmatprep.subr.mxu0 0.0
        %1174 = vmatpush1.msra.mxu0 0.0
        %1175 = vmatprep.subr.mxu0 0.0
        %1176 = vmatpush1.msra.mxu0 0.0
        %1177 = vmatprep.subr.mxu0 0.0
        %1178 = vmatpush1.msra.mxu0 0.0
        %1179 = vmatprep.subr.mxu0 0.0
        %1180 = vmatpush1.msra.mxu0 0.0
        %1181 = vmatprep.subr.mxu0 0.0
        %1182 = vmatpush1.msra.mxu0 0.0
        %1183 = vmatprep.subr.mxu0 0.0
        %1184 = vmatpush1.msra.mxu0 0.0
        %1185 = vmatprep.subr.mxu0 0.0
        %1186 = vmatpush1.msra.mxu0 0.0
        %1187 = vmatprep.subr.mxu0 0.0
        %1188 = vmatpush1.msra.mxu0 0.0
        %1189 = vmatprep.subr.mxu0 0.0
        %1190 = vmatpush1.msra.mxu0 0.0
        %1191 = vmatprep.mubr.f32.mxu0 0.0
        %1192 = vmatmul.mubr.f32.gmra.mrb[0].mxu0 %v1118
        %v1193 = vpop.f32.mrb[0].mxu0
        %v1194 = vadd.f32 %v1114, %v1193
        %v1195 = vpop.f32.mrb[0].mxu0
        %1196 = vmatprep.mubr.f32.mxu0 0.0
        %1197 = vmatmul.mubr.f32.gmra.mrb[0].mxu0 %v1121
        %v1198 = vpop.f32.mrb[0].mxu0
        %v1199 = vadd.f32 %v1114, %v1198
        %v1200 = vpop.f32.mrb[0].mxu0
        %1201 = vdwg.mxu0
        %v1202 = vadd.f32 %v1194, %v1199
        %v1203 = vxor.u32 %v1202, 2147483648
        %v1204 = vmul.f32 %v1203, 1.442695
        %v1205 = vpow.pop %v1204
        %v1206 = vadd.f32 %v1205, 1.0
        %v1207 = vrcp.pop %v1206
        %v1208 = vmul.f32 1.0, %v1207
        %v1209 = vlaneseq
        %v1210 = vshrl.u32 %v1209, 7
        %v1211 = vsub.s32 0, %v1210
        %v1212 = vrot.slane %v1208, %v1211
        %1214 = vbcast.lane.b32.xlu0 %v1212, 256
        %v1215 = vpop.permute.xlu0 %1214
        %s1217 = sor.u32 256, 8
        %1218 = vbcast.lane.b32.xlu0 %v1212, %s1217
        %v1219 = vpop.permute.xlu0 %1218
        %s1221 = sor.u32 256, 16
        %1222 = vbcast.lane.b32.xlu0 %v1212, %s1221
        %v1223 = vpop.permute.xlu0 %1222
        %s1225 = sor.u32 256, 24
        %1226 = vbcast.lane.b32.xlu0 %v1212, %s1225
        %v1227 = vpop.permute.xlu0 %1226
        %v1228 = vlaneseq
        %v1229 = vshrl.u32 %v1228, 7
        %v1230 = vsub.s32 1, %v1229
        %v1231 = vrot.slane %v1208, %v1230
        %1233 = vbcast.lane.b32.xlu0 %v1231, 256
        %v1234 = vpop.permute.xlu0 %1233
        %s1236 = sor.u32 256, 8
        %1237 = vbcast.lane.b32.xlu0 %v1231, %s1236
        %v1238 = vpop.permute.xlu0 %1237
        %s1240 = sor.u32 256, 16
        %1241 = vbcast.lane.b32.xlu0 %v1231, %s1240
        %v1242 = vpop.permute.xlu0 %1241
        %s1244 = sor.u32 256, 24
        %1245 = vbcast.lane.b32.xlu0 %v1231, %s1244
        %v1246 = vpop.permute.xlu0 %1245
        %v1247 = vlaneseq
        %v1248 = vshrl.u32 %v1247, 7
        %v1249 = vsub.s32 2, %v1248
        %v1250 = vrot.slane %v1208, %v1249
        %1252 = vbcast.lane.b32.xlu0 %v1250, 256
        %v1253 = vpop.permute.xlu0 %1252
        %s1255 = sor.u32 256, 8
        %1256 = vbcast.lane.b32.xlu0 %v1250, %s1255
        %v1257 = vpop.permute.xlu0 %1256
        %s1259 = sor.u32 256, 16
        %1260 = vbcast.lane.b32.xlu0 %v1250, %s1259
        %v1261 = vpop.permute.xlu0 %1260
        %s1263 = sor.u32 256, 24
        %1264 = vbcast.lane.b32.xlu0 %v1250, %s1263
        %v1265 = vpop.permute.xlu0 %1264
        %v1266 = vlaneseq
        %v1267 = vshrl.u32 %v1266, 7
        %v1268 = vsub.s32 3, %v1267
        %v1269 = vrot.slane %v1208, %v1268
        %1271 = vbcast.lane.b32.xlu0 %v1269, 256
        %v1272 = vpop.permute.xlu0 %1271
        %s1274 = sor.u32 256, 8
        %1275 = vbcast.lane.b32.xlu0 %v1269, %s1274
        %v1276 = vpop.permute.xlu0 %1275
        %s1278 = sor.u32 256, 16
        %1279 = vbcast.lane.b32.xlu0 %v1269, %s1278
        %v1280 = vpop.permute.xlu0 %1279
        %s1282 = sor.u32 256, 24
        %1283 = vbcast.lane.b32.xlu0 %v1269, %s1282
        %v1284 = vpop.permute.xlu0 %1283
        %v1285 = vlaneseq
        %v1286 = vshrl.u32 %v1285, 7
        %v1287 = vsub.s32 4, %v1286
        %v1288 = vrot.slane %v1208, %v1287
        %1290 = vbcast.lane.b32.xlu0 %v1288, 256
        %v1291 = vpop.permute.xlu0 %1290
        %s1293 = sor.u32 256, 8
        %1294 = vbcast.lane.b32.xlu0 %v1288, %s1293
        %v1295 = vpop.permute.xlu0 %1294
        %s1297 = sor.u32 256, 16
        %1298 = vbcast.lane.b32.xlu0 %v1288, %s1297
        %v1299 = vpop.permute.xlu0 %1298
        %s1301 = sor.u32 256, 24
        %1302 = vbcast.lane.b32.xlu0 %v1288, %s1301
        %v1303 = vpop.permute.xlu0 %1302
        %v1304 = vlaneseq
        %v1305 = vshrl.u32 %v1304, 7
        %v1306 = vsub.s32 5, %v1305
        %v1307 = vrot.slane %v1208, %v1306
        %1309 = vbcast.lane.b32.xlu0 %v1307, 256
        %v1310 = vpop.permute.xlu0 %1309
        %s1312 = sor.u32 256, 8
        %1313 = vbcast.lane.b32.xlu0 %v1307, %s1312
        %v1314 = vpop.permute.xlu0 %1313
        %s1316 = sor.u32 256, 16
        %1317 = vbcast.lane.b32.xlu0 %v1307, %s1316
        %v1318 = vpop.permute.xlu0 %1317
        %s1320 = sor.u32 256, 24
        %1321 = vbcast.lane.b32.xlu0 %v1307, %s1320
        %v1322 = vpop.permute.xlu0 %1321
        %v1323 = vlaneseq
        %v1324 = vshrl.u32 %v1323, 7
        %v1325 = vsub.s32 6, %v1324
        %v1326 = vrot.slane %v1208, %v1325
        %1328 = vbcast.lane.b32.xlu0 %v1326, 256
        %v1329 = vpop.permute.xlu0 %1328
        %s1331 = sor.u32 256, 8
        %1332 = vbcast.lane.b32.xlu0 %v1326, %s1331
        %v1333 = vpop.permute.xlu0 %1332
        %s1335 = sor.u32 256, 16
        %1336 = vbcast.lane.b32.xlu0 %v1326, %s1335
        %v1337 = vpop.permute.xlu0 %1336
        %s1339 = sor.u32 256, 24
        %1340 = vbcast.lane.b32.xlu0 %v1326, %s1339
        %v1341 = vpop.permute.xlu0 %1340
        %v1342 = vlaneseq
        %v1343 = vshrl.u32 %v1342, 7
        %v1344 = vsub.s32 7, %v1343
        %v1345 = vrot.slane %v1208, %v1344
        %1347 = vbcast.lane.b32.xlu0 %v1345, 256
        %v1348 = vpop.permute.xlu0 %1347
        %s1350 = sor.u32 256, 8
        %1351 = vbcast.lane.b32.xlu0 %v1345, %s1350
        %v1352 = vpop.permute.xlu0 %1351
        %s1354 = sor.u32 256, 16
        %1355 = vbcast.lane.b32.xlu0 %v1345, %s1354
        %v1356 = vpop.permute.xlu0 %1355
        %s1358 = sor.u32 256, 24
        %1359 = vbcast.lane.b32.xlu0 %v1345, %s1358
        %v1360 = vpop.permute.xlu0 %1359
        %v1361 = vmul.f32 %v329, %v1215
        %v1362 = vmul.f32 %v330, %v1215
        %v1363 = vmul.f32 %v331, %v1219
        %v1364 = vmul.f32 %v332, %v1219
        %v1365 = vmul.f32 %v333, %v1223
        %v1366 = vmul.f32 %v334, %v1223
        %v1367 = vmul.f32 %v335, %v1227
        %v1368 = vmul.f32 %v336, %v1227
        %v1369 = vmul.f32 %v337, %v1234
        %v1370 = vmul.f32 %v338, %v1234
        %v1371 = vmul.f32 %v339, %v1238
        %v1372 = vmul.f32 %v340, %v1238
        %v1373 = vmul.f32 %v341, %v1242
        %v1374 = vmul.f32 %v342, %v1242
        %v1375 = vmul.f32 %v343, %v1246
        %v1376 = vmul.f32 %v344, %v1246
        %v1377 = vmul.f32 %v345, %v1253
        %v1378 = vmul.f32 %v346, %v1253
        %v1379 = vmul.f32 %v347, %v1257
        %v1380 = vmul.f32 %v348, %v1257
        %v1381 = vmul.f32 %v349, %v1261
        %v1382 = vmul.f32 %v350, %v1261
        %v1383 = vmul.f32 %v351, %v1265
        %v1384 = vmul.f32 %v352, %v1265
        %v1385 = vmul.f32 %v353, %v1272
        %v1386 = vmul.f32 %v354, %v1272
        %v1387 = vmul.f32 %v355, %v1276
        %v1388 = vmul.f32 %v356, %v1276
        %v1389 = vmul.f32 %v357, %v1280
        %v1390 = vmul.f32 %v358, %v1280
        %v1391 = vmul.f32 %v359, %v1284
        %v1392 = vmul.f32 %v360, %v1284
        %v1393 = vmul.f32 %v361, %v1291
        %v1394 = vmul.f32 %v362, %v1291
        %v1395 = vmul.f32 %v363, %v1295
        %v1396 = vmul.f32 %v364, %v1295
        %v1397 = vmul.f32 %v365, %v1299
        %v1398 = vmul.f32 %v366, %v1299
        %v1399 = vmul.f32 %v367, %v1303
        %v1400 = vmul.f32 %v368, %v1303
        %v1401 = vmul.f32 %v369, %v1310
        %v1402 = vmul.f32 %v370, %v1310
        %v1403 = vmul.f32 %v371, %v1314
        %v1404 = vmul.f32 %v372, %v1314
        %v1405 = vmul.f32 %v373, %v1318
        %v1406 = vmul.f32 %v374, %v1318
        %v1407 = vmul.f32 %v375, %v1322
        %v1408 = vmul.f32 %v376, %v1322
        %v1409 = vmul.f32 %v377, %v1329
        %v1410 = vmul.f32 %v378, %v1329
        %v1411 = vmul.f32 %v379, %v1333
        %v1412 = vmul.f32 %v380, %v1333
        %v1413 = vmul.f32 %v381, %v1337
        %v1414 = vmul.f32 %v382, %v1337
        %v1415 = vmul.f32 %v383, %v1341
        %v1416 = vmul.f32 %v384, %v1341
        %v1417 = vmul.f32 %v385, %v1348
        %v1418 = vmul.f32 %v386, %v1348
        %v1419 = vmul.f32 %v387, %v1352
        %v1420 = vmul.f32 %v388, %v1352
        %v1421 = vmul.f32 %v389, %v1356
        %v1422 = vmul.f32 %v390, %v1356
        %v1423 = vmul.f32 %v391, %v1360
        %v1424 = vmul.f32 %v392, %v1360
        %v1425 = vadd.f32 %v1361, %v1363
        %v1426 = vadd.f32 %v1425, %v1365
        %v1427 = vadd.f32 %v1426, %v1367
        %v1428 = vrot.slane %v1427, 4
        %v1429 = vadd.f32 %v1427, %v1428
        %v1430 = vrot.slane %v1429, 2
        %v1431 = vadd.f32 %v1429, %v1430
        %v1432 = vrot.slane %v1431, 1
        %v1433 = vadd.f32 %v1431, %v1432
        %v1434 = vadd.f32 %v1362, %v1364
        %v1435 = vadd.f32 %v1434, %v1366
        %v1436 = vadd.f32 %v1435, %v1368
        %v1437 = vrot.slane %v1436, 4
        %v1438 = vadd.f32 %v1436, %v1437
        %v1439 = vrot.slane %v1438, 2
        %v1440 = vadd.f32 %v1438, %v1439
        %v1441 = vrot.slane %v1440, 1
        %v1442 = vadd.f32 %v1440, %v1441
        %v1443 = vadd.f32 %v1369, %v1371
        %v1444 = vadd.f32 %v1443, %v1373
        %v1445 = vadd.f32 %v1444, %v1375
        %v1446 = vrot.slane %v1445, 4
        %v1447 = vadd.f32 %v1445, %v1446
        %v1448 = vrot.slane %v1447, 2
        %v1449 = vadd.f32 %v1447, %v1448
        %v1450 = vrot.slane %v1449, 1
        %v1451 = vadd.f32 %v1449, %v1450
        %v1452 = vadd.f32 %v1370, %v1372
        %v1453 = vadd.f32 %v1452, %v1374
        %v1454 = vadd.f32 %v1453, %v1376
        %v1455 = vrot.slane %v1454, 4
        %v1456 = vadd.f32 %v1454, %v1455
        %v1457 = vrot.slane %v1456, 2
        %v1458 = vadd.f32 %v1456, %v1457
        %v1459 = vrot.slane %v1458, 1
        %v1460 = vadd.f32 %v1458, %v1459
        %v1461 = vadd.f32 %v1377, %v1379
        %v1462 = vadd.f32 %v1461, %v1381
        %v1463 = vadd.f32 %v1462, %v1383
        %v1464 = vrot.slane %v1463, 4
        %v1465 = vadd.f32 %v1463, %v1464
        %v1466 = vrot.slane %v1465, 2
        %v1467 = vadd.f32 %v1465, %v1466
        %v1468 = vrot.slane %v1467, 1
        %v1469 = vadd.f32 %v1467, %v1468
        %v1470 = vadd.f32 %v1378, %v1380
        %v1471 = vadd.f32 %v1470, %v1382
        %v1472 = vadd.f32 %v1471, %v1384
        %v1473 = vrot.slane %v1472, 4
        %v1474 = vadd.f32 %v1472, %v1473
        %v1475 = vrot.slane %v1474, 2
        %v1476 = vadd.f32 %v1474, %v1475
        %v1477 = vrot.slane %v1476, 1
        %v1478 = vadd.f32 %v1476, %v1477
        %v1479 = vadd.f32 %v1385, %v1387
        %v1480 = vadd.f32 %v1479, %v1389
        %v1481 = vadd.f32 %v1480, %v1391
        %v1482 = vrot.slane %v1481, 4
        %v1483 = vadd.f32 %v1481, %v1482
        %v1484 = vrot.slane %v1483, 2
        %v1485 = vadd.f32 %v1483, %v1484
        %v1486 = vrot.slane %v1485, 1
        %v1487 = vadd.f32 %v1485, %v1486
        %v1488 = vadd.f32 %v1386, %v1388
        %v1489 = vadd.f32 %v1488, %v1390
        %v1490 = vadd.f32 %v1489, %v1392
        %v1491 = vrot.slane %v1490, 4
        %v1492 = vadd.f32 %v1490, %v1491
        %v1493 = vrot.slane %v1492, 2
        %v1494 = vadd.f32 %v1492, %v1493
        %v1495 = vrot.slane %v1494, 1
        %v1496 = vadd.f32 %v1494, %v1495
        %v1497 = vadd.f32 %v1393, %v1395
        %v1498 = vadd.f32 %v1497, %v1397
        %v1499 = vadd.f32 %v1498, %v1399
        %v1500 = vrot.slane %v1499, 4
        %v1501 = vadd.f32 %v1499, %v1500
        %v1502 = vrot.slane %v1501, 2
        %v1503 = vadd.f32 %v1501, %v1502
        %v1504 = vrot.slane %v1503, 1
        %v1505 = vadd.f32 %v1503, %v1504
        %v1506 = vadd.f32 %v1394, %v1396
        %v1507 = vadd.f32 %v1506, %v1398
        %v1508 = vadd.f32 %v1507, %v1400
        %v1509 = vrot.slane %v1508, 4
        %v1510 = vadd.f32 %v1508, %v1509
        %v1511 = vrot.slane %v1510, 2
        %v1512 = vadd.f32 %v1510, %v1511
        %v1513 = vrot.slane %v1512, 1
        %v1514 = vadd.f32 %v1512, %v1513
        %v1515 = vadd.f32 %v1401, %v1403
        %v1516 = vadd.f32 %v1515, %v1405
        %v1517 = vadd.f32 %v1516, %v1407
        %v1518 = vrot.slane %v1517, 4
        %v1519 = vadd.f32 %v1517, %v1518
        %v1520 = vrot.slane %v1519, 2
        %v1521 = vadd.f32 %v1519, %v1520
        %v1522 = vrot.slane %v1521, 1
        %v1523 = vadd.f32 %v1521, %v1522
        %v1524 = vadd.f32 %v1402, %v1404
        %v1525 = vadd.f32 %v1524, %v1406
        %v1526 = vadd.f32 %v1525, %v1408
        %v1527 = vrot.slane %v1526, 4
        %v1528 = vadd.f32 %v1526, %v1527
        %v1529 = vrot.slane %v1528, 2
        %v1530 = vadd.f32 %v1528, %v1529
        %v1531 = vrot.slane %v1530, 1
        %v1532 = vadd.f32 %v1530, %v1531
        %v1533 = vadd.f32 %v1409, %v1411
        %v1534 = vadd.f32 %v1533, %v1413
        %v1535 = vadd.f32 %v1534, %v1415
        %v1536 = vrot.slane %v1535, 4
        %v1537 = vadd.f32 %v1535, %v1536
        %v1538 = vrot.slane %v1537, 2
        %v1539 = vadd.f32 %v1537, %v1538
        %v1540 = vrot.slane %v1539, 1
        %v1541 = vadd.f32 %v1539, %v1540
        %v1542 = vadd.f32 %v1410, %v1412
        %v1543 = vadd.f32 %v1542, %v1414
        %v1544 = vadd.f32 %v1543, %v1416
        %v1545 = vrot.slane %v1544, 4
        %v1546 = vadd.f32 %v1544, %v1545
        %v1547 = vrot.slane %v1546, 2
        %v1548 = vadd.f32 %v1546, %v1547
        %v1549 = vrot.slane %v1548, 1
        %v1550 = vadd.f32 %v1548, %v1549
        %v1551 = vadd.f32 %v1417, %v1419
        %v1552 = vadd.f32 %v1551, %v1421
        %v1553 = vadd.f32 %v1552, %v1423
        %v1554 = vrot.slane %v1553, 4
        %v1555 = vadd.f32 %v1553, %v1554
        %v1556 = vrot.slane %v1555, 2
        %v1557 = vadd.f32 %v1555, %v1556
        %v1558 = vrot.slane %v1557, 1
        %v1559 = vadd.f32 %v1557, %v1558
        %v1560 = vadd.f32 %v1418, %v1420
        %v1561 = vadd.f32 %v1560, %v1422
        %v1562 = vadd.f32 %v1561, %v1424
        %v1563 = vrot.slane %v1562, 4
        %v1564 = vadd.f32 %v1562, %v1563
        %v1565 = vrot.slane %v1564, 2
        %v1566 = vadd.f32 %v1564, %v1565
        %v1567 = vrot.slane %v1566, 1
        %v1568 = vadd.f32 %v1566, %v1567
        %v1569 = vrcp.pop 32.0
        %v1570 = vmul.f32 %v1433, %v1569
        %v1571 = vmul.f32 %v1442, %v1569
        %v1572 = vmul.f32 %v1451, %v1569
        %v1573 = vmul.f32 %v1460, %v1569
        %v1574 = vmul.f32 %v1469, %v1569
        %v1575 = vmul.f32 %v1478, %v1569
        %v1576 = vmul.f32 %v1487, %v1569
        %v1577 = vmul.f32 %v1496, %v1569
        %v1578 = vmul.f32 %v1505, %v1569
        %v1579 = vmul.f32 %v1514, %v1569
        %v1580 = vmul.f32 %v1523, %v1569
        %v1581 = vmul.f32 %v1532, %v1569
        %v1582 = vmul.f32 %v1541, %v1569
        %v1583 = vmul.f32 %v1550, %v1569
        %v1584 = vmul.f32 %v1559, %v1569
        %v1585 = vmul.f32 %v1568, %v1569
        %v1586 = vmax.f32 %v1361, %v1363
        %v1587 = vmax.f32 %v1586, %v1365
        %v1588 = vmax.f32 %v1587, %v1367
        %v1589 = vrot.slane %v1588, 4
        %v1590 = vmax.f32 %v1588, %v1589
        %v1591 = vrot.slane %v1590, 2
        %v1592 = vmax.f32 %v1590, %v1591
        %v1593 = vrot.slane %v1592, 1
        %v1594 = vmax.f32 %v1592, %v1593
        %v1595 = vmax.f32 %v1362, %v1364
        %v1596 = vmax.f32 %v1595, %v1366
        %v1597 = vmax.f32 %v1596, %v1368
        %v1598 = vrot.slane %v1597, 4
        %v1599 = vmax.f32 %v1597, %v1598
        %v1600 = vrot.slane %v1599, 2
        %v1601 = vmax.f32 %v1599, %v1600
        %v1602 = vrot.slane %v1601, 1
        %v1603 = vmax.f32 %v1601, %v1602
        %v1604 = vmax.f32 %v1369, %v1371
        %v1605 = vmax.f32 %v1604, %v1373
        %v1606 = vmax.f32 %v1605, %v1375
        %v1607 = vrot.slane %v1606, 4
        %v1608 = vmax.f32 %v1606, %v1607
        %v1609 = vrot.slane %v1608, 2
        %v1610 = vmax.f32 %v1608, %v1609
        %v1611 = vrot.slane %v1610, 1
        %v1612 = vmax.f32 %v1610, %v1611
        %v1613 = vmax.f32 %v1370, %v1372
        %v1614 = vmax.f32 %v1613, %v1374
        %v1615 = vmax.f32 %v1614, %v1376
        %v1616 = vrot.slane %v1615, 4
        %v1617 = vmax.f32 %v1615, %v1616
        %v1618 = vrot.slane %v1617, 2
        %v1619 = vmax.f32 %v1617, %v1618
        %v1620 = vrot.slane %v1619, 1
        %v1621 = vmax.f32 %v1619, %v1620
        %v1622 = vmax.f32 %v1377, %v1379
        %v1623 = vmax.f32 %v1622, %v1381
        %v1624 = vmax.f32 %v1623, %v1383
        %v1625 = vrot.slane %v1624, 4
        %v1626 = vmax.f32 %v1624, %v1625
        %v1627 = vrot.slane %v1626, 2
        %v1628 = vmax.f32 %v1626, %v1627
        %v1629 = vrot.slane %v1628, 1
        %v1630 = vmax.f32 %v1628, %v1629
        %v1631 = vmax.f32 %v1378, %v1380
        %v1632 = vmax.f32 %v1631, %v1382
        %v1633 = vmax.f32 %v1632, %v1384
        %v1634 = vrot.slane %v1633, 4
        %v1635 = vmax.f32 %v1633, %v1634
        %v1636 = vrot.slane %v1635, 2
        %v1637 = vmax.f32 %v1635, %v1636
        %v1638 = vrot.slane %v1637, 1
        %v1639 = vmax.f32 %v1637, %v1638
        %v1640 = vmax.f32 %v1385, %v1387
        %v1641 = vmax.f32 %v1640, %v1389
        %v1642 = vmax.f32 %v1641, %v1391
        %v1643 = vrot.slane %v1642, 4
        %v1644 = vmax.f32 %v1642, %v1643
        %v1645 = vrot.slane %v1644, 2
        %v1646 = vmax.f32 %v1644, %v1645
        %v1647 = vrot.slane %v1646, 1
        %v1648 = vmax.f32 %v1646, %v1647
        %v1649 = vmax.f32 %v1386, %v1388
        %v1650 = vmax.f32 %v1649, %v1390
        %v1651 = vmax.f32 %v1650, %v1392
        %v1652 = vrot.slane %v1651, 4
        %v1653 = vmax.f32 %v1651, %v1652
        %v1654 = vrot.slane %v1653, 2
        %v1655 = vmax.f32 %v1653, %v1654
        %v1656 = vrot.slane %v1655, 1
        %v1657 = vmax.f32 %v1655, %v1656
        %v1658 = vmax.f32 %v1393, %v1395
        %v1659 = vmax.f32 %v1658, %v1397
        %v1660 = vmax.f32 %v1659, %v1399
        %v1661 = vrot.slane %v1660, 4
        %v1662 = vmax.f32 %v1660, %v1661
        %v1663 = vrot.slane %v1662, 2
        %v1664 = vmax.f32 %v1662, %v1663
        %v1665 = vrot.slane %v1664, 1
        %v1666 = vmax.f32 %v1664, %v1665
        %v1667 = vmax.f32 %v1394, %v1396
        %v1668 = vmax.f32 %v1667, %v1398
        %v1669 = vmax.f32 %v1668, %v1400
        %v1670 = vrot.slane %v1669, 4
        %v1671 = vmax.f32 %v1669, %v1670
        %v1672 = vrot.slane %v1671, 2
        %v1673 = vmax.f32 %v1671, %v1672
        %v1674 = vrot.slane %v1673, 1
        %v1675 = vmax.f32 %v1673, %v1674
        %v1676 = vmax.f32 %v1401, %v1403
        %v1677 = vmax.f32 %v1676, %v1405
        %v1678 = vmax.f32 %v1677, %v1407
        %v1679 = vrot.slane %v1678, 4
        %v1680 = vmax.f32 %v1678, %v1679
        %v1681 = vrot.slane %v1680, 2
        %v1682 = vmax.f32 %v1680, %v1681
        %v1683 = vrot.slane %v1682, 1
        %v1684 = vmax.f32 %v1682, %v1683
        %v1685 = vmax.f32 %v1402, %v1404
        %v1686 = vmax.f32 %v1685, %v1406
        %v1687 = vmax.f32 %v1686, %v1408
        %v1688 = vrot.slane %v1687, 4
        %v1689 = vmax.f32 %v1687, %v1688
        %v1690 = vrot.slane %v1689, 2
        %v1691 = vmax.f32 %v1689, %v1690
        %v1692 = vrot.slane %v1691, 1
        %v1693 = vmax.f32 %v1691, %v1692
        %v1694 = vmax.f32 %v1409, %v1411
        %v1695 = vmax.f32 %v1694, %v1413
        %v1696 = vmax.f32 %v1695, %v1415
        %v1697 = vrot.slane %v1696, 4
        %v1698 = vmax.f32 %v1696, %v1697
        %v1699 = vrot.slane %v1698, 2
        %v1700 = vmax.f32 %v1698, %v1699
        %v1701 = vrot.slane %v1700, 1
        %v1702 = vmax.f32 %v1700, %v1701
        %v1703 = vmax.f32 %v1410, %v1412
        %v1704 = vmax.f32 %v1703, %v1414
        %v1705 = vmax.f32 %v1704, %v1416
        %v1706 = vrot.slane %v1705, 4
        %v1707 = vmax.f32 %v1705, %v1706
        %v1708 = vrot.slane %v1707, 2
        %v1709 = vmax.f32 %v1707, %v1708
        %v1710 = vrot.slane %v1709, 1
        %v1711 = vmax.f32 %v1709, %v1710
        %v1712 = vmax.f32 %v1417, %v1419
        %v1713 = vmax.f32 %v1712, %v1421
        %v1714 = vmax.f32 %v1713, %v1423
        %v1715 = vrot.slane %v1714, 4
        %v1716 = vmax.f32 %v1714, %v1715
        %v1717 = vrot.slane %v1716, 2
        %v1718 = vmax.f32 %v1716, %v1717
        %v1719 = vrot.slane %v1718, 1
        %v1720 = vmax.f32 %v1718, %v1719
        %v1721 = vmax.f32 %v1418, %v1420
        %v1722 = vmax.f32 %v1721, %v1422
        %v1723 = vmax.f32 %v1722, %v1424
        %v1724 = vrot.slane %v1723, 4
        %v1725 = vmax.f32 %v1723, %v1724
        %v1726 = vrot.slane %v1725, 2
        %v1727 = vmax.f32 %v1725, %v1726
        %v1728 = vrot.slane %v1727, 1
        %v1729 = vmax.f32 %v1727, %v1728
        %v1730 = vld [vmem:[#allocation5] sm:$0xff]
        %v1731 = vld [vmem:[#allocation5 + $0x8] sm:$0xff]
        %v1732 = vld [vmem:[#allocation5 + $0x10] sm:$0xff]
        %v1733 = vld [vmem:[#allocation5 + $0x18] sm:$0xff]
        %v1734 = vld [vmem:[#allocation5 + $0x20] sm:$0xff]
        %v1735 = vld [vmem:[#allocation5 + $0x28] sm:$0xff]
        %v1736 = vld [vmem:[#allocation5 + $0x30] sm:$0xff]
        %v1737 = vld [vmem:[#allocation5 + $0x38] sm:$0xff]
        %v1738 = vld [vmem:[#allocation5 + $0x40] sm:$0xff]
        %v1739 = vld [vmem:[#allocation5 + $0x48] sm:$0xff]
        %v1740 = vld [vmem:[#allocation5 + $0x50] sm:$0xff]
        %v1741 = vld [vmem:[#allocation5 + $0x58] sm:$0xff]
        %v1742 = vld [vmem:[#allocation5 + $0x60] sm:$0xff]
        %v1743 = vld [vmem:[#allocation5 + $0x68] sm:$0xff]
        %v1744 = vld [vmem:[#allocation5 + $0x70] sm:$0xff]
        %v1745 = vld [vmem:[#allocation5 + $0x78] sm:$0xff]
        %v1746 = vld [vmem:[#allocation5 + $0x80] sm:$0xff]
        %v1747 = vld [vmem:[#allocation5 + $0x88] sm:$0xff]
        %v1748 = vld [vmem:[#allocation5 + $0x90] sm:$0xff]
        %v1749 = vld [vmem:[#allocation5 + $0x98] sm:$0xff]
        %v1750 = vld [vmem:[#allocation5 + $0xa0] sm:$0xff]
        %v1751 = vld [vmem:[#allocation5 + $0xa8] sm:$0xff]
        %v1752 = vld [vmem:[#allocation5 + $0xb0] sm:$0xff]
        %v1753 = vld [vmem:[#allocation5 + $0xb8] sm:$0xff]
        %v1754 = vld [vmem:[#allocation5 + $0xc0] sm:$0xff]
        %v1755 = vld [vmem:[#allocation5 + $0xc8] sm:$0xff]
        %v1756 = vld [vmem:[#allocation5 + $0xd0] sm:$0xff]
        %v1757 = vld [vmem:[#allocation5 + $0xd8] sm:$0xff]
        %v1758 = vld [vmem:[#allocation5 + $0xe0] sm:$0xff]
        %v1759 = vld [vmem:[#allocation5 + $0xe8] sm:$0xff]
        %v1760 = vld [vmem:[#allocation5 + $0xf0] sm:$0xff]
        %v1761 = vld [vmem:[#allocation5 + $0xf8] sm:$0xff]
        %v1762 = vld [vmem:[#allocation5 + $0x100] sm:$0xff]
        %v1763 = vld [vmem:[#allocation5 + $0x108] sm:$0xff]
        %v1764 = vld [vmem:[#allocation5 + $0x110] sm:$0xff]
        %v1765 = vld [vmem:[#allocation5 + $0x118] sm:$0xff]
        %v1766 = vld [vmem:[#allocation5 + $0x120] sm:$0xff]
        %v1767 = vld [vmem:[#allocation5 + $0x128] sm:$0xff]
        %v1768 = vld [vmem:[#allocation5 + $0x130] sm:$0xff]
        %v1769 = vld [vmem:[#allocation5 + $0x138] sm:$0xff]
        %v1770 = vld [vmem:[#allocation5 + $0x140] sm:$0xff]
        %v1771 = vld [vmem:[#allocation5 + $0x148] sm:$0xff]
        %v1772 = vld [vmem:[#allocation5 + $0x150] sm:$0xff]
        %v1773 = vld [vmem:[#allocation5 + $0x158] sm:$0xff]
        %v1774 = vld [vmem:[#allocation5 + $0x160] sm:$0xff]
        %v1775 = vld [vmem:[#allocation5 + $0x168] sm:$0xff]
        %v1776 = vld [vmem:[#allocation5 + $0x170] sm:$0xff]
        %v1777 = vld [vmem:[#allocation5 + $0x178] sm:$0xff]
        %v1778 = vld [vmem:[#allocation5 + $0x180] sm:$0xff]
        %v1779 = vld [vmem:[#allocation5 + $0x188] sm:$0xff]
        %v1780 = vld [vmem:[#allocation5 + $0x190] sm:$0xff]
        %v1781 = vld [vmem:[#allocation5 + $0x198] sm:$0xff]
        %v1782 = vld [vmem:[#allocation5 + $0x1a0] sm:$0xff]
        %v1783 = vld [vmem:[#allocation5 + $0x1a8] sm:$0xff]
        %v1784 = vld [vmem:[#allocation5 + $0x1b0] sm:$0xff]
        %v1785 = vld [vmem:[#allocation5 + $0x1b8] sm:$0xff]
        %v1786 = vld [vmem:[#allocation5 + $0x1c0] sm:$0xff]
        %v1787 = vld [vmem:[#allocation5 + $0x1c8] sm:$0xff]
        %v1788 = vld [vmem:[#allocation5 + $0x1d0] sm:$0xff]
        %v1789 = vld [vmem:[#allocation5 + $0x1d8] sm:$0xff]
        %v1790 = vld [vmem:[#allocation5 + $0x1e0] sm:$0xff]
        %v1791 = vld [vmem:[#allocation5 + $0x1e8] sm:$0xff]
        %v1792 = vld [vmem:[#allocation5 + $0x1f0] sm:$0xff]
        %v1793 = vld [vmem:[#allocation5 + $0x1f8] sm:$0xff]
        %v1794 = vld [vmem:[#allocation7] sm:$0xff]
        %v1795 = vld [vmem:[#allocation7 + $0x8] sm:$0xff]
        %v1796 = vld [vmem:[#allocation7 + $0x10] sm:$0xff]
        %v1797 = vld [vmem:[#allocation7 + $0x18] sm:$0xff]
        %v1798 = vld [vmem:[#allocation7 + $0x20] sm:$0xff]
        %v1799 = vld [vmem:[#allocation7 + $0x28] sm:$0xff]
        %v1800 = vld [vmem:[#allocation7 + $0x30] sm:$0xff]
        %v1801 = vld [vmem:[#allocation7 + $0x38] sm:$0xff]
        %v1802 = vld [vmem:[#allocation7 + $0x40] sm:$0xff]
        %v1803 = vld [vmem:[#allocation7 + $0x48] sm:$0xff]
        %v1804 = vld [vmem:[#allocation7 + $0x50] sm:$0xff]
        %v1805 = vld [vmem:[#allocation7 + $0x58] sm:$0xff]
        %v1806 = vld [vmem:[#allocation7 + $0x60] sm:$0xff]
        %v1807 = vld [vmem:[#allocation7 + $0x68] sm:$0xff]
        %v1808 = vld [vmem:[#allocation7 + $0x70] sm:$0xff]
        %v1809 = vld [vmem:[#allocation7 + $0x78] sm:$0xff]
        %v1810 = vld [vmem:[#allocation7 + $0x80] sm:$0xff]
        %v1811 = vld [vmem:[#allocation7 + $0x88] sm:$0xff]
        %v1812 = vld [vmem:[#allocation7 + $0x90] sm:$0xff]
        %v1813 = vld [vmem:[#allocation7 + $0x98] sm:$0xff]
        %v1814 = vld [vmem:[#allocation7 + $0xa0] sm:$0xff]
        %v1815 = vld [vmem:[#allocation7 + $0xa8] sm:$0xff]
        %v1816 = vld [vmem:[#allocation7 + $0xb0] sm:$0xff]
        %v1817 = vld [vmem:[#allocation7 + $0xb8] sm:$0xff]
        %v1818 = vld [vmem:[#allocation7 + $0xc0] sm:$0xff]
        %v1819 = vld [vmem:[#allocation7 + $0xc8] sm:$0xff]
        %v1820 = vld [vmem:[#allocation7 + $0xd0] sm:$0xff]
        %v1821 = vld [vmem:[#allocation7 + $0xd8] sm:$0xff]
        %v1822 = vld [vmem:[#allocation7 + $0xe0] sm:$0xff]
        %v1823 = vld [vmem:[#allocation7 + $0xe8] sm:$0xff]
        %v1824 = vld [vmem:[#allocation7 + $0xf0] sm:$0xff]
        %v1825 = vld [vmem:[#allocation7 + $0xf8] sm:$0xff]
        %v1826 = vld [vmem:[#allocation7 + $0x100] sm:$0xff]
        %v1827 = vld [vmem:[#allocation7 + $0x108] sm:$0xff]
        %v1828 = vld [vmem:[#allocation7 + $0x110] sm:$0xff]
        %v1829 = vld [vmem:[#allocation7 + $0x118] sm:$0xff]
        %v1830 = vld [vmem:[#allocation7 + $0x120] sm:$0xff]
        %v1831 = vld [vmem:[#allocation7 + $0x128] sm:$0xff]
        %v1832 = vld [vmem:[#allocation7 + $0x130] sm:$0xff]
        %v1833 = vld [vmem:[#allocation7 + $0x138] sm:$0xff]
        %v1834 = vld [vmem:[#allocation7 + $0x140] sm:$0xff]
        %v1835 = vld [vmem:[#allocation7 + $0x148] sm:$0xff]
        %v1836 = vld [vmem:[#allocation7 + $0x150] sm:$0xff]
        %v1837 = vld [vmem:[#allocation7 + $0x158] sm:$0xff]
        %v1838 = vld [vmem:[#allocation7 + $0x160] sm:$0xff]
        %v1839 = vld [vmem:[#allocation7 + $0x168] sm:$0xff]
        %v1840 = vld [vmem:[#allocation7 + $0x170] sm:$0xff]
        %v1841 = vld [vmem:[#allocation7 + $0x178] sm:$0xff]
        %v1842 = vld [vmem:[#allocation7 + $0x180] sm:$0xff]
        %v1843 = vld [vmem:[#allocation7 + $0x188] sm:$0xff]
        %v1844 = vld [vmem:[#allocation7 + $0x190] sm:$0xff]
        %v1845 = vld [vmem:[#allocation7 + $0x198] sm:$0xff]
        %v1846 = vld [vmem:[#allocation7 + $0x1a0] sm:$0xff]
        %v1847 = vld [vmem:[#allocation7 + $0x1a8] sm:$0xff]
        %v1848 = vld [vmem:[#allocation7 + $0x1b0] sm:$0xff]
        %v1849 = vld [vmem:[#allocation7 + $0x1b8] sm:$0xff]
        %v1850 = vld [vmem:[#allocation7 + $0x1c0] sm:$0xff]
        %v1851 = vld [vmem:[#allocation7 + $0x1c8] sm:$0xff]
        %v1852 = vld [vmem:[#allocation7 + $0x1d0] sm:$0xff]
        %v1853 = vld [vmem:[#allocation7 + $0x1d8] sm:$0xff]
        %v1854 = vld [vmem:[#allocation7 + $0x1e0] sm:$0xff]
        %v1855 = vld [vmem:[#allocation7 + $0x1e8] sm:$0xff]
        %v1856 = vld [vmem:[#allocation7 + $0x1f0] sm:$0xff]
        %v1857 = vld [vmem:[#allocation7 + $0x1f8] sm:$0xff]
        %v1874 = vsel %vm810, %v1612, %v1594
        %v1875 = vsel %vm812, %v1630, %v1874
        %v1876 = vsel %vm814, %v1648, %v1875
        %v1877 = vsel %vm816, %v1666, %v1876
        %v1878 = vsel %vm818, %v1684, %v1877
        %v1879 = vsel %vm820, %v1702, %v1878
        %v1880 = vsel %vm822, %v1720, %v1879
        %v1881 = vsel %vm810, %v1621, %v1603
        %v1882 = vsel %vm812, %v1639, %v1881
        %v1883 = vsel %vm814, %v1657, %v1882
        %v1884 = vsel %vm816, %v1675, %v1883
        %v1885 = vsel %vm818, %v1693, %v1884
        %v1886 = vsel %vm820, %v1711, %v1885
        %v1887 = vsel %vm822, %v1729, %v1886
        %1890 = vmatprep.subr.mxu0 %v1795
        %1891 = vmatpush1.msra.mxu0 %v1794
        %1892 = vmatprep.subr.mxu0 %v1797
        %1893 = vmatpush1.msra.mxu0 %v1796
        %1894 = vmatprep.subr.mxu0 %v1799
        %1895 = vmatpush1.msra.mxu0 %v1798
        %1896 = vmatprep.subr.mxu0 %v1801
        %1897 = vmatpush1.msra.mxu0 %v1800
        %1898 = vmatprep.subr.mxu0 %v1803
        %1899 = vmatpush1.msra.mxu0 %v1802
        %1900 = vmatprep.subr.mxu0 %v1805
        %1901 = vmatpush1.msra.mxu0 %v1804
        %1902 = vmatprep.subr.mxu0 %v1807
        %1903 = vmatpush1.msra.mxu0 %v1806
        %1904 = vmatprep.subr.mxu0 %v1809
        %1905 = vmatpush1.msra.mxu0 %v1808
        %1906 = vmatprep.subr.mxu0 %v1811
        %1907 = vmatpush1.msra.mxu0 %v1810
        %1908 = vmatprep.subr.mxu0 %v1813
        %1909 = vmatpush1.msra.mxu0 %v1812
        %1910 = vmatprep.subr.mxu0 %v1815
        %1911 = vmatpush1.msra.mxu0 %v1814
        %1912 = vmatprep.subr.mxu0 %v1817
        %1913 = vmatpush1.msra.mxu0 %v1816
        %1914 = vmatprep.subr.mxu0 %v1819
        %1915 = vmatpush1.msra.mxu0 %v1818
        %1916 = vmatprep.subr.mxu0 %v1821
        %1917 = vmatpush1.msra.mxu0 %v1820
        %1918 = vmatprep.subr.mxu0 %v1823
        %1919 = vmatpush1.msra.mxu0 %v1822
        %1920 = vmatprep.subr.mxu0 %v1825
        %1921 = vmatpush1.msra.mxu0 %v1824
        %1922 = vmatprep.subr.mxu0 %v1827
        %1923 = vmatpush1.msra.mxu0 %v1826
        %1924 = vmatprep.subr.mxu0 %v1829
        %1925 = vmatpush1.msra.mxu0 %v1828
        %1926 = vmatprep.subr.mxu0 %v1831
        %1927 = vmatpush1.msra.mxu0 %v1830
        %1928 = vmatprep.subr.mxu0 %v1833
        %1929 = vmatpush1.msra.mxu0 %v1832
        %1930 = vmatprep.subr.mxu0 %v1835
        %1931 = vmatpush1.msra.mxu0 %v1834
        %1932 = vmatprep.subr.mxu0 %v1837
        %1933 = vmatpush1.msra.mxu0 %v1836
        %1934 = vmatprep.subr.mxu0 %v1839
        %1935 = vmatpush1.msra.mxu0 %v1838
        %1936 = vmatprep.subr.mxu0 %v1841
        %1937 = vmatpush1.msra.mxu0 %v1840
        %1938 = vmatprep.subr.mxu0 %v1843
        %1939 = vmatpush1.msra.mxu0 %v1842
        %1940 = vmatprep.subr.mxu0 %v1845
        %1941 = vmatpush1.msra.mxu0 %v1844
        %1942 = vmatprep.subr.mxu0 %v1847
        %1943 = vmatpush1.msra.mxu0 %v1846
        %1944 = vmatprep.subr.mxu0 %v1849
        %1945 = vmatpush1.msra.mxu0 %v1848
        %1946 = vmatprep.subr.mxu0 %v1851
        %1947 = vmatpush1.msra.mxu0 %v1850
        %1948 = vmatprep.subr.mxu0 %v1853
        %1949 = vmatpush1.msra.mxu0 %v1852
        %1950 = vmatprep.subr.mxu0 %v1855
        %1951 = vmatpush1.msra.mxu0 %v1854
        %1952 = vmatprep.subr.mxu0 %v1857
        %1953 = vmatpush1.msra.mxu0 %v1856
        %1954 = vmatprep.mubr.f32.mxu0 %v1887
        %1955 = vmatmul.mubr.f32.gmra.mrb[0].mxu0 %v1880
        %v1956 = vpop.f32.mrb[0].mxu0
        %v1957 = vadd.f32 0.0, %v1956
        %v1958 = vpop.f32.mrb[0].mxu0
        %v1959 = vadd.f32 0.0, %v1958
        %1960 = vdwg.mxu0
        %v1977 = vsel %vm810, %v1572, %v1570
        %v1978 = vsel %vm812, %v1574, %v1977
        %v1979 = vsel %vm814, %v1576, %v1978
        %v1980 = vsel %vm816, %v1578, %v1979
        %v1981 = vsel %vm818, %v1580, %v1980
        %v1982 = vsel %vm820, %v1582, %v1981
        %v1983 = vsel %vm822, %v1584, %v1982
        %v1984 = vsel %vm810, %v1573, %v1571
        %v1985 = vsel %vm812, %v1575, %v1984
        %v1986 = vsel %vm814, %v1577, %v1985
        %v1987 = vsel %vm816, %v1579, %v1986
        %v1988 = vsel %vm818, %v1581, %v1987
        %v1989 = vsel %vm820, %v1583, %v1988
        %v1990 = vsel %vm822, %v1585, %v1989
        %1993 = vmatprep.subr.mxu0 %v1731
        %1994 = vmatpush1.msra.mxu0 %v1730
        %1995 = vmatprep.subr.mxu0 %v1733
        %1996 = vmatpush1.msra.mxu0 %v1732
        %1997 = vmatprep.subr.mxu0 %v1735
        %1998 = vmatpush1.msra.mxu0 %v1734
        %1999 = vmatprep.subr.mxu0 %v1737
        %2000 = vmatpush1.msra.mxu0 %v1736
        %2001 = vmatprep.subr.mxu0 %v1739
        %2002 = vmatpush1.msra.mxu0 %v1738
        %2003 = vmatprep.subr.mxu0 %v1741
        %2004 = vmatpush1.msra.mxu0 %v1740
        %2005 = vmatprep.subr.mxu0 %v1743
        %2006 = vmatpush1.msra.mxu0 %v1742
        %2007 = vmatprep.subr.mxu0 %v1745
        %2008 = vmatpush1.msra.mxu0 %v1744
        %2009 = vmatprep.subr.mxu0 %v1747
        %2010 = vmatpush1.msra.mxu0 %v1746
        %2011 = vmatprep.subr.mxu0 %v1749
        %2012 = vmatpush1.msra.mxu0 %v1748
        %2013 = vmatprep.subr.mxu0 %v1751
        %2014 = vmatpush1.msra.mxu0 %v1750
        %2015 = vmatprep.subr.mxu0 %v1753
        %2016 = vmatpush1.msra.mxu0 %v1752
        %2017 = vmatprep.subr.mxu0 %v1755
        %2018 = vmatpush1.msra.mxu0 %v1754
        %2019 = vmatprep.subr.mxu0 %v1757
        %2020 = vmatpush1.msra.mxu0 %v1756
        %2021 = vmatprep.subr.mxu0 %v1759
        %2022 = vmatpush1.msra.mxu0 %v1758
        %2023 = vmatprep.subr.mxu0 %v1761
        %2024 = vmatpush1.msra.mxu0 %v1760
        %2025 = vmatprep.subr.mxu0 %v1763
        %2026 = vmatpush1.msra.mxu0 %v1762
        %2027 = vmatprep.subr.mxu0 %v1765
        %2028 = vmatpush1.msra.mxu0 %v1764
        %2029 = vmatprep.subr.mxu0 %v1767
        %2030 = vmatpush1.msra.mxu0 %v1766
        %2031 = vmatprep.subr.mxu0 %v1769
        %2032 = vmatpush1.msra.mxu0 %v1768
        %2033 = vmatprep.subr.mxu0 %v1771
        %2034 = vmatpush1.msra.mxu0 %v1770
        %2035 = vmatprep.subr.mxu0 %v1773
        %2036 = vmatpush1.msra.mxu0 %v1772
        %2037 = vmatprep.subr.mxu0 %v1775
        %2038 = vmatpush1.msra.mxu0 %v1774
        %2039 = vmatprep.subr.mxu0 %v1777
        %2040 = vmatpush1.msra.mxu0 %v1776
        %2041 = vmatprep.subr.mxu0 %v1779
        %2042 = vmatpush1.msra.mxu0 %v1778
        %2043 = vmatprep.subr.mxu0 %v1781
        %2044 = vmatpush1.msra.mxu0 %v1780
        %2045 = vmatprep.subr.mxu0 %v1783
        %2046 = vmatpush1.msra.mxu0 %v1782
        %2047 = vmatprep.subr.mxu0 %v1785
        %2048 = vmatpush1.msra.mxu0 %v1784
        %2049 = vmatprep.subr.mxu0 %v1787
        %2050 = vmatpush1.msra.mxu0 %v1786
        %2051 = vmatprep.subr.mxu0 %v1789
        %2052 = vmatpush1.msra.mxu0 %v1788
        %2053 = vmatprep.subr.mxu0 %v1791
        %2054 = vmatpush1.msra.mxu0 %v1790
        %2055 = vmatprep.subr.mxu0 %v1793
        %2056 = vmatpush1.msra.mxu0 %v1792
        %2057 = vmatprep.mubr.f32.mxu0 %v1990
        %2058 = vmatmul.mubr.f32.gmra.mrb[0].mxu0 %v1983
        %v2059 = vpop.f32.mrb[0].mxu0
        %v2060 = vadd.f32 %v1957, %v2059
        %v2061 = vpop.f32.mrb[0].mxu0
        %v2062 = vadd.f32 %v1959, %v2061
        %2063 = vdwg.mxu0
        %v2064 = vxor.u32 %v2060, 2147483648
        %v2065 = vxor.u32 %v2062, 2147483648
        %v2066 = vmul.f32 %v2064, 1.442695
        %v2067 = vpow.pop %v2066
        %v2068 = vmul.f32 %v2065, 1.442695
        %v2069 = vpow.pop %v2068
        %v2070 = vadd.f32 %v2067, 1.0
        %v2071 = vadd.f32 %v2069, 1.0
        %v2072 = vrcp.pop %v2070
        %v2073 = vmul.f32 1.0, %v2072
        %v2074 = vrcp.pop %v2071
        %v2075 = vmul.f32 1.0, %v2074
        %v2078 = vcombine.low %v2073, %v2075
        %v2079 = vcombine.high %v2073, %v2075
        %v2081 = vunpack.c.l.s4 1966171168
        %v2082 = vunpack.c.0.s8 %v2081
        %v2083 = vlaneseq
        %v2084 = vshrl.u32 %v2083, 7
        %v2085 = vsub.s32 %v2082, %v2084
        %v2086 = vrot.slane %v2078, %v2085
        %v2088 = vunpack.c.l.s4 1966171168
        %v2089 = vunpack.c.0.s8 %v2088
        %v2090 = vlaneseq
        %v2091 = vshrl.u32 %v2090, 7
        %v2092 = vsub.s32 %v2089, %v2091
        %v2093 = vrot.slane %v2079, %v2092
        %v2094 = vcombine.high %v2086, %v2086
        %v2095 = vcombine.high %v2093, %v2093
        %v2097 = vunpack.c.l.s4 1966171168
        %v2098 = vunpack.c.0.s8 %v2097
        %v2099 = vlaneseq
        %v2100 = vshrl.u32 %v2099, 7
        %v2101 = vsub.s32 %v2098, %v2100
        %v2102 = vrot.slane %v2086, %v2101
        %v2104 = vunpack.c.l.s4 1966171168
        %v2105 = vunpack.c.0.s8 %v2104
        %v2106 = vlaneseq
        %v2107 = vshrl.u32 %v2106, 7
        %v2108 = vsub.s32 %v2105, %v2107
        %v2109 = vrot.slane %v2093, %v2108
        %v2111 = vunpack.c.l.s4 1966171168
        %v2112 = vunpack.c.0.s8 %v2111
        %v2113 = vlaneseq
        %v2114 = vshrl.u32 %v2113, 7
        %v2115 = vsub.s32 %v2112, %v2114
        %v2116 = vrot.slane %v2094, %v2115
        %v2118 = vunpack.c.l.s4 1966171168
        %v2119 = vunpack.c.0.s8 %v2118
        %v2120 = vlaneseq
        %v2121 = vshrl.u32 %v2120, 7
        %v2122 = vsub.s32 %v2119, %v2121
        %v2123 = vrot.slane %v2095, %v2122
        %v2124 = vcombine.high %v2102, %v2102
        %v2125 = vcombine.high %v2109, %v2109
        %v2126 = vcombine.high %v2116, %v2116
        %v2127 = vcombine.high %v2123, %v2123
        %v2128 = vlaneseq
        %v2129 = vshrl.u32 %v2128, 7
        %v2130 = vsub.s32 0, %v2129
        %v2131 = vrot.slane %v2102, %v2130
        %v2132 = vlaneseq
        %v2133 = vshrl.u32 %v2132, 7
        %v2134 = vsub.s32 1, %v2133
        %v2135 = vrot.slane %v2102, %v2134
        %v2136 = vlaneseq
        %v2137 = vshrl.u32 %v2136, 7
        %v2138 = vsub.s32 0, %v2137
        %v2139 = vrot.slane %v2116, %v2138
        %v2140 = vlaneseq
        %v2141 = vshrl.u32 %v2140, 7
        %v2142 = vsub.s32 1, %v2141
        %v2143 = vrot.slane %v2116, %v2142
        %v2144 = vlaneseq
        %v2145 = vshrl.u32 %v2144, 7
        %v2146 = vsub.s32 0, %v2145
        %v2147 = vrot.slane %v2124, %v2146
        %v2148 = vlaneseq
        %v2149 = vshrl.u32 %v2148, 7
        %v2150 = vsub.s32 1, %v2149
        %v2151 = vrot.slane %v2124, %v2150
        %v2152 = vlaneseq
        %v2153 = vshrl.u32 %v2152, 7
        %v2154 = vsub.s32 0, %v2153
        %v2155 = vrot.slane %v2126, %v2154
        %v2156 = vlaneseq
        %v2157 = vshrl.u32 %v2156, 7
        %v2158 = vsub.s32 1, %v2157
        %v2159 = vrot.slane %v2126, %v2158
        %v2160 = vlaneseq
        %v2161 = vshrl.u32 %v2160, 7
        %v2162 = vsub.s32 0, %v2161
        %v2163 = vrot.slane %v2109, %v2162
        %v2164 = vlaneseq
        %v2165 = vshrl.u32 %v2164, 7
        %v2166 = vsub.s32 1, %v2165
        %v2167 = vrot.slane %v2109, %v2166
        %v2168 = vlaneseq
        %v2169 = vshrl.u32 %v2168, 7
        %v2170 = vsub.s32 0, %v2169
        %v2171 = vrot.slane %v2123, %v2170
        %v2172 = vlaneseq
        %v2173 = vshrl.u32 %v2172, 7
        %v2174 = vsub.s32 1, %v2173
        %v2175 = vrot.slane %v2123, %v2174
        %v2176 = vlaneseq
        %v2177 = vshrl.u32 %v2176, 7
        %v2178 = vsub.s32 0, %v2177
        %v2179 = vrot.slane %v2125, %v2178
        %v2180 = vlaneseq
        %v2181 = vshrl.u32 %v2180, 7
        %v2182 = vsub.s32 1, %v2181
        %v2183 = vrot.slane %v2125, %v2182
        %v2184 = vlaneseq
        %v2185 = vshrl.u32 %v2184, 7
        %v2186 = vsub.s32 0, %v2185
        %v2187 = vrot.slane %v2127, %v2186
        %v2188 = vlaneseq
        %v2189 = vshrl.u32 %v2188, 7
        %v2190 = vsub.s32 1, %v2189
        %v2191 = vrot.slane %v2127, %v2190
        %v2208 = vmul.f32 %v1361, %v2131
        %v2209 = vmul.f32 %v1362, %v2135
        %v2210 = vmul.f32 %v1363, %v2131
        %v2211 = vmul.f32 %v1364, %v2135
        %v2212 = vmul.f32 %v1365, %v2131
        %v2213 = vmul.f32 %v1366, %v2135
        %v2214 = vmul.f32 %v1367, %v2131
        %v2215 = vmul.f32 %v1368, %v2135
        %v2216 = vmul.f32 %v1369, %v2139
        %v2217 = vmul.f32 %v1370, %v2143
        %v2218 = vmul.f32 %v1371, %v2139
        %v2219 = vmul.f32 %v1372, %v2143
        %v2220 = vmul.f32 %v1373, %v2139
        %v2221 = vmul.f32 %v1374, %v2143
        %v2222 = vmul.f32 %v1375, %v2139
        %v2223 = vmul.f32 %v1376, %v2143
        %v2224 = vmul.f32 %v1377, %v2147
        %v2225 = vmul.f32 %v1378, %v2151
        %v2226 = vmul.f32 %v1379, %v2147
        %v2227 = vmul.f32 %v1380, %v2151
        %v2228 = vmul.f32 %v1381, %v2147
        %v2229 = vmul.f32 %v1382, %v2151
        %v2230 = vmul.f32 %v1383, %v2147
        %v2231 = vmul.f32 %v1384, %v2151
        %v2232 = vmul.f32 %v1385, %v2155
        %v2233 = vmul.f32 %v1386, %v2159
        %v2234 = vmul.f32 %v1387, %v2155
        %v2235 = vmul.f32 %v1388, %v2159
        %v2236 = vmul.f32 %v1389, %v2155
        %v2237 = vmul.f32 %v1390, %v2159
        %v2238 = vmul.f32 %v1391, %v2155
        %v2239 = vmul.f32 %v1392, %v2159
        %v2240 = vmul.f32 %v1393, %v2163
        %v2241 = vmul.f32 %v1394, %v2167
        %v2242 = vmul.f32 %v1395, %v2163
        %v2243 = vmul.f32 %v1396, %v2167
        %v2244 = vmul.f32 %v1397, %v2163
        %v2245 = vmul.f32 %v1398, %v2167
        %v2246 = vmul.f32 %v1399, %v2163
        %v2247 = vmul.f32 %v1400, %v2167
        %v2248 = vmul.f32 %v1401, %v2171
        %v2249 = vmul.f32 %v1402, %v2175
        %v2250 = vmul.f32 %v1403, %v2171
        %v2251 = vmul.f32 %v1404, %v2175
        %v2252 = vmul.f32 %v1405, %v2171
        %v2253 = vmul.f32 %v1406, %v2175
        %v2254 = vmul.f32 %v1407, %v2171
        %v2255 = vmul.f32 %v1408, %v2175
        %v2256 = vmul.f32 %v1409, %v2179
        %v2257 = vmul.f32 %v1410, %v2183
        %v2258 = vmul.f32 %v1411, %v2179
        %v2259 = vmul.f32 %v1412, %v2183
        %v2260 = vmul.f32 %v1413, %v2179
        %v2261 = vmul.f32 %v1414, %v2183
        %v2262 = vmul.f32 %v1415, %v2179
        %v2263 = vmul.f32 %v1416, %v2183
        %v2264 = vmul.f32 %v1417, %v2187
        %v2265 = vmul.f32 %v1418, %v2191
        %v2266 = vmul.f32 %v1419, %v2187
        %v2267 = vmul.f32 %v1420, %v2191
        %v2268 = vmul.f32 %v1421, %v2187
        %v2269 = vmul.f32 %v1422, %v2191
        %v2270 = vmul.f32 %v1423, %v2187
        %v2271 = vmul.f32 %v1424, %v2191
        %2272 = vst [vmem:[%s326] sm:$0xff] %v2208
        %2273 = vst [vmem:[%s326 + $0x8] sm:$0xff] %v2209
        %2274 = vst [vmem:[%s326 + $0x10] sm:$0xff] %v2210
        %2275 = vst [vmem:[%s326 + $0x18] sm:$0xff] %v2211
        %2276 = vst [vmem:[%s326 + $0x20] sm:$0xff] %v2212
        %2277 = vst [vmem:[%s326 + $0x28] sm:$0xff] %v2213
        %2278 = vst [vmem:[%s326 + $0x30] sm:$0xff] %v2214
        %2279 = vst [vmem:[%s326 + $0x38] sm:$0xff] %v2215
        %2280 = vst [vmem:[%s326 + $0x40] sm:$0xff] %v2216
        %2281 = vst [vmem:[%s326 + $0x48] sm:$0xff] %v2217
        %2282 = vst [vmem:[%s326 + $0x50] sm:$0xff] %v2218
        %2283 = vst [vmem:[%s326 + $0x58] sm:$0xff] %v2219
        %2284 = vst [vmem:[%s326 + $0x60] sm:$0xff] %v2220
        %2285 = vst [vmem:[%s326 + $0x68] sm:$0xff] %v2221
        %2286 = vst [vmem:[%s326 + $0x70] sm:$0xff] %v2222
        %2287 = vst [vmem:[%s326 + $0x78] sm:$0xff] %v2223
        %2288 = vst [vmem:[%s326 + $0x80] sm:$0xff] %v2224
        %2289 = vst [vmem:[%s326 + $0x88] sm:$0xff] %v2225
        %2290 = vst [vmem:[%s326 + $0x90] sm:$0xff] %v2226
        %2291 = vst [vmem:[%s326 + $0x98] sm:$0xff] %v2227
        %2292 = vst [vmem:[%s326 + $0xa0] sm:$0xff] %v2228
        %2293 = vst [vmem:[%s326 + $0xa8] sm:$0xff] %v2229
        %2294 = vst [vmem:[%s326 + $0xb0] sm:$0xff] %v2230
        %2295 = vst [vmem:[%s326 + $0xb8] sm:$0xff] %v2231
        %2296 = vst [vmem:[%s326 + $0xc0] sm:$0xff] %v2232
        %2297 = vst [vmem:[%s326 + $0xc8] sm:$0xff] %v2233
        %2298 = vst [vmem:[%s326 + $0xd0] sm:$0xff] %v2234
        %2299 = vst [vmem:[%s326 + $0xd8] sm:$0xff] %v2235
        %2300 = vst [vmem:[%s326 + $0xe0] sm:$0xff] %v2236
        %2301 = vst [vmem:[%s326 + $0xe8] sm:$0xff] %v2237
        %2302 = vst [vmem:[%s326 + $0xf0] sm:$0xff] %v2238
        %2303 = vst [vmem:[%s326 + $0xf8] sm:$0xff] %v2239
        %2304 = vst [vmem:[%s326 + $0x100] sm:$0xff] %v2240
        %2305 = vst [vmem:[%s326 + $0x108] sm:$0xff] %v2241
        %2306 = vst [vmem:[%s326 + $0x110] sm:$0xff] %v2242
        %2307 = vst [vmem:[%s326 + $0x118] sm:$0xff] %v2243
        %2308 = vst [vmem:[%s326 + $0x120] sm:$0xff] %v2244
        %2309 = vst [vmem:[%s326 + $0x128] sm:$0xff] %v2245
        %2310 = vst [vmem:[%s326 + $0x130] sm:$0xff] %v2246
        %2311 = vst [vmem:[%s326 + $0x138] sm:$0xff] %v2247
        %2312 = vst [vmem:[%s326 + $0x140] sm:$0xff] %v2248
        %2313 = vst [vmem:[%s326 + $0x148] sm:$0xff] %v2249
        %2314 = vst [vmem:[%s326 + $0x150] sm:$0xff] %v2250
        %2315 = vst [vmem:[%s326 + $0x158] sm:$0xff] %v2251
        %2316 = vst [vmem:[%s326 + $0x160] sm:$0xff] %v2252
        %2317 = vst [vmem:[%s326 + $0x168] sm:$0xff] %v2253
        %2318 = vst [vmem:[%s326 + $0x170] sm:$0xff] %v2254
        %2319 = vst [vmem:[%s326 + $0x178] sm:$0xff] %v2255
        %2320 = vst [vmem:[%s326 + $0x180] sm:$0xff] %v2256
        %2321 = vst [vmem:[%s326 + $0x188] sm:$0xff] %v2257
        %2322 = vst [vmem:[%s326 + $0x190] sm:$0xff] %v2258
        %2323 = vst [vmem:[%s326 + $0x198] sm:$0xff] %v2259
        %2324 = vst [vmem:[%s326 + $0x1a0] sm:$0xff] %v2260
        %2325 = vst [vmem:[%s326 + $0x1a8] sm:$0xff] %v2261
        %2326 = vst [vmem:[%s326 + $0x1b0] sm:$0xff] %v2262
        %2327 = vst [vmem:[%s326 + $0x1b8] sm:$0xff] %v2263
        %2328 = vst [vmem:[%s326 + $0x1c0] sm:$0xff] %v2264
        %2329 = vst [vmem:[%s326 + $0x1c8] sm:$0xff] %v2265
        %2330 = vst [vmem:[%s326 + $0x1d0] sm:$0xff] %v2266
        %2331 = vst [vmem:[%s326 + $0x1d8] sm:$0xff] %v2267
        %2332 = vst [vmem:[%s326 + $0x1e0] sm:$0xff] %v2268
        %2333 = vst [vmem:[%s326 + $0x1e8] sm:$0xff] %v2269
        %2334 = vst [vmem:[%s326 + $0x1f0] sm:$0xff] %v2270
        %2335 = vst [vmem:[%s326 + $0x1f8] sm:$0xff] %v2271
        %s2336 = sand.u32 %s185, 1
        %s2337 = scalar_lea.sflag [#allocation4], %s2336
        %s2338 = sand.u32 %s185, 1
        %s2339 = smul.addr %s2338, 512
        %s2340 = scalar_lea.vmem [#allocation8], %s2339
        // Predicated region
        $region61: #{tpu_custom_call.1} parent=47 // pred_check
          %p2341 = pneg %p195
        $region62: #{tpu_custom_call.1} parent=47 // pred_check_branch
          %2343 = sbr.rel (%p2341) target = $region64
        $region63: #{tpu_custom_call.1} parent=47 // pred_region
          %s2344 = smul.u32 8, %s25
          %s2346 = ssub.s32 8192, 8192
          %2347 = vsyncadd %s2337, %s2346
          %s2348 = smul.addr %s2344, 8
          %s2349 = smul.addr %s2348, 128
          %s2350 = scalar_lea.hbm %s7, %s2349
          %s2351 = sshll.u32 %s2340, 4
          %s2352 = int_to_ptr.vmem [resolvable:$true] %s2351
          %2357 = dma.vmem_to_hbm [thread:$0]  %s2352, 8192, %s2350, %s2337, 256, 256, 16
        $region64: #{tpu_custom_call.1} parent=47 // pred_fallthru
          _
      $region48: #{tpu_custom_call.1} parent=5 // pred_fallthru
        _
      %p2358 = scmp.le.s32.totalorder 2, %s20
      // Predicated region
      $region65: #{tpu_custom_call.1} parent=5 // pred_check
        %p2359 = pneg %p2358
      $region66: #{tpu_custom_call.1} parent=5 // pred_check_branch
        %2361 = sbr.rel (%p2359) target = $region68
      $region67: #{tpu_custom_call.1} parent=5 // pred_region
        %s2362 = ssub.s32 %s20, 2
        // Predicated region
        $region69: #{tpu_custom_call.1} parent=67 // pred_check
          %p2363 = pneg %p201
        $region70: #{tpu_custom_call.1} parent=67 // pred_check_branch
          %2365 = sbr.rel (%p2363) target = $region72
        $region71: #{tpu_custom_call.1} parent=67 // pred_region
          %s2366 = sand.u32 %s186, 1
          %s2367 = scalar_lea.sflag [#allocation4], %s2366
          %s2368 = sand.u32 %s186, 1
          %s2369 = smul.addr %s2368, 512
          %s2370 = scalar_lea.vmem [#allocation8], %s2369
          %2371 = dma.done %s2367, 8192
        $region72: #{tpu_custom_call.1} parent=67 // pred_fallthru
          _
      $region68: #{tpu_custom_call.1} parent=5 // pred_fallthru
        _
    $region6: #{tpu_custom_call.1} parent=1 // loop_footer
      %s24 = sadd.s32 1, %s20
    $region7: #{tpu_custom_call.1} parent=1 // loop_footer_branch
      %19 = sbr.rel target = $region3
    $region8: #{tpu_custom_call.1} parent=1 // loop_exit
      _
    %2372 = vsyncpa [#allocation3], 1
    %s2373 = scalar_lea.sflag [#allocation3], 1
    %2374 = vsyncpa %s2373, 1
    %2375 = vsyncpa [#allocation6], 1
    %2376 = vsyncpa [#allocation4], 1
    %s2377 = scalar_lea.sflag [#allocation4], 1
    %2378 = vsyncpa %s2377, 1

// kernel: tpu_custom_call.1
$region0: #{tpu_custom_call.1}
  #allocation0 [shape = 'u32[]', space=smem, size = 0x4, offset = 0x4, fixed_abs, tag = 'smem constant byte address 0x4 - core index']
  #allocation1 [shape = 'u32[144,128]{1,0:T(1,128)}', space=vmem, size = 0x12000, scoped, tag = 'internal scratch']
  %s0 = inlined_call_operand.hbm [shape: f32[16,32,256], index: 0, kind: input, shape index: {}]
  %s1 = inlined_call_operand.vmem [shape: f32[32,2], index: 1, kind: input, shape index: {}]
  %s2 = inlined_call_operand.vmem [shape: f32[1,2], index: 2, kind: input, shape index: {}]
  %s3 = inlined_call_operand.vmem [shape: f32[2,32], index: 3, kind: input, shape index: {}]
  %s4 = inlined_call_operand.vmem [shape: f32[1,32], index: 4, kind: input, shape index: {}]
  %s5 = inlined_call_operand.hbm [shape: f32[256,256], index: 5, kind: input, shape index: {}]
  %s6 = inlined_call_operand.hbm [shape: f32[256,256], index: 6, kind: input, shape index: {}]
  %s7 = inlined_call_operand.hbm [shape: f32[16,32,256], index: 7, kind: output, shape index: {}]
  %s8 = sld [smem:[#allocation0]]
  $region73: #{tpu_custom_call.1} parent=0
    _
  %s10 = ssub.s32 1, %s8
  %s11 = scalar_select 0, %s10, %s8
  $region1: #{tpu_custom_call.1} parent=0
    #allocation2 [shape = 'u8[524288]{0}', space=vmem, size = 0x80000, scoped, tag = 'input window, operand 0']
    #allocation3 [shape = 's32[2]{0}', space=sflag, size = 0x8, scoped, tag = 'scoped memory for tpu_custom_call.1']
    #allocation4 [shape = 's32[2]{0}', space=sflag, size = 0x8, scoped, tag = 'scoped memory for tpu_custom_call.1']
    #allocation5 [shape = 'u8[262144]{0}', space=vmem, size = 0x40000, scoped, tag = 'input window, operand 5, single buffered']
    #allocation6 [shape = 's32[1]{0}', space=sflag, size = 0x4, scoped, tag = 'scoped memory for tpu_custom_call.1']
    #allocation7 [shape = 'u8[262144]{0}', space=vmem, size = 0x40000, scoped, tag = 'input window, operand 6, single buffered']
    #allocation8 [shape = 'u8[524288]{0}', space=vmem, size = 0x80000, scoped, tag = 'output window, operand 0']
    %12 = vsyncpa [#allocation3], 0
    %s13 = scalar_lea.sflag [#allocation3], 1
    %14 = vsyncpa %s13, 0
    %15 = vsyncpa [#allocation6], 0
    %16 = vsyncpa [#allocation4], 0
    %s17 = scalar_lea.sflag [#allocation4], 1
    %18 = vsyncpa %s17, 0
    loop: start=0, step=1, limit=4
    $region2: #{tpu_custom_call.1} parent=1 // loop_pre_header
      _
    $region3: #{tpu_custom_call.1} parent=1 // loop_header
      %s20 = sphi 0, %s24
      %p21 = scmp.ge.s32.totalorder %s20, 4
      %s30 = sphi 0, %s32
      %s33 = sphi 0, %s30
      %s34 = sphi 0, %s33
      %s50 = sphi 0, %s34
      %s54 = sphi 0, %s54
      %s56 = sphi 0, %s54
      %s57 = sphi 0, %s56
      %s71 = sphi 0, %s57
      %s75 = sphi 0, %s75
      %s77 = sphi 0, %s75
      %s78 = sphi 0, %s77
      %s92 = sphi 0, %s78
      %s96 = sphi 0, %s96
      %s98 = sphi 0, %s96
      %s99 = sphi 0, %s98
      %s113 = sphi 0, %s99
      %s117 = sphi 0, %s117
      %s119 = sphi 0, %s117
      %s120 = sphi 0, %s119
      %s134 = sphi 0, %s120
      %s138 = sphi 0, %s138
      %s140 = sphi 0, %s138
      %s141 = sphi 0, %s140
      %s155 = sphi 0, %s141
      %s159 = sphi 0, %s159
      %s161 = sphi 0, %s159
      %s162 = sphi 0, %s161
      %s176 = sphi 0, %s162
      %s182 = sphi 0, %s184
      %s185 = sphi 0, %s182
      %s186 = sphi 0, %s185
      %s202 = sphi 0, %s186
    $region4: #{tpu_custom_call.1} parent=1 // loop_header_branch
      %23 = sbr.rel (%p21) target = $region8
    $region5: #{tpu_custom_call.1} parent=1 // loop_body
      %s25 = ssub.s32 %s20, 1
      %s26 = ssub.s32 %s20, 2
      %s27 = sadd.s32 %s20, 1
      %s28 = ssub.s32 %s20, %s27
      %p29 = scmp.eq.s32.totalorder %s28, 0
      %s31 = sadd.s32 %s30, 1
      %s32 = scalar_select %p29, %s30, %s31
      %p35 = pneg %p29
      %p36 = scmp.eq.s32.totalorder %s20, 1
      %p37 = por %p35, %p36
      %p38 = scmp.ne.s32.totalorder %s30, %s33
      %p39 = scmp.eq.s32.totalorder %s20, 0
      %p40 = por %p38, %p39
      %p41 = scmp.ne.s32.totalorder %s30, %s33
      %p42 = scmp.eq.s32.totalorder %s25, 1
      %p43 = por %p41, %p42
      %p44 = scmp.ne.s32.totalorder %s33, %s34
      %p45 = scmp.eq.s32.totalorder %s25, 0
      %p46 = por %p44, %p45
      %p47 = scmp.ne.s32.totalorder %s33, %s34
      %p48 = scmp.eq.s32.totalorder %s26, 1
      %p49 = por %p47, %p48
      %p51 = scmp.ne.s32.totalorder %s34, %s50
      %p52 = scmp.eq.s32.totalorder %s26, 0
      %p53 = por %p51, %p52
      %s55 = sadd.s32 %s54, 1
      %p58 = scmp.eq.s32.totalorder %s20, 1
      %p59 = scmp.ne.s32.totalorder %s54, %s56
      %p60 = scmp.eq.s32.totalorder %s20, 0
      %p61 = por %p59, %p60
      %p62 = scmp.ne.s32.totalorder %s54, %s56
      %p63 = scmp.eq.s32.totalorder %s25, 1
      %p64 = por %p62, %p63
      %p65 = scmp.ne.s32.totalorder %s56, %s57
      %p66 = scmp.eq.s32.totalorder %s25, 0
      %p67 = por %p65, %p66
      %p68 = scmp.ne.s32.totalorder %s56, %s57
      %p69 = scmp.eq.s32.totalorder %s26, 1
      %p70 = por %p68, %p69
      %p72 = scmp.ne.s32.totalorder %s57, %s71
      %p73 = scmp.eq.s32.totalorder %s26, 0
      %p74 = por %p72, %p73
      %s76 = sadd.s32 %s75, 1
      %p79 = scmp.eq.s32.totalorder %s20, 1
      %p80 = scmp.ne.s32.totalorder %s75, %s77
      %p81 = scmp.eq.s32.totalorder %s20, 0
      %p82 = por %p80, %p81
      %p83 = scmp.ne.s32.totalorder %s75, %s77
      %p84 = scmp.eq.s32.totalorder %s25, 1
      %p85 = por %p83, %p84
      %p86 = scmp.ne.s32.totalorder %s77, %s78
      %p87 = scmp.eq.s32.totalorder %s25, 0
      %p88 = por %p86, %p87
      %p89 = scmp.ne.s32.totalorder %s77, %s78
      %p90 = scmp.eq.s32.totalorder %s26, 1
      %p91 = por %p89, %p90
      %p93 = scmp.ne.s32.totalorder %s78, %s92
      %p94 = scmp.eq.s32.totalorder %s26, 0
      %p95 = por %p93, %p94
      %s97 = sadd.s32 %s96, 1
      %p100 = scmp.eq.s32.totalorder %s20, 1
      %p101 = scmp.ne.s32.totalorder %s96, %s98
      %p102 = scmp.eq.s32.totalorder %s20, 0
      %p103 = por %p101, %p102
      %p104 = scmp.ne.s32.totalorder %s96, %s98
      %p105 = scmp.eq.s32.totalorder %s25, 1
      %p106 = por %p104, %p105
      %p107 = scmp.ne.s32.totalorder %s98, %s99
      %p108 = scmp.eq.s32.totalorder %s25, 0
      %p109 = por %p107, %p108
      %p110 = scmp.ne.s32.totalorder %s98, %s99
      %p111 = scmp.eq.s32.totalorder %s26, 1
      %p112 = por %p110, %p111
      %p114 = scmp.ne.s32.totalorder %s99, %s113
      %p115 = scmp.eq.s32.totalorder %s26, 0
      %p116 = por %p114, %p115
      %s118 = sadd.s32 %s117, 1
      %p121 = scmp.eq.s32.totalorder %s20, 1
      %p122 = scmp.ne.s32.totalorder %s117, %s119
      %p123 = scmp.eq.s32.totalorder %s20, 0
      %p124 = por %p122, %p123
      %p125 = scmp.ne.s32.totalorder %s117, %s119
      %p126 = scmp.eq.s32.totalorder %s25, 1
      %p127 = por %p125, %p126
      %p128 = scmp.ne.s32.totalorder %s119, %s120
      %p129 = scmp.eq.s32.totalorder %s25, 0
      %p130 = por %p128, %p129
      %p131 = scmp.ne.s32.totalorder %s119, %s120
      %p132 = scmp.eq.s32.totalorder %s26, 1
      %p133 = por %p131, %p132
      %p135 = scmp.ne.s32.totalorder %s120, %s134
      %p136 = scmp.eq.s32.totalorder %s26, 0
      %p137 = por %p135, %p136
      %s139 = sadd.s32 %s138, 1
      %p142 = scmp.eq.s32.totalorder %s20, 1
      %p143 = scmp.ne.s32.totalorder %s138, %s140
      %p144 = scmp.eq.s32.totalorder %s20, 0
      %p145 = por %p143, %p144
      %p146 = scmp.ne.s32.totalorder %s138, %s140
      %p147 = scmp.eq.s32.totalorder %s25, 1
      %p148 = por %p146, %p147
      %p149 = scmp.ne.s32.totalorder %s140, %s141
      %p150 = scmp.eq.s32.totalorder %s25, 0
      %p151 = por %p149, %p150
      %p152 = scmp.ne.s32.totalorder %s140, %s141
      %p153 = scmp.eq.s32.totalorder %s26, 1
      %p154 = por %p152, %p153
      %p156 = scmp.ne.s32.totalorder %s141, %s155
      %p157 = scmp.eq.s32.totalorder %s26, 0
      %p158 = por %p156, %p157
      %s160 = sadd.s32 %s159, 1
      %p163 = scmp.eq.s32.totalorder %s20, 1
      %p164 = scmp.ne.s32.totalorder %s159, %s161
      %p165 = scmp.eq.s32.totalorder %s20, 0
      %p166 = por %p164, %p165
      %p167 = scmp.ne.s32.totalorder %s159, %s161
      %p168 = scmp.eq.s32.totalorder %s25, 1
      %p169 = por %p167, %p168
      %p170 = scmp.ne.s32.totalorder %s161, %s162
      %p171 = scmp.eq.s32.totalorder %s25, 0
      %p172 = por %p170, %p171
      %p173 = scmp.ne.s32.totalorder %s161, %s162
      %p174 = scmp.eq.s32.totalorder %s26, 1
      %p175 = por %p173, %p174
      %p177 = scmp.ne.s32.totalorder %s162, %s176
      %p178 = scmp.eq.s32.totalorder %s26, 0
      %p179 = por %p177, %p178
      %s180 = ssub.s32 %s20, %s27
      %p181 = scmp.eq.s32.totalorder %s180, 0
      %s183 = sadd.s32 %s182, 1
      %s184 = scalar_select %p181, %s182, %s183
      %p187 = pneg %p181
      %p188 = scmp.eq.s32.totalorder %s20, 1
      %p189 = por %p187, %p188
      %p190 = scmp.ne.s32.totalorder %s182, %s185
      %p191 = scmp.eq.s32.totalorder %s20, 0
      %p192 = por %p190, %p191
      %p193 = scmp.ne.s32.totalorder %s182, %s185
      %p194 = scmp.eq.s32.totalorder %s25, 1
      %p195 = por %p193, %p194
      %p196 = scmp.ne.s32.totalorder %s185, %s186
      %p197 = scmp.eq.s32.totalorder %s25, 0
      %p198 = por %p196, %p197
      %p199 = scmp.ne.s32.totalorder %s185, %s186
      %p200 = scmp.eq.s32.totalorder %s26, 1
      %p201 = por %p199, %p200
      %p203 = scmp.ne.s32.totalorder %s186, %s202
      %p204 = scmp.eq.s32.totalorder %s26, 0
      %p205 = por %p203, %p204
      %p206 = scmp.le.s32.totalorder 1, %s20
      %p207 = scmp.lt.s32.totalorder %s20, 3
      %p208 = pnand %p206, %p207
      %p209 = pneg %p208
      // Predicated region
      $region9: #{tpu_custom_call.1} parent=5 // pred_check
        _
      $region10: #{tpu_custom_call.1} parent=5 // pred_check_branch
        %211 = sbr.rel (%p208) target = $region12
      $region11: #{tpu_custom_call.1} parent=5 // pred_region
        %s212 = ssub.s32 %s20, 1
        // Predicated region
        $region13: #{tpu_custom_call.1} parent=11 // pred_check
          %p213 = pneg %p67
        $region14: #{tpu_custom_call.1} parent=11 // pred_check_branch
          %215 = sbr.rel (%p213) target = $region16
        $region15: #{tpu_custom_call.1} parent=11 // pred_region
          _
        $region16: #{tpu_custom_call.1} parent=11 // pred_fallthru
          _
        // Predicated region
        $region17: #{tpu_custom_call.1} parent=11 // pred_check
          %p216 = pneg %p88
        $region18: #{tpu_custom_call.1} parent=11 // pred_check_branch
          %218 = sbr.rel (%p216) target = $region20
        $region19: #{tpu_custom_call.1} parent=11 // pred_region
          _
        $region20: #{tpu_custom_call.1} parent=11 // pred_fallthru
          _
        // Predicated region
        $region21: #{tpu_custom_call.1} parent=11 // pred_check
          %p219 = pneg %p109
        $region22: #{tpu_custom_call.1} parent=11 // pred_check_branch
          %221 = sbr.rel (%p219) target = $region24
        $region23: #{tpu_custom_call.1} parent=11 // pred_region
          _
        $region24: #{tpu_custom_call.1} parent=11 // pred_fallthru
          _
        // Predicated region
        $region25: #{tpu_custom_call.1} parent=11 // pred_check
          %p222 = pneg %p130
        $region26: #{tpu_custom_call.1} parent=11 // pred_check_branch
          %224 = sbr.rel (%p222) target = $region28
        $region27: #{tpu_custom_call.1} parent=11 // pred_region
          _
        $region28: #{tpu_custom_call.1} parent=11 // pred_fallthru
          _
        // Predicated region
        $region29: #{tpu_custom_call.1} parent=11 // pred_check
          %p225 = pneg %p151
        $region30: #{tpu_custom_call.1} parent=11 // pred_check_branch
          %227 = sbr.rel (%p225) target = $region32
        $region31: #{tpu_custom_call.1} parent=11 // pred_region
          %s229 = ssub.s32 8192, 8192
          %230 = vsyncadd [#allocation6], %s229
          %s231 = sshll.u32 [#allocation5], 4
          %s232 = int_to_ptr.vmem [resolvable:$true] %s231
          %237 = dma.hbm_to_vmem [thread:$0]  %s5, 8192, %s232, [#allocation6], 256, 256, 16
        $region32: #{tpu_custom_call.1} parent=11 // pred_fallthru
          _
        // Predicated region
        $region33: #{tpu_custom_call.1} parent=11 // pred_check
          %p238 = pneg %p172
        $region34: #{tpu_custom_call.1} parent=11 // pred_check_branch
          %240 = sbr.rel (%p238) target = $region36
        $region35: #{tpu_custom_call.1} parent=11 // pred_region
          %s242 = ssub.s32 8192, 8192
          %243 = vsyncadd [#allocation6], %s242
          %s244 = sshll.u32 [#allocation7], 4
          %s245 = int_to_ptr.vmem [resolvable:$true] %s244
          %250 = dma.hbm_to_vmem [thread:$0]  %s6, 8192, %s245, [#allocation6], 256, 256, 16
        $region36: #{tpu_custom_call.1} parent=11 // pred_fallthru
          _
      $region12: #{tpu_custom_call.1} parent=5 // pred_fallthru
        _
      %p251 = scmp.lt.s32.totalorder %s20, 2
      // Predicated region
      $region37: #{tpu_custom_call.1} parent=5 // pred_check
        %p252 = pneg %p251
      $region38: #{tpu_custom_call.1} parent=5 // pred_check_branch
        %254 = sbr.rel (%p252) target = $region40
      $region39: #{tpu_custom_call.1} parent=5 // pred_region
        // Predicated region
        $region41: #{tpu_custom_call.1} parent=39 // pred_check
          %p255 = pneg %p40
        $region42: #{tpu_custom_call.1} parent=39 // pred_check_branch
          %257 = sbr.rel (%p255) target = $region44
        $region43: #{tpu_custom_call.1} parent=39 // pred_region
          %s258 = sand.u32 %s30, 1
          %s259 = scalar_lea.sflag [#allocation3], %s258
          %s260 = sand.u32 %s30, 1
          %s261 = smul.addr %s260, 512
          %s262 = scalar_lea.vmem [#allocation2], %s261
          %s263 = smul.u32 8, %s20
          %s265 = ssub.s32 8192, 8192
          %266 = vsyncadd %s259, %s265
          %s267 = smul.addr %s263, 8
          %s268 = smul.addr %s267, 128
          %s269 = scalar_lea.hbm %s0, %s268
          %s270 = sshll.u32 %s262, 4
          %s271 = int_to_ptr.vmem [resolvable:$true] %s270
          %276 = dma.hbm_to_vmem [thread:$0]  %s269, 8192, %s271, %s259, 256, 256, 16
        $region44: #{tpu_custom_call.1} parent=39 // pred_fallthru
          _
      $region40: #{tpu_custom_call.1} parent=5 // pred_fallthru
        _
      %p277 = scmp.le.s32.totalorder 1, %s20
      %p278 = scmp.lt.s32.totalorder %s20, 3
      %p279 = pnand %p277, %p278
      %p280 = pneg %p279
      // Predicated region
      $region45: #{tpu_custom_call.1} parent=5 // pred_check
        _
      $region46: #{tpu_custom_call.1} parent=5 // pred_check_branch
        %282 = sbr.rel (%p279) target = $region48
      $region47: #{tpu_custom_call.1} parent=5 // pred_region
        %s283 = ssub.s32 %s20, 1
        %s284 = sand.u32 %s33, 1
        %s285 = scalar_lea.sflag [#allocation3], %s284
        %s286 = sand.u32 %s33, 1
        %s287 = smul.addr %s286, 512
        %s288 = scalar_lea.vmem [#allocation2], %s287
        // Predicated region
        $region49: #{tpu_custom_call.1} parent=47 // pred_check
          %p289 = pneg %p46
        $region50: #{tpu_custom_call.1} parent=47 // pred_check_branch
          %291 = sbr.rel (%p289) target = $region52
        $region51: #{tpu_custom_call.1} parent=47 // pred_region
          %292 = dma.done %s285, 8192
        $region52: #{tpu_custom_call.1} parent=47 // pred_fallthru
          _
        // Predicated region
        $region53: #{tpu_custom_call.1} parent=47 // pred_check
          %p293 = pneg %p151
        $region54: #{tpu_custom_call.1} parent=47 // pred_check_branch
          %295 = sbr.rel (%p293) target = $region56
        $region55: #{tpu_custom_call.1} parent=47 // pred_region
          %296 = dma.done [#allocation6], 8192
        $region56: #{tpu_custom_call.1} parent=47 // pred_fallthru
          _
        // Predicated region
        $region57: #{tpu_custom_call.1} parent=47 // pred_check
          %p297 = pneg %p172
        $region58: #{tpu_custom_call.1} parent=47 // pred_check_branch
          %299 = sbr.rel (%p297) target = $region60
        $region59: #{tpu_custom_call.1} parent=47 // pred_region
          %300 = dma.done [#allocation6], 8192
        $region60: #{tpu_custom_call.1} parent=47 // pred_fallthru
          _
        %s301 = sand.u32 %s33, 1
        %s302 = scalar_lea.sflag [#allocation3], %s301
        %s303 = sand.u32 %s33, 1
        %s304 = smul.addr %s303, 512
        %s305 = scalar_lea.vmem [#allocation2], %s304
        %p306 = pneg %p46
        %p307 = pneg %p43
        %p308 = pneg %p67
        %p309 = pneg %p64
        %p310 = pneg %p88
        %p311 = pneg %p85
        %p312 = pneg %p109
        %p313 = pneg %p106
        %p314 = pneg %p130
        %p315 = pneg %p127
        %p316 = pneg %p151
        %p317 = pneg %p148
        %p318 = pneg %p172
        %p319 = pneg %p169
        %p320 = pneg %p198
        %p321 = pneg %p195
        %s322 = sand.u32 %s185, 1
        %s323 = scalar_lea.sflag [#allocation4], %s322
        %s324 = sand.u32 %s185, 1
        %s325 = smul.addr %s324, 512
        %s326 = scalar_lea.vmem [#allocation8], %s325
        %s327 = smul.u32 8, %s25
        %s328 = smul.u32 8, %s25
        %v329 = vld [vmem:[%s288] sm:$0xff]
        %v330 = vld [vmem:[%s288 + $0x8] sm:$0xff]
        %v331 = vld [vmem:[%s288 + $0x10] sm:$0xff]
        %v332 = vld [vmem:[%s288 + $0x18] sm:$0xff]
        %v333 = vld [vmem:[%s288 + $0x20] sm:$0xff]
        %v334 = vld [vmem:[%s288 + $0x28] sm:$0xff]
        %v335 = vld [vmem:[%s288 + $0x30] sm:$0xff]
        %v336 = vld [vmem:[%s288 + $0x38] sm:$0xff]
        %v337 = vld [vmem:[%s288 + $0x40] sm:$0xff]
        %v338 = vld [vmem:[%s288 + $0x48] sm:$0xff]
        %v339 = vld [vmem:[%s288 + $0x50] sm:$0xff]
        %v340 = vld [vmem:[%s288 + $0x58] sm:$0xff]
        %v341 = vld [vmem:[%s288 + $0x60] sm:$0xff]
        %v342 = vld [vmem:[%s288 + $0x68] sm:$0xff]
        %v343 = vld [vmem:[%s288 + $0x70] sm:$0xff]
        %v344 = vld [vmem:[%s288 + $0x78] sm:$0xff]
        %v345 = vld [vmem:[%s288 + $0x80] sm:$0xff]
        %v346 = vld [vmem:[%s288 + $0x88] sm:$0xff]
        %v347 = vld [vmem:[%s288 + $0x90] sm:$0xff]
        %v348 = vld [vmem:[%s288 + $0x98] sm:$0xff]
        %v349 = vld [vmem:[%s288 + $0xa0] sm:$0xff]
        %v350 = vld [vmem:[%s288 + $0xa8] sm:$0xff]
        %v351 = vld [vmem:[%s288 + $0xb0] sm:$0xff]
        %v352 = vld [vmem:[%s288 + $0xb8] sm:$0xff]
        %v353 = vld [vmem:[%s288 + $0xc0] sm:$0xff]
        %v354 = vld [vmem:[%s288 + $0xc8] sm:$0xff]
        %v355 = vld [vmem:[%s288 + $0xd0] sm:$0xff]
        %v356 = vld [vmem:[%s288 + $0xd8] sm:$0xff]
        %v357 = vld [vmem:[%s288 + $0xe0] sm:$0xff]
        %v358 = vld [vmem:[%s288 + $0xe8] sm:$0xff]
        %v359 = vld [vmem:[%s288 + $0xf0] sm:$0xff]
        %v360 = vld [vmem:[%s288 + $0xf8] sm:$0xff]
        %v361 = vld [vmem:[%s288 + $0x100] sm:$0xff]
        %v362 = vld [vmem:[%s288 + $0x108] sm:$0xff]
        %v363 = vld [vmem:[%s288 + $0x110] sm:$0xff]
        %v364 = vld [vmem:[%s288 + $0x118] sm:$0xff]
        %v365 = vld [vmem:[%s288 + $0x120] sm:$0xff]
        %v366 = vld [vmem:[%s288 + $0x128] sm:$0xff]
        %v367 = vld [vmem:[%s288 + $0x130] sm:$0xff]
        %v368 = vld [vmem:[%s288 + $0x138] sm:$0xff]
        %v369 = vld [vmem:[%s288 + $0x140] sm:$0xff]
        %v370 = vld [vmem:[%s288 + $0x148] sm:$0xff]
        %v371 = vld [vmem:[%s288 + $0x150] sm:$0xff]
        %v372 = vld [vmem:[%s288 + $0x158] sm:$0xff]
        %v373 = vld [vmem:[%s288 + $0x160] sm:$0xff]
        %v374 = vld [vmem:[%s288 + $0x168] sm:$0xff]
        %v375 = vld [vmem:[%s288 + $0x170] sm:$0xff]
        %v376 = vld [vmem:[%s288 + $0x178] sm:$0xff]
        %v377 = vld [vmem:[%s288 + $0x180] sm:$0xff]
        %v378 = vld [vmem:[%s288 + $0x188] sm:$0xff]
        %v379 = vld [vmem:[%s288 + $0x190] sm:$0xff]
        %v380 = vld [vmem:[%s288 + $0x198] sm:$0xff]
        %v381 = vld [vmem:[%s288 + $0x1a0] sm:$0xff]
        %v382 = vld [vmem:[%s288 + $0x1a8] sm:$0xff]
        %v383 = vld [vmem:[%s288 + $0x1b0] sm:$0xff]
        %v384 = vld [vmem:[%s288 + $0x1b8] sm:$0xff]
        %v385 = vld [vmem:[%s288 + $0x1c0] sm:$0xff]
        %v386 = vld [vmem:[%s288 + $0x1c8] sm:$0xff]
        %v387 = vld [vmem:[%s288 + $0x1d0] sm:$0xff]
        %v388 = vld [vmem:[%s288 + $0x1d8] sm:$0xff]
        %v389 = vld [vmem:[%s288 + $0x1e0] sm:$0xff]
        %v390 = vld [vmem:[%s288 + $0x1e8] sm:$0xff]
        %v391 = vld [vmem:[%s288 + $0x1f0] sm:$0xff]
        %v392 = vld [vmem:[%s288 + $0x1f8] sm:$0xff]
        %v393 = vadd.f32 %v329, %v330
        %394 = vadd.xlane.f32.xlu0 %v393
        %v395 = vpop.xlane.xlu0 %394
        %v396 = vadd.f32 %v331, %v332
        %397 = vadd.xlane.f32.xlu0 %v396
        %v398 = vpop.xlane.xlu0 %397
        %v399 = vadd.f32 %v333, %v334
        %400 = vadd.xlane.f32.xlu0 %v399
        %v401 = vpop.xlane.xlu0 %400
        %v402 = vadd.f32 %v335, %v336
        %403 = vadd.xlane.f32.xlu0 %v402
        %v404 = vpop.xlane.xlu0 %403
        %v405 = vadd.f32 %v337, %v338
        %406 = vadd.xlane.f32.xlu0 %v405
        %v407 = vpop.xlane.xlu0 %406
        %v408 = vadd.f32 %v339, %v340
        %409 = vadd.xlane.f32.xlu0 %v408
        %v410 = vpop.xlane.xlu0 %409
        %v411 = vadd.f32 %v341, %v342
        %412 = vadd.xlane.f32.xlu0 %v411
        %v413 = vpop.xlane.xlu0 %412
        %v414 = vadd.f32 %v343, %v344
        %415 = vadd.xlane.f32.xlu0 %v414
        %v416 = vpop.xlane.xlu0 %415
        %v417 = vadd.f32 %v345, %v346
        %418 = vadd.xlane.f32.xlu0 %v417
        %v419 = vpop.xlane.xlu0 %418
        %v420 = vadd.f32 %v347, %v348
        %421 = vadd.xlane.f32.xlu0 %v420
        %v422 = vpop.xlane.xlu0 %421
        %v423 = vadd.f32 %v349, %v350
        %424 = vadd.xlane.f32.xlu0 %v423
        %v425 = vpop.xlane.xlu0 %424
        %v426 = vadd.f32 %v351, %v352
        %427 = vadd.xlane.f32.xlu0 %v426
        %v428 = vpop.xlane.xlu0 %427
        %v429 = vadd.f32 %v353, %v354
        %430 = vadd.xlane.f32.xlu0 %v429
        %v431 = vpop.xlane.xlu0 %430
        %v432 = vadd.f32 %v355, %v356
        %433 = vadd.xlane.f32.xlu0 %v432
        %v434 = vpop.xlane.xlu0 %433
        %v435 = vadd.f32 %v357, %v358
        %436 = vadd.xlane.f32.xlu0 %v435
        %v437 = vpop.xlane.xlu0 %436
        %v438 = vadd.f32 %v359, %v360
        %439 = vadd.xlane.f32.xlu0 %v438
        %v440 = vpop.xlane.xlu0 %439
        %v441 = vadd.f32 %v361, %v362
        %442 = vadd.xlane.f32.xlu0 %v441
        %v443 = vpop.xlane.xlu0 %442
        %v444 = vadd.f32 %v363, %v364
        %445 = vadd.xlane.f32.xlu0 %v444
        %v446 = vpop.xlane.xlu0 %445
        %v447 = vadd.f32 %v365, %v366
        %448 = vadd.xlane.f32.xlu0 %v447
        %v449 = vpop.xlane.xlu0 %448
        %v450 = vadd.f32 %v367, %v368
        %451 = vadd.xlane.f32.xlu0 %v450
        %v452 = vpop.xlane.xlu0 %451
        %v453 = vadd.f32 %v369, %v370
        %454 = vadd.xlane.f32.xlu0 %v453
        %v455 = vpop.xlane.xlu0 %454
        %v456 = vadd.f32 %v371, %v372
        %457 = vadd.xlane.f32.xlu0 %v456
        %v458 = vpop.xlane.xlu0 %457
        %v459 = vadd.f32 %v373, %v374
        %460 = vadd.xlane.f32.xlu0 %v459
        %v461 = vpop.xlane.xlu0 %460
        %v462 = vadd.f32 %v375, %v376
        %463 = vadd.xlane.f32.xlu0 %v462
        %v464 = vpop.xlane.xlu0 %463
        %v465 = vadd.f32 %v377, %v378
        %466 = vadd.xlane.f32.xlu0 %v465
        %v467 = vpop.xlane.xlu0 %466
        %v468 = vadd.f32 %v379, %v380
        %469 = vadd.xlane.f32.xlu0 %v468
        %v470 = vpop.xlane.xlu0 %469
        %v471 = vadd.f32 %v381, %v382
        %472 = vadd.xlane.f32.xlu0 %v471
        %v473 = vpop.xlane.xlu0 %472
        %v474 = vadd.f32 %v383, %v384
        %475 = vadd.xlane.f32.xlu0 %v474
        %v476 = vpop.xlane.xlu0 %475
        %v477 = vadd.f32 %v385, %v386
        %478 = vadd.xlane.f32.xlu0 %v477
        %v479 = vpop.xlane.xlu0 %478
        %v480 = vadd.f32 %v387, %v388
        %481 = vadd.xlane.f32.xlu0 %v480
        %v482 = vpop.xlane.xlu0 %481
        %v483 = vadd.f32 %v389, %v390
        %484 = vadd.xlane.f32.xlu0 %v483
        %v485 = vpop.xlane.xlu0 %484
        %v486 = vadd.f32 %v391, %v392
        %487 = vadd.xlane.f32.xlu0 %v486
        %v488 = vpop.xlane.xlu0 %487
        %v489 = vrcp.pop 256.0
        %v490 = vmul.f32 %v395, %v489
        %v491 = vmul.f32 %v398, %v489
        %v492 = vmul.f32 %v401, %v489
        %v493 = vmul.f32 %v404, %v489
        %v494 = vmul.f32 %v407, %v489
        %v495 = vmul.f32 %v410, %v489
        %v496 = vmul.f32 %v413, %v489
        %v497 = vmul.f32 %v416, %v489
        %v498 = vmul.f32 %v419, %v489
        %v499 = vmul.f32 %v422, %v489
        %v500 = vmul.f32 %v425, %v489
        %v501 = vmul.f32 %v428, %v489
        %v502 = vmul.f32 %v431, %v489
        %v503 = vmul.f32 %v434, %v489
        %v504 = vmul.f32 %v437, %v489
        %v505 = vmul.f32 %v440, %v489
        %v506 = vmul.f32 %v443, %v489
        %v507 = vmul.f32 %v446, %v489
        %v508 = vmul.f32 %v449, %v489
        %v509 = vmul.f32 %v452, %v489
        %v510 = vmul.f32 %v455, %v489
        %v511 = vmul.f32 %v458, %v489
        %v512 = vmul.f32 %v461, %v489
        %v513 = vmul.f32 %v464, %v489
        %v514 = vmul.f32 %v467, %v489
        %v515 = vmul.f32 %v470, %v489
        %v516 = vmul.f32 %v473, %v489
        %v517 = vmul.f32 %v476, %v489
        %v518 = vmul.f32 %v479, %v489
        %v519 = vmul.f32 %v482, %v489
        %v520 = vmul.f32 %v485, %v489
        %v521 = vmul.f32 %v488, %v489
        %v522 = vmax.f32 %v329, %v330
        %523 = vmax.xlane.f32.xlu0 %v522
        %v524 = vpop.xlane.xlu0 %523
        %v525 = vmax.f32 %v331, %v332
        %526 = vmax.xlane.f32.xlu0 %v525
        %v527 = vpop.xlane.xlu0 %526
        %v528 = vmax.f32 %v333, %v334
        %529 = vmax.xlane.f32.xlu0 %v528
        %v530 = vpop.xlane.xlu0 %529
        %v531 = vmax.f32 %v335, %v336
        %532 = vmax.xlane.f32.xlu0 %v531
        %v533 = vpop.xlane.xlu0 %532
        %v534 = vmax.f32 %v337, %v338
        %535 = vmax.xlane.f32.xlu0 %v534
        %v536 = vpop.xlane.xlu0 %535
        %v537 = vmax.f32 %v339, %v340
        %538 = vmax.xlane.f32.xlu0 %v537
        %v539 = vpop.xlane.xlu0 %538
        %v540 = vmax.f32 %v341, %v342
        %541 = vmax.xlane.f32.xlu0 %v540
        %v542 = vpop.xlane.xlu0 %541
        %v543 = vmax.f32 %v343, %v344
        %544 = vmax.xlane.f32.xlu0 %v543
        %v545 = vpop.xlane.xlu0 %544
        %v546 = vmax.f32 %v345, %v346
        %547 = vmax.xlane.f32.xlu0 %v546
        %v548 = vpop.xlane.xlu0 %547
        %v549 = vmax.f32 %v347, %v348
        %550 = vmax.xlane.f32.xlu0 %v549
        %v551 = vpop.xlane.xlu0 %550
        %v552 = vmax.f32 %v349, %v350
        %553 = vmax.xlane.f32.xlu0 %v552
        %v554 = vpop.xlane.xlu0 %553
        %v555 = vmax.f32 %v351, %v352
        %556 = vmax.xlane.f32.xlu0 %v555
        %v557 = vpop.xlane.xlu0 %556
        %v558 = vmax.f32 %v353, %v354
        %559 = vmax.xlane.f32.xlu0 %v558
        %v560 = vpop.xlane.xlu0 %559
        %v561 = vmax.f32 %v355, %v356
        %562 = vmax.xlane.f32.xlu0 %v561
        %v563 = vpop.xlane.xlu0 %562
        %v564 = vmax.f32 %v357, %v358
        %565 = vmax.xlane.f32.xlu0 %v564
        %v566 = vpop.xlane.xlu0 %565
        %v567 = vmax.f32 %v359, %v360
        %568 = vmax.xlane.f32.xlu0 %v567
        %v569 = vpop.xlane.xlu0 %568
        %v570 = vmax.f32 %v361, %v362
        %571 = vmax.xlane.f32.xlu0 %v570
        %v572 = vpop.xlane.xlu0 %571
        %v573 = vmax.f32 %v363, %v364
        %574 = vmax.xlane.f32.xlu0 %v573
        %v575 = vpop.xlane.xlu0 %574
        %v576 = vmax.f32 %v365, %v366
        %577 = vmax.xlane.f32.xlu0 %v576
        %v578 = vpop.xlane.xlu0 %577
        %v579 = vmax.f32 %v367, %v368
        %580 = vmax.xlane.f32.xlu0 %v579
        %v581 = vpop.xlane.xlu0 %580
        %v582 = vmax.f32 %v369, %v370
        %583 = vmax.xlane.f32.xlu0 %v582
        %v584 = vpop.xlane.xlu0 %583
        %v585 = vmax.f32 %v371, %v372
        %586 = vmax.xlane.f32.xlu0 %v585
        %v587 = vpop.xlane.xlu0 %586
        %v588 = vmax.f32 %v373, %v374
        %589 = vmax.xlane.f32.xlu0 %v588
        %v590 = vpop.xlane.xlu0 %589
        %v591 = vmax.f32 %v375, %v376
        %592 = vmax.xlane.f32.xlu0 %v591
        %v593 = vpop.xlane.xlu0 %592
        %v594 = vmax.f32 %v377, %v378
        %595 = vmax.xlane.f32.xlu0 %v594
        %v596 = vpop.xlane.xlu0 %595
        %v597 = vmax.f32 %v379, %v380
        %598 = vmax.xlane.f32.xlu0 %v597
        %v599 = vpop.xlane.xlu0 %598
        %v600 = vmax.f32 %v381, %v382
        %601 = vmax.xlane.f32.xlu0 %v600
        %v602 = vpop.xlane.xlu0 %601
        %v603 = vmax.f32 %v383, %v384
        %604 = vmax.xlane.f32.xlu0 %v603
        %v605 = vpop.xlane.xlu0 %604
        %v606 = vmax.f32 %v385, %v386
        %607 = vmax.xlane.f32.xlu0 %v606
        %v608 = vpop.xlane.xlu0 %607
        %v609 = vmax.f32 %v387, %v388
        %610 = vmax.xlane.f32.xlu0 %v609
        %v611 = vpop.xlane.xlu0 %610
        %v612 = vmax.f32 %v389, %v390
        %613 = vmax.xlane.f32.xlu0 %v612
        %v614 = vpop.xlane.xlu0 %613
        %v615 = vmax.f32 %v391, %v392
        %616 = vmax.xlane.f32.xlu0 %v615
        %v617 = vpop.xlane.xlu0 %616
        %v650 = vlaneseq
        %v651 = vand.u32 %v650, 127
        %v652 = vlaneseq
        %v653 = vshrl.u32 %v652, 7
        %v654 = vsub.s32 %v651, %v653
        %v655 = vrot.slane %v490, %v654
        %v656 = vadd.s32 %v651, 4294967288
        %v657 = vlaneseq
        %v658 = vshrl.u32 %v657, 7
        %v659 = vsub.s32 %v656, %v658
        %v660 = vrot.slane %v491, %v659
        %vm661 = vcmask 130112
        %v662 = vsel %vm661, %v660, %v655
        %v663 = vadd.s32 %v651, 4294967280
        %v664 = vlaneseq
        %v665 = vshrl.u32 %v664, 7
        %v666 = vsub.s32 %v663, %v665
        %v667 = vrot.slane %v492, %v666
        %vm668 = vcmask 195712
        %v669 = vsel %vm668, %v667, %v662
        %v670 = vadd.s32 %v651, 4294967272
        %v671 = vlaneseq
        %v672 = vshrl.u32 %v671, 7
        %v673 = vsub.s32 %v670, %v672
        %v674 = vrot.slane %v493, %v673
        %vm675 = vcmask 261312
        %v676 = vsel %vm675, %v674, %v669
        %v677 = vlaneseq
        %v678 = vshrl.u32 %v677, 7
        %v679 = vsub.s32 %v651, %v678
        %v680 = vrot.slane %v494, %v679
        %v681 = vlaneseq
        %v682 = vshrl.u32 %v681, 7
        %v683 = vsub.s32 %v656, %v682
        %v684 = vrot.slane %v495, %v683
        %v685 = vsel %vm661, %v684, %v680
        %v686 = vlaneseq
        %v687 = vshrl.u32 %v686, 7
        %v688 = vsub.s32 %v663, %v687
        %v689 = vrot.slane %v496, %v688
        %v690 = vsel %vm668, %v689, %v685
        %v691 = vlaneseq
        %v692 = vshrl.u32 %v691, 7
        %v693 = vsub.s32 %v670, %v692
        %v694 = vrot.slane %v497, %v693
        %v695 = vsel %vm675, %v694, %v690
        %v696 = vlaneseq
        %v697 = vshrl.u32 %v696, 7
        %v698 = vsub.s32 %v651, %v697
        %v699 = vrot.slane %v498, %v698
        %v700 = vlaneseq
        %v701 = vshrl.u32 %v700, 7
        %v702 = vsub.s32 %v656, %v701
        %v703 = vrot.slane %v499, %v702
        %v704 = vsel %vm661, %v703, %v699
        %v705 = vlaneseq
        %v706 = vshrl.u32 %v705, 7
        %v707 = vsub.s32 %v663, %v706
        %v708 = vrot.slane %v500, %v707
        %v709 = vsel %vm668, %v708, %v704
        %v710 = vlaneseq
        %v711 = vshrl.u32 %v710, 7
        %v712 = vsub.s32 %v670, %v711
        %v713 = vrot.slane %v501, %v712
        %v714 = vsel %vm675, %v713, %v709
        %v715 = vlaneseq
        %v716 = vshrl.u32 %v715, 7
        %v717 = vsub.s32 %v651, %v716
        %v718 = vrot.slane %v502, %v717
        %v719 = vlaneseq
        %v720 = vshrl.u32 %v719, 7
        %v721 = vsub.s32 %v656, %v720
        %v722 = vrot.slane %v503, %v721
        %v723 = vsel %vm661, %v722, %v718
        %v724 = vlaneseq
        %v725 = vshrl.u32 %v724, 7
        %v726 = vsub.s32 %v663, %v725
        %v727 = vrot.slane %v504, %v726
        %v728 = vsel %vm668, %v727, %v723
        %v729 = vlaneseq
        %v730 = vshrl.u32 %v729, 7
        %v731 = vsub.s32 %v670, %v730
        %v732 = vrot.slane %v505, %v731
        %v733 = vsel %vm675, %v732, %v728
        %v734 = vlaneseq
        %v735 = vshrl.u32 %v734, 7
        %v736 = vsub.s32 %v651, %v735
        %v737 = vrot.slane %v506, %v736
        %v738 = vlaneseq
        %v739 = vshrl.u32 %v738, 7
        %v740 = vsub.s32 %v656, %v739
        %v741 = vrot.slane %v507, %v740
        %v742 = vsel %vm661, %v741, %v737
        %v743 = vlaneseq
        %v744 = vshrl.u32 %v743, 7
        %v745 = vsub.s32 %v663, %v744
        %v746 = vrot.slane %v508, %v745
        %v747 = vsel %vm668, %v746, %v742
        %v748 = vlaneseq
        %v749 = vshrl.u32 %v748, 7
        %v750 = vsub.s32 %v670, %v749
        %v751 = vrot.slane %v509, %v750
        %v752 = vsel %vm675, %v751, %v747
        %v753 = vlaneseq
        %v754 = vshrl.u32 %v753, 7
        %v755 = vsub.s32 %v651, %v754
        %v756 = vrot.slane %v510, %v755
        %v757 = vlaneseq
        %v758 = vshrl.u32 %v757, 7
        %v759 = vsub.s32 %v656, %v758
        %v760 = vrot.slane %v511, %v759
        %v761 = vsel %vm661, %v760, %v756
        %v762 = vlaneseq
        %v763 = vshrl.u32 %v762, 7
        %v764 = vsub.s32 %v663, %v763
        %v765 = vrot.slane %v512, %v764
        %v766 = vsel %vm668, %v765, %v761
        %v767 = vlaneseq
        %v768 = vshrl.u32 %v767, 7
        %v769 = vsub.s32 %v670, %v768
        %v770 = vrot.slane %v513, %v769
        %v771 = vsel %vm675, %v770, %v766
        %v772 = vlaneseq
        %v773 = vshrl.u32 %v772, 7
        %v774 = vsub.s32 %v651, %v773
        %v775 = vrot.slane %v514, %v774
        %v776 = vlaneseq
        %v777 = vshrl.u32 %v776, 7
        %v778 = vsub.s32 %v656, %v777
        %v779 = vrot.slane %v515, %v778
        %v780 = vsel %vm661, %v779, %v775
        %v781 = vlaneseq
        %v782 = vshrl.u32 %v781, 7
        %v783 = vsub.s32 %v663, %v782
        %v784 = vrot.slane %v516, %v783
        %v785 = vsel %vm668, %v784, %v780
        %v786 = vlaneseq
        %v787 = vshrl.u32 %v786, 7
        %v788 = vsub.s32 %v670, %v787
        %v789 = vrot.slane %v517, %v788
        %v790 = vsel %vm675, %v789, %v785
        %v791 = vlaneseq
        %v792 = vshrl.u32 %v791, 7
        %v793 = vsub.s32 %v651, %v792
        %v794 = vrot.slane %v518, %v793
        %v795 = vlaneseq
        %v796 = vshrl.u32 %v795, 7
        %v797 = vsub.s32 %v656, %v796
        %v798 = vrot.slane %v519, %v797
        %v799 = vsel %vm661, %v798, %v794
        %v800 = vlaneseq
        %v801 = vshrl.u32 %v800, 7
        %v802 = vsub.s32 %v663, %v801
        %v803 = vrot.slane %v520, %v802
        %v804 = vsel %vm668, %v803, %v799
        %v805 = vlaneseq
        %v806 = vshrl.u32 %v805, 7
        %v807 = vsub.s32 %v670, %v806
        %v808 = vrot.slane %v521, %v807
        %v809 = vsel %vm675, %v808, %v804
        %vm810 = vcmask 1041409
        %v811 = vsel %vm810, %v695, %v676
        %vm812 = vcmask 1042434
        %v813 = vsel %vm812, %v714, %v811
        %vm814 = vcmask 1043459
        %v815 = vsel %vm814, %v733, %v813
        %vm816 = vcmask 1044484
        %v817 = vsel %vm816, %v752, %v815
        %vm818 = vcmask 1045509
        %v819 = vsel %vm818, %v771, %v817
        %vm820 = vcmask 1046534
        %v821 = vsel %vm820, %v790, %v819
        %vm822 = vcmask 1047559
        %v823 = vsel %vm822, %v809, %v821
        %v856 = vlaneseq
        %v857 = vshrl.u32 %v856, 7
        %v858 = vsub.s32 %v651, %v857
        %v859 = vrot.slane %v524, %v858
        %v860 = vlaneseq
        %v861 = vshrl.u32 %v860, 7
        %v862 = vsub.s32 %v656, %v861
        %v863 = vrot.slane %v527, %v862
        %v864 = vsel %vm661, %v863, %v859
        %v865 = vlaneseq
        %v866 = vshrl.u32 %v865, 7
        %v867 = vsub.s32 %v663, %v866
        %v868 = vrot.slane %v530, %v867
        %v869 = vsel %vm668, %v868, %v864
        %v870 = vlaneseq
        %v871 = vshrl.u32 %v870, 7
        %v872 = vsub.s32 %v670, %v871
        %v873 = vrot.slane %v533, %v872
        %v874 = vsel %vm675, %v873, %v869
        %v875 = vlaneseq
        %v876 = vshrl.u32 %v875, 7
        %v877 = vsub.s32 %v651, %v876
        %v878 = vrot.slane %v536, %v877
        %v879 = vlaneseq
        %v880 = vshrl.u32 %v879, 7
        %v881 = vsub.s32 %v656, %v880
        %v882 = vrot.slane %v539, %v881
        %v883 = vsel %vm661, %v882, %v878
        %v884 = vlaneseq
        %v885 = vshrl.u32 %v884, 7
        %v886 = vsub.s32 %v663, %v885
        %v887 = vrot.slane %v542, %v886
        %v888 = vsel %vm668, %v887, %v883
        %v889 = vlaneseq
        %v890 = vshrl.u32 %v889, 7
        %v891 = vsub.s32 %v670, %v890
        %v892 = vrot.slane %v545, %v891
        %v893 = vsel %vm675, %v892, %v888
        %v894 = vlaneseq
        %v895 = vshrl.u32 %v894, 7
        %v896 = vsub.s32 %v651, %v895
        %v897 = vrot.slane %v548, %v896
        %v898 = vlaneseq
        %v899 = vshrl.u32 %v898, 7
        %v900 = vsub.s32 %v656, %v899
        %v901 = vrot.slane %v551, %v900
        %v902 = vsel %vm661, %v901, %v897
        %v903 = vlaneseq
        %v904 = vshrl.u32 %v903, 7
        %v905 = vsub.s32 %v663, %v904
        %v906 = vrot.slane %v554, %v905
        %v907 = vsel %vm668, %v906, %v902
        %v908 = vlaneseq
        %v909 = vshrl.u32 %v908, 7
        %v910 = vsub.s32 %v670, %v909
        %v911 = vrot.slane %v557, %v910
        %v912 = vsel %vm675, %v911, %v907
        %v913 = vlaneseq
        %v914 = vshrl.u32 %v913, 7
        %v915 = vsub.s32 %v651, %v914
        %v916 = vrot.slane %v560, %v915
        %v917 = vlaneseq
        %v918 = vshrl.u32 %v917, 7
        %v919 = vsub.s32 %v656, %v918
        %v920 = vrot.slane %v563, %v919
        %v921 = vsel %vm661, %v920, %v916
        %v922 = vlaneseq
        %v923 = vshrl.u32 %v922, 7
        %v924 = vsub.s32 %v663, %v923
        %v925 = vrot.slane %v566, %v924
        %v926 = vsel %vm668, %v925, %v921
        %v927 = vlaneseq
        %v928 = vshrl.u32 %v927, 7
        %v929 = vsub.s32 %v670, %v928
        %v930 = vrot.slane %v569, %v929
        %v931 = vsel %vm675, %v930, %v926
        %v932 = vlaneseq
        %v933 = vshrl.u32 %v932, 7
        %v934 = vsub.s32 %v651, %v933
        %v935 = vrot.slane %v572, %v934
        %v936 = vlaneseq
        %v937 = vshrl.u32 %v936, 7
        %v938 = vsub.s32 %v656, %v937
        %v939 = vrot.slane %v575, %v938
        %v940 = vsel %vm661, %v939, %v935
        %v941 = vlaneseq
        %v942 = vshrl.u32 %v941, 7
        %v943 = vsub.s32 %v663, %v942
        %v944 = vrot.slane %v578, %v943
        %v945 = vsel %vm668, %v944, %v940
        %v946 = vlaneseq
        %v947 = vshrl.u32 %v946, 7
        %v948 = vsub.s32 %v670, %v947
        %v949 = vrot.slane %v581, %v948
        %v950 = vsel %vm675, %v949, %v945
        %v951 = vlaneseq
        %v952 = vshrl.u32 %v951, 7
        %v953 = vsub.s32 %v651, %v952
        %v954 = vrot.slane %v584, %v953
        %v955 = vlaneseq
        %v956 = vshrl.u32 %v955, 7
        %v957 = vsub.s32 %v656, %v956
        %v958 = vrot.slane %v587, %v957
        %v959 = vsel %vm661, %v958, %v954
        %v960 = vlaneseq
        %v961 = vshrl.u32 %v960, 7
        %v962 = vsub.s32 %v663, %v961
        %v963 = vrot.slane %v590, %v962
        %v964 = vsel %vm668, %v963, %v959
        %v965 = vlaneseq
        %v966 = vshrl.u32 %v965, 7
        %v967 = vsub.s32 %v670, %v966
        %v968 = vrot.slane %v593, %v967
        %v969 = vsel %vm675, %v968, %v964
        %v970 = vlaneseq
        %v971 = vshrl.u32 %v970, 7
        %v972 = vsub.s32 %v651, %v971
        %v973 = vrot.slane %v596, %v972
        %v974 = vlaneseq
        %v975 = vshrl.u32 %v974, 7
        %v976 = vsub.s32 %v656, %v975
        %v977 = vrot.slane %v599, %v976
        %v978 = vsel %vm661, %v977, %v973
        %v979 = vlaneseq
        %v980 = vshrl.u32 %v979, 7
        %v981 = vsub.s32 %v663, %v980
        %v982 = vrot.slane %v602, %v981
        %v983 = vsel %vm668, %v982, %v978
        %v984 = vlaneseq
        %v985 = vshrl.u32 %v984, 7
        %v986 = vsub.s32 %v670, %v985
        %v987 = vrot.slane %v605, %v986
        %v988 = vsel %vm675, %v987, %v983
        %v989 = vlaneseq
        %v990 = vshrl.u32 %v989, 7
        %v991 = vsub.s32 %v651, %v990
        %v992 = vrot.slane %v608, %v991
        %v993 = vlaneseq
        %v994 = vshrl.u32 %v993, 7
        %v995 = vsub.s32 %v656, %v994
        %v996 = vrot.slane %v611, %v995
        %v997 = vsel %vm661, %v996, %v992
        %v998 = vlaneseq
        %v999 = vshrl.u32 %v998, 7
        %v1000 = vsub.s32 %v663, %v999
        %v1001 = vrot.slane %v614, %v1000
        %v1002 = vsel %vm668, %v1001, %v997
        %v1003 = vlaneseq
        %v1004 = vshrl.u32 %v1003, 7
        %v1005 = vsub.s32 %v670, %v1004
        %v1006 = vrot.slane %v617, %v1005
        %v1007 = vsel %vm675, %v1006, %v1002
        %v1008 = vsel %vm810, %v893, %v874
        %v1009 = vsel %vm812, %v912, %v1008
        %v1010 = vsel %vm814, %v931, %v1009
        %v1011 = vsel %vm816, %v950, %v1010
        %v1012 = vsel %vm818, %v969, %v1011
        %v1013 = vsel %vm820, %v988, %v1012
        %v1014 = vsel %vm822, %v1007, %v1013
        %v1015 = vld [vmem:[%s1] sm:$0xff]
        %v1016 = vld [vmem:[%s1 + $0x8] sm:$0xff]
        %v1017 = vld [vmem:[%s1 + $0x10] sm:$0xff]
        %v1018 = vld [vmem:[%s1 + $0x18] sm:$0xff]
        %v1019 = vld [vmem:[%s2] sm:$0x1]
        %v1021 = vlaneseq
        %v1022 = vshrl.u32 %v1021, 7
        %v1023 = vsub.s32 0, %v1022
        %v1024 = vrot.slane %v1019, %v1023
        %vm1026 = vcmask 261120
        %v1027 = vsel %vm1026, %v823, 0
        %v1029 = vsel %vm1026, %v1014, 0
        %1031 = vmatprep.subr.mxu0 0.0
        %1032 = vmatpush1.msra.mxu0 %v1015
        %1033 = vmatprep.subr.mxu0 0.0
        %1034 = vmatpush1.msra.mxu0 %v1016
        %1035 = vmatprep.subr.mxu0 0.0
        %1036 = vmatpush1.msra.mxu0 %v1017
        %1037 = vmatprep.subr.mxu0 0.0
        %1038 = vmatpush1.msra.mxu0 %v1018
        %1039 = vmatprep.subr.mxu0 0.0
        %1040 = vmatpush1.msra.mxu0 0.0
        %1041 = vmatprep.subr.mxu0 0.0
        %1042 = vmatpush1.msra.mxu0 0.0
        %1043 = vmatprep.subr.mxu0 0.0
        %1044 = vmatpush1.msra.mxu0 0.0
        %1045 = vmatprep.subr.mxu0 0.0
        %1046 = vmatpush1.msra.mxu0 0.0
        %1047 = vmatprep.subr.mxu0 0.0
        %1048 = vmatpush1.msra.mxu0 0.0
        %1049 = vmatprep.subr.mxu0 0.0
        %1050 = vmatpush1.msra.mxu0 0.0
        %1051 = vmatprep.subr.mxu0 0.0
        %1052 = vmatpush1.msra.mxu0 0.0
        %1053 = vmatprep.subr.mxu0 0.0
        %1054 = vmatpush1.msra.mxu0 0.0
        %1055 = vmatprep.subr.mxu0 0.0
        %1056 = vmatpush1.msra.mxu0 0.0
        %1057 = vmatprep.subr.mxu0 0.0
        %1058 = vmatpush1.msra.mxu0 0.0
        %1059 = vmatprep.subr.mxu0 0.0
        %1060 = vmatpush1.msra.mxu0 0.0
        %1061 = vmatprep.subr.mxu0 0.0
        %1062 = vmatpush1.msra.mxu0 0.0
        %1063 = vmatprep.subr.mxu0 0.0
        %1064 = vmatpush1.msra.mxu0 0.0
        %1065 = vmatprep.subr.mxu0 0.0
        %1066 = vmatpush1.msra.mxu0 0.0
        %1067 = vmatprep.subr.mxu0 0.0
        %1068 = vmatpush1.msra.mxu0 0.0
        %1069 = vmatprep.subr.mxu0 0.0
        %1070 = vmatpush1.msra.mxu0 0.0
        %1071 = vmatprep.subr.mxu0 0.0
        %1072 = vmatpush1.msra.mxu0 0.0
        %1073 = vmatprep.subr.mxu0 0.0
        %1074 = vmatpush1.msra.mxu0 0.0
        %1075 = vmatprep.subr.mxu0 0.0
        %1076 = vmatpush1.msra.mxu0 0.0
        %1077 = vmatprep.subr.mxu0 0.0
        %1078 = vmatpush1.msra.mxu0 0.0
        %1079 = vmatprep.subr.mxu0 0.0
        %1080 = vmatpush1.msra.mxu0 0.0
        %1081 = vmatprep.subr.mxu0 0.0
        %1082 = vmatpush1.msra.mxu0 0.0
        %1083 = vmatprep.subr.mxu0 0.0
        %1084 = vmatpush1.msra.mxu0 0.0
        %1085 = vmatprep.subr.mxu0 0.0
        %1086 = vmatpush1.msra.mxu0 0.0
        %1087 = vmatprep.subr.mxu0 0.0
        %1088 = vmatpush1.msra.mxu0 0.0
        %1089 = vmatprep.subr.mxu0 0.0
        %1090 = vmatpush1.msra.mxu0 0.0
        %1091 = vmatprep.subr.mxu0 0.0
        %1092 = vmatpush1.msra.mxu0 0.0
        %1093 = vmatprep.subr.mxu0 0.0
        %1094 = vmatpush1.msra.mxu0 0.0
        %1095 = vmatprep.mubr.f32.mxu0 0.0
        %1096 = vmatmul.mubr.f32.gmra.mrb[0].mxu0 %v1027
        %v1097 = vpop.f32.mrb[0].mxu0
        %v1098 = vadd.f32 %v1024, %v1097
        %v1099 = vpop.f32.mrb[0].mxu0
        %1100 = vmatprep.mubr.f32.mxu0 0.0
        %1101 = vmatmul.mubr.f32.gmra.mrb[0].mxu0 %v1029
        %v1102 = vpop.f32.mrb[0].mxu0
        %v1103 = vadd.f32 %v1024, %v1102
        %v1104 = vpop.f32.mrb[0].mxu0
        %1105 = vdwg.mxu0
        %v1106 = vmax.f32 %v1098, 0.0
        %v1107 = vmax.f32 %v1103, 0.0
        %v1108 = vld [vmem:[%s3] sm:$0x3]
        %v1109 = vld [vmem:[%s4] sm:$0x1]
        %v1111 = vlaneseq
        %v1112 = vshrl.u32 %v1111, 7
        %v1113 = vsub.s32 0, %v1112
        %v1114 = vrot.slane %v1109, %v1113
        %vm1116 = vcmask 15360
        %v1118 = vsel %vm1116, %v1106, 0
        %v1121 = vsel %vm1116, %v1107, 0
        %vm1123 = vcmask 1041408
        %v1125 = vsel %vm1123, %v1108, 0
        %1127 = vmatprep.subr.mxu0 0.0
        %1128 = vmatpush1.msra.mxu0 %v1125
        %1129 = vmatprep.subr.mxu0 0.0
        %1130 = vmatpush1.msra.mxu0 0.0
        %1131 = vmatprep.subr.mxu0 0.0
        %1132 = vmatpush1.msra.mxu0 0.0
        %1133 = vmatprep.subr.mxu0 0.0
        %1134 = vmatpush1.msra.mxu0 0.0
        %1135 = vmatprep.subr.mxu0 0.0
        %1136 = vmatpush1.msra.mxu0 0.0
        %1137 = vmatprep.subr.mxu0 0.0
        %1138 = vmatpush1.msra.mxu0 0.0
        %1139 = vmatprep.subr.mxu0 0.0
        %1140 = vmatpush1.msra.mxu0 0.0
        %1141 = vmatprep.subr.mxu0 0.0
        %1142 = vmatpush1.msra.mxu0 0.0
        %1143 = vmatprep.subr.mxu0 0.0
        %1144 = vmatpush1.msra.mxu0 0.0
        %1145 = vmatprep.subr.mxu0 0.0
        %1146 = vmatpush1.msra.mxu0 0.0
        %1147 = vmatprep.subr.mxu0 0.0
        %1148 = vmatpush1.msra.mxu0 0.0
        %1149 = vmatprep.subr.mxu0 0.0
        %1150 = vmatpush1.msra.mxu0 0.0
        %1151 = vmatprep.subr.mxu0 0.0
        %1152 = vmatpush1.msra.mxu0 0.0
        %1153 = vmatprep.subr.mxu0 0.0
        %1154 = vmatpush1.msra.mxu0 0.0
        %1155 = vmatprep.subr.mxu0 0.0
        %1156 = vmatpush1.msra.mxu0 0.0
        %1157 = vmatprep.subr.mxu0 0.0
        %1158 = vmatpush1.msra.mxu0 0.0
        %1159 = vmatprep.subr.mxu0 0.0
        %1160 = vmatpush1.msra.mxu0 0.0
        %1161 = vmatprep.subr.mxu0 0.0
        %1162 = vmatpush1.msra.mxu0 0.0
        %1163 = vmatprep.subr.mxu0 0.0
        %1164 = vmatpush1.msra.mxu0 0.0
        %1165 = vmatprep.subr.mxu0 0.0
        %1166 = vmatpush1.msra.mxu0 0.0
        %1167 = vmatprep.subr.mxu0 0.0
        %1168 = vmatpush1.msra.mxu0 0.0
        %1169 = vmatprep.subr.mxu0 0.0
        %1170 = vmatpush1.msra.mxu0 0.0
        %1171 = vmatprep.subr.mxu0 0.0
        %1172 = vmatpush1.msra.mxu0 0.0
        %1173 = vmatprep.subr.mxu0 0.0
        %1174 = vmatpush1.msra.mxu0 0.0
        %1175 = vmatprep.subr.mxu0 0.0
        %1176 = vmatpush1.msra.mxu0 0.0
        %1177 = vmatprep.subr.mxu0 0.0
        %1178 = vmatpush1.msra.mxu0 0.0
        %1179 = vmatprep.subr.mxu0 0.0
        %1180 = vmatpush1.msra.mxu0 0.0
        %1181 = vmatprep.subr.mxu0 0.0
        %1182 = vmatpush1.msra.mxu0 0.0
        %1183 = vmatprep.subr.mxu0 0.0
        %1184 = vmatpush1.msra.mxu0 0.0
        %1185 = vmatprep.subr.mxu0 0.0
        %1186 = vmatpush1.msra.mxu0 0.0
        %1187 = vmatprep.subr.mxu0 0.0
        %1188 = vmatpush1.msra.mxu0 0.0
        %1189 = vmatprep.subr.mxu0 0.0
        %1190 = vmatpush1.msra.mxu0 0.0
        %1191 = vmatprep.mubr.f32.mxu0 0.0
        %1192 = vmatmul.mubr.f32.gmra.mrb[0].mxu0 %v1118
        %v1193 = vpop.f32.mrb[0].mxu0
        %v1194 = vadd.f32 %v1114, %v1193
        %v1195 = vpop.f32.mrb[0].mxu0
        %1196 = vmatprep.mubr.f32.mxu0 0.0
        %1197 = vmatmul.mubr.f32.gmra.mrb[0].mxu0 %v1121
        %v1198 = vpop.f32.mrb[0].mxu0
        %v1199 = vadd.f32 %v1114, %v1198
        %v1200 = vpop.f32.mrb[0].mxu0
        %1201 = vdwg.mxu0
        %v1202 = vadd.f32 %v1194, %v1199
        %v1203 = vxor.u32 %v1202, 2147483648
        %v1204 = vmul.f32 %v1203, 1.442695
        %v1205 = vpow.pop %v1204
        %v1206 = vadd.f32 %v1205, 1.0
        %v1207 = vrcp.pop %v1206
        %v1208 = vmul.f32 1.0, %v1207
        %v1209 = vlaneseq
        %v1210 = vshrl.u32 %v1209, 7
        %v1211 = vsub.s32 0, %v1210
        %v1212 = vrot.slane %v1208, %v1211
        %1214 = vbcast.lane.b32.xlu0 %v1212, 256
        %v1215 = vpop.permute.xlu0 %1214
        %s1217 = sor.u32 256, 8
        %1218 = vbcast.lane.b32.xlu0 %v1212, %s1217
        %v1219 = vpop.permute.xlu0 %1218
        %s1221 = sor.u32 256, 16
        %1222 = vbcast.lane.b32.xlu0 %v1212, %s1221
        %v1223 = vpop.permute.xlu0 %1222
        %s1225 = sor.u32 256, 24
        %1226 = vbcast.lane.b32.xlu0 %v1212, %s1225
        %v1227 = vpop.permute.xlu0 %1226
        %v1228 = vlaneseq
        %v1229 = vshrl.u32 %v1228, 7
        %v1230 = vsub.s32 1, %v1229
        %v1231 = vrot.slane %v1208, %v1230
        %1233 = vbcast.lane.b32.xlu0 %v1231, 256
        %v1234 = vpop.permute.xlu0 %1233
        %s1236 = sor.u32 256, 8
        %1237 = vbcast.lane.b32.xlu0 %v1231, %s1236
        %v1238 = vpop.permute.xlu0 %1237
        %s1240 = sor.u32 256, 16
        %1241 = vbcast.lane.b32.xlu0 %v1231, %s1240
        %v1242 = vpop.permute.xlu0 %1241
        %s1244 = sor.u32 256, 24
        %1245 = vbcast.lane.b32.xlu0 %v1231, %s1244
        %v1246 = vpop.permute.xlu0 %1245
        %v1247 = vlaneseq
        %v1248 = vshrl.u32 %v1247, 7
        %v1249 = vsub.s32 2, %v1248
        %v1250 = vrot.slane %v1208, %v1249
        %1252 = vbcast.lane.b32.xlu0 %v1250, 256
        %v1253 = vpop.permute.xlu0 %1252
        %s1255 = sor.u32 256, 8
        %1256 = vbcast.lane.b32.xlu0 %v1250, %s1255
        %v1257 = vpop.permute.xlu0 %1256
        %s1259 = sor.u32 256, 16
        %1260 = vbcast.lane.b32.xlu0 %v1250, %s1259
        %v1261 = vpop.permute.xlu0 %1260
        %s1263 = sor.u32 256, 24
        %1264 = vbcast.lane.b32.xlu0 %v1250, %s1263
        %v1265 = vpop.permute.xlu0 %1264
        %v1266 = vlaneseq
        %v1267 = vshrl.u32 %v1266, 7
        %v1268 = vsub.s32 3, %v1267
        %v1269 = vrot.slane %v1208, %v1268
        %1271 = vbcast.lane.b32.xlu0 %v1269, 256
        %v1272 = vpop.permute.xlu0 %1271
        %s1274 = sor.u32 256, 8
        %1275 = vbcast.lane.b32.xlu0 %v1269, %s1274
        %v1276 = vpop.permute.xlu0 %1275
        %s1278 = sor.u32 256, 16
        %1279 = vbcast.lane.b32.xlu0 %v1269, %s1278
        %v1280 = vpop.permute.xlu0 %1279
        %s1282 = sor.u32 256, 24
        %1283 = vbcast.lane.b32.xlu0 %v1269, %s1282
        %v1284 = vpop.permute.xlu0 %1283
        %v1285 = vlaneseq
        %v1286 = vshrl.u32 %v1285, 7
        %v1287 = vsub.s32 4, %v1286
        %v1288 = vrot.slane %v1208, %v1287
        %1290 = vbcast.lane.b32.xlu0 %v1288, 256
        %v1291 = vpop.permute.xlu0 %1290
        %s1293 = sor.u32 256, 8
        %1294 = vbcast.lane.b32.xlu0 %v1288, %s1293
        %v1295 = vpop.permute.xlu0 %1294
        %s1297 = sor.u32 256, 16
        %1298 = vbcast.lane.b32.xlu0 %v1288, %s1297
        %v1299 = vpop.permute.xlu0 %1298
        %s1301 = sor.u32 256, 24
        %1302 = vbcast.lane.b32.xlu0 %v1288, %s1301
        %v1303 = vpop.permute.xlu0 %1302
        %v1304 = vlaneseq
        %v1305 = vshrl.u32 %v1304, 7
        %v1306 = vsub.s32 5, %v1305
        %v1307 = vrot.slane %v1208, %v1306
        %1309 = vbcast.lane.b32.xlu0 %v1307, 256
        %v1310 = vpop.permute.xlu0 %1309
        %s1312 = sor.u32 256, 8
        %1313 = vbcast.lane.b32.xlu0 %v1307, %s1312
        %v1314 = vpop.permute.xlu0 %1313
        %s1316 = sor.u32 256, 16
        %1317 = vbcast.lane.b32.xlu0 %v1307, %s1316
        %v1318 = vpop.permute.xlu0 %1317
        %s1320 = sor.u32 256, 24
        %1321 = vbcast.lane.b32.xlu0 %v1307, %s1320
        %v1322 = vpop.permute.xlu0 %1321
        %v1323 = vlaneseq
        %v1324 = vshrl.u32 %v1323, 7
        %v1325 = vsub.s32 6, %v1324
        %v1326 = vrot.slane %v1208, %v1325
        %1328 = vbcast.lane.b32.xlu0 %v1326, 256
        %v1329 = vpop.permute.xlu0 %1328
        %s1331 = sor.u32 256, 8
        %1332 = vbcast.lane.b32.xlu0 %v1326, %s1331
        %v1333 = vpop.permute.xlu0 %1332
        %s1335 = sor.u32 256, 16
        %1336 = vbcast.lane.b32.xlu0 %v1326, %s1335
        %v1337 = vpop.permute.xlu0 %1336
        %s1339 = sor.u32 256, 24
        %1340 = vbcast.lane.b32.xlu0 %v1326, %s1339
        %v1341 = vpop.permute.xlu0 %1340
        %v1342 = vlaneseq
        %v1343 = vshrl.u32 %v1342, 7
        %v1344 = vsub.s32 7, %v1343
        %v1345 = vrot.slane %v1208, %v1344
        %1347 = vbcast.lane.b32.xlu0 %v1345, 256
        %v1348 = vpop.permute.xlu0 %1347
        %s1350 = sor.u32 256, 8
        %1351 = vbcast.lane.b32.xlu0 %v1345, %s1350
        %v1352 = vpop.permute.xlu0 %1351
        %s1354 = sor.u32 256, 16
        %1355 = vbcast.lane.b32.xlu0 %v1345, %s1354
        %v1356 = vpop.permute.xlu0 %1355
        %s1358 = sor.u32 256, 24
        %1359 = vbcast.lane.b32.xlu0 %v1345, %s1358
        %v1360 = vpop.permute.xlu0 %1359
        %v1361 = vmul.f32 %v329, %v1215
        %v1362 = vmul.f32 %v330, %v1215
        %v1363 = vmul.f32 %v331, %v1219
        %v1364 = vmul.f32 %v332, %v1219
        %v1365 = vmul.f32 %v333, %v1223
        %v1366 = vmul.f32 %v334, %v1223
        %v1367 = vmul.f32 %v335, %v1227
        %v1368 = vmul.f32 %v336, %v1227
        %v1369 = vmul.f32 %v337, %v1234
        %v1370 = vmul.f32 %v338, %v1234
        %v1371 = vmul.f32 %v339, %v1238
        %v1372 = vmul.f32 %v340, %v1238
        %v1373 = vmul.f32 %v341, %v1242
        %v1374 = vmul.f32 %v342, %v1242
        %v1375 = vmul.f32 %v343, %v1246
        %v1376 = vmul.f32 %v344, %v1246
        %v1377 = vmul.f32 %v345, %v1253
        %v1378 = vmul.f32 %v346, %v1253
        %v1379 = vmul.f32 %v347, %v1257
        %v1380 = vmul.f32 %v348, %v1257
        %v1381 = vmul.f32 %v349, %v1261
        %v1382 = vmul.f32 %v350, %v1261
        %v1383 = vmul.f32 %v351, %v1265
        %v1384 = vmul.f32 %v352, %v1265
        %v1385 = vmul.f32 %v353, %v1272
        %v1386 = vmul.f32 %v354, %v1272
        %v1387 = vmul.f32 %v355, %v1276
        %v1388 = vmul.f32 %v356, %v1276
        %v1389 = vmul.f32 %v357, %v1280
        %v1390 = vmul.f32 %v358, %v1280
        %v1391 = vmul.f32 %v359, %v1284
        %v1392 = vmul.f32 %v360, %v1284
        %v1393 = vmul.f32 %v361, %v1291
        %v1394 = vmul.f32 %v362, %v1291
        %v1395 = vmul.f32 %v363, %v1295
        %v1396 = vmul.f32 %v364, %v1295
        %v1397 = vmul.f32 %v365, %v1299
        %v1398 = vmul.f32 %v366, %v1299
        %v1399 = vmul.f32 %v367, %v1303
        %v1400 = vmul.f32 %v368, %v1303
        %v1401 = vmul.f32 %v369, %v1310
        %v1402 = vmul.f32 %v370, %v1310
        %v1403 = vmul.f32 %v371, %v1314
        %v1404 = vmul.f32 %v372, %v1314
        %v1405 = vmul.f32 %v373, %v1318
        %v1406 = vmul.f32 %v374, %v1318
        %v1407 = vmul.f32 %v375, %v1322
        %v1408 = vmul.f32 %v376, %v1322
        %v1409 = vmul.f32 %v377, %v1329
        %v1410 = vmul.f32 %v378, %v1329
        %v1411 = vmul.f32 %v379, %v1333
        %v1412 = vmul.f32 %v380, %v1333
        %v1413 = vmul.f32 %v381, %v1337
        %v1414 = vmul.f32 %v382, %v1337
        %v1415 = vmul.f32 %v383, %v1341
        %v1416 = vmul.f32 %v384, %v1341
        %v1417 = vmul.f32 %v385, %v1348
        %v1418 = vmul.f32 %v386, %v1348
        %v1419 = vmul.f32 %v387, %v1352
        %v1420 = vmul.f32 %v388, %v1352
        %v1421 = vmul.f32 %v389, %v1356
        %v1422 = vmul.f32 %v390, %v1356
        %v1423 = vmul.f32 %v391, %v1360
        %v1424 = vmul.f32 %v392, %v1360
        %v1425 = vadd.f32 %v1361, %v1363
        %v1426 = vadd.f32 %v1425, %v1365
        %v1427 = vadd.f32 %v1426, %v1367
        %v1428 = vrot.slane %v1427, 4
        %v1429 = vadd.f32 %v1427, %v1428
        %v1430 = vrot.slane %v1429, 2
        %v1431 = vadd.f32 %v1429, %v1430
        %v1432 = vrot.slane %v1431, 1
        %v1433 = vadd.f32 %v1431, %v1432
        %v1434 = vadd.f32 %v1362, %v1364
        %v1435 = vadd.f32 %v1434, %v1366
        %v1436 = vadd.f32 %v1435, %v1368
        %v1437 = vrot.slane %v1436, 4
        %v1438 = vadd.f32 %v1436, %v1437
        %v1439 = vrot.slane %v1438, 2
        %v1440 = vadd.f32 %v1438, %v1439
        %v1441 = vrot.slane %v1440, 1
        %v1442 = vadd.f32 %v1440, %v1441
        %v1443 = vadd.f32 %v1369, %v1371
        %v1444 = vadd.f32 %v1443, %v1373
        %v1445 = vadd.f32 %v1444, %v1375
        %v1446 = vrot.slane %v1445, 4
        %v1447 = vadd.f32 %v1445, %v1446
        %v1448 = vrot.slane %v1447, 2
        %v1449 = vadd.f32 %v1447, %v1448
        %v1450 = vrot.slane %v1449, 1
        %v1451 = vadd.f32 %v1449, %v1450
        %v1452 = vadd.f32 %v1370, %v1372
        %v1453 = vadd.f32 %v1452, %v1374
        %v1454 = vadd.f32 %v1453, %v1376
        %v1455 = vrot.slane %v1454, 4
        %v1456 = vadd.f32 %v1454, %v1455
        %v1457 = vrot.slane %v1456, 2
        %v1458 = vadd.f32 %v1456, %v1457
        %v1459 = vrot.slane %v1458, 1
        %v1460 = vadd.f32 %v1458, %v1459
        %v1461 = vadd.f32 %v1377, %v1379
        %v1462 = vadd.f32 %v1461, %v1381
        %v1463 = vadd.f32 %v1462, %v1383
        %v1464 = vrot.slane %v1463, 4
        %v1465 = vadd.f32 %v1463, %v1464
        %v1466 = vrot.slane %v1465, 2
        %v1467 = vadd.f32 %v1465, %v1466
        %v1468 = vrot.slane %v1467, 1
        %v1469 = vadd.f32 %v1467, %v1468
        %v1470 = vadd.f32 %v1378, %v1380
        %v1471 = vadd.f32 %v1470, %v1382
        %v1472 = vadd.f32 %v1471, %v1384
        %v1473 = vrot.slane %v1472, 4
        %v1474 = vadd.f32 %v1472, %v1473
        %v1475 = vrot.slane %v1474, 2
        %v1476 = vadd.f32 %v1474, %v1475
        %v1477 = vrot.slane %v1476, 1
        %v1478 = vadd.f32 %v1476, %v1477
        %v1479 = vadd.f32 %v1385, %v1387
        %v1480 = vadd.f32 %v1479, %v1389
        %v1481 = vadd.f32 %v1480, %v1391
        %v1482 = vrot.slane %v1481, 4
        %v1483 = vadd.f32 %v1481, %v1482
        %v1484 = vrot.slane %v1483, 2
        %v1485 = vadd.f32 %v1483, %v1484
        %v1486 = vrot.slane %v1485, 1
        %v1487 = vadd.f32 %v1485, %v1486
        %v1488 = vadd.f32 %v1386, %v1388
        %v1489 = vadd.f32 %v1488, %v1390
        %v1490 = vadd.f32 %v1489, %v1392
        %v1491 = vrot.slane %v1490, 4
        %v1492 = vadd.f32 %v1490, %v1491
        %v1493 = vrot.slane %v1492, 2
        %v1494 = vadd.f32 %v1492, %v1493
        %v1495 = vrot.slane %v1494, 1
        %v1496 = vadd.f32 %v1494, %v1495
        %v1497 = vadd.f32 %v1393, %v1395
        %v1498 = vadd.f32 %v1497, %v1397
        %v1499 = vadd.f32 %v1498, %v1399
        %v1500 = vrot.slane %v1499, 4
        %v1501 = vadd.f32 %v1499, %v1500
        %v1502 = vrot.slane %v1501, 2
        %v1503 = vadd.f32 %v1501, %v1502
        %v1504 = vrot.slane %v1503, 1
        %v1505 = vadd.f32 %v1503, %v1504
        %v1506 = vadd.f32 %v1394, %v1396
        %v1507 = vadd.f32 %v1506, %v1398
        %v1508 = vadd.f32 %v1507, %v1400
        %v1509 = vrot.slane %v1508, 4
        %v1510 = vadd.f32 %v1508, %v1509
        %v1511 = vrot.slane %v1510, 2
        %v1512 = vadd.f32 %v1510, %v1511
        %v1513 = vrot.slane %v1512, 1
        %v1514 = vadd.f32 %v1512, %v1513
        %v1515 = vadd.f32 %v1401, %v1403
        %v1516 = vadd.f32 %v1515, %v1405
        %v1517 = vadd.f32 %v1516, %v1407
        %v1518 = vrot.slane %v1517, 4
        %v1519 = vadd.f32 %v1517, %v1518
        %v1520 = vrot.slane %v1519, 2
        %v1521 = vadd.f32 %v1519, %v1520
        %v1522 = vrot.slane %v1521, 1
        %v1523 = vadd.f32 %v1521, %v1522
        %v1524 = vadd.f32 %v1402, %v1404
        %v1525 = vadd.f32 %v1524, %v1406
        %v1526 = vadd.f32 %v1525, %v1408
        %v1527 = vrot.slane %v1526, 4
        %v1528 = vadd.f32 %v1526, %v1527
        %v1529 = vrot.slane %v1528, 2
        %v1530 = vadd.f32 %v1528, %v1529
        %v1531 = vrot.slane %v1530, 1
        %v1532 = vadd.f32 %v1530, %v1531
        %v1533 = vadd.f32 %v1409, %v1411
        %v1534 = vadd.f32 %v1533, %v1413
        %v1535 = vadd.f32 %v1534, %v1415
        %v1536 = vrot.slane %v1535, 4
        %v1537 = vadd.f32 %v1535, %v1536
        %v1538 = vrot.slane %v1537, 2
        %v1539 = vadd.f32 %v1537, %v1538
        %v1540 = vrot.slane %v1539, 1
        %v1541 = vadd.f32 %v1539, %v1540
        %v1542 = vadd.f32 %v1410, %v1412
        %v1543 = vadd.f32 %v1542, %v1414
        %v1544 = vadd.f32 %v1543, %v1416
        %v1545 = vrot.slane %v1544, 4
        %v1546 = vadd.f32 %v1544, %v1545
        %v1547 = vrot.slane %v1546, 2
        %v1548 = vadd.f32 %v1546, %v1547
        %v1549 = vrot.slane %v1548, 1
        %v1550 = vadd.f32 %v1548, %v1549
        %v1551 = vadd.f32 %v1417, %v1419
        %v1552 = vadd.f32 %v1551, %v1421
        %v1553 = vadd.f32 %v1552, %v1423
        %v1554 = vrot.slane %v1553, 4
        %v1555 = vadd.f32 %v1553, %v1554
        %v1556 = vrot.slane %v1555, 2
        %v1557 = vadd.f32 %v1555, %v1556
        %v1558 = vrot.slane %v1557, 1
        %v1559 = vadd.f32 %v1557, %v1558
        %v1560 = vadd.f32 %v1418, %v1420
        %v1561 = vadd.f32 %v1560, %v1422
        %v1562 = vadd.f32 %v1561, %v1424
        %v1563 = vrot.slane %v1562, 4
        %v1564 = vadd.f32 %v1562, %v1563
        %v1565 = vrot.slane %v1564, 2
        %v1566 = vadd.f32 %v1564, %v1565
        %v1567 = vrot.slane %v1566, 1
        %v1568 = vadd.f32 %v1566, %v1567
        %v1569 = vrcp.pop 32.0
        %v1570 = vmul.f32 %v1433, %v1569
        %v1571 = vmul.f32 %v1442, %v1569
        %v1572 = vmul.f32 %v1451, %v1569
        %v1573 = vmul.f32 %v1460, %v1569
        %v1574 = vmul.f32 %v1469, %v1569
        %v1575 = vmul.f32 %v1478, %v1569
        %v1576 = vmul.f32 %v1487, %v1569
        %v1577 = vmul.f32 %v1496, %v1569
        %v1578 = vmul.f32 %v1505, %v1569
        %v1579 = vmul.f32 %v1514, %v1569
        %v1580 = vmul.f32 %v1523, %v1569
        %v1581 = vmul.f32 %v1532, %v1569
        %v1582 = vmul.f32 %v1541, %v1569
        %v1583 = vmul.f32 %v1550, %v1569
        %v1584 = vmul.f32 %v1559, %v1569
        %v1585 = vmul.f32 %v1568, %v1569
        %v1586 = vmax.f32 %v1361, %v1363
        %v1587 = vmax.f32 %v1586, %v1365
        %v1588 = vmax.f32 %v1587, %v1367
        %v1589 = vrot.slane %v1588, 4
        %v1590 = vmax.f32 %v1588, %v1589
        %v1591 = vrot.slane %v1590, 2
        %v1592 = vmax.f32 %v1590, %v1591
        %v1593 = vrot.slane %v1592, 1
        %v1594 = vmax.f32 %v1592, %v1593
        %v1595 = vmax.f32 %v1362, %v1364
        %v1596 = vmax.f32 %v1595, %v1366
        %v1597 = vmax.f32 %v1596, %v1368
        %v1598 = vrot.slane %v1597, 4
        %v1599 = vmax.f32 %v1597, %v1598
        %v1600 = vrot.slane %v1599, 2
        %v1601 = vmax.f32 %v1599, %v1600
        %v1602 = vrot.slane %v1601, 1
        %v1603 = vmax.f32 %v1601, %v1602
        %v1604 = vmax.f32 %v1369, %v1371
        %v1605 = vmax.f32 %v1604, %v1373
        %v1606 = vmax.f32 %v1605, %v1375
        %v1607 = vrot.slane %v1606, 4
        %v1608 = vmax.f32 %v1606, %v1607
        %v1609 = vrot.slane %v1608, 2
        %v1610 = vmax.f32 %v1608, %v1609
        %v1611 = vrot.slane %v1610, 1
        %v1612 = vmax.f32 %v1610, %v1611
        %v1613 = vmax.f32 %v1370, %v1372
        %v1614 = vmax.f32 %v1613, %v1374
        %v1615 = vmax.f32 %v1614, %v1376
        %v1616 = vrot.slane %v1615, 4
        %v1617 = vmax.f32 %v1615, %v1616
        %v1618 = vrot.slane %v1617, 2
        %v1619 = vmax.f32 %v1617, %v1618
        %v1620 = vrot.slane %v1619, 1
        %v1621 = vmax.f32 %v1619, %v1620
        %v1622 = vmax.f32 %v1377, %v1379
        %v1623 = vmax.f32 %v1622, %v1381
        %v1624 = vmax.f32 %v1623, %v1383
        %v1625 = vrot.slane %v1624, 4
        %v1626 = vmax.f32 %v1624, %v1625
        %v1627 = vrot.slane %v1626, 2
        %v1628 = vmax.f32 %v1626, %v1627
        %v1629 = vrot.slane %v1628, 1
        %v1630 = vmax.f32 %v1628, %v1629
        %v1631 = vmax.f32 %v1378, %v1380
        %v1632 = vmax.f32 %v1631, %v1382
        %v1633 = vmax.f32 %v1632, %v1384
        %v1634 = vrot.slane %v1633, 4
        %v1635 = vmax.f32 %v1633, %v1634
        %v1636 = vrot.slane %v1635, 2
        %v1637 = vmax.f32 %v1635, %v1636
        %v1638 = vrot.slane %v1637, 1
        %v1639 = vmax.f32 %v1637, %v1638
        %v1640 = vmax.f32 %v1385, %v1387
        %v1641 = vmax.f32 %v1640, %v1389
        %v1642 = vmax.f32 %v1641, %v1391
        %v1643 = vrot.slane %v1642, 4
        %v1644 = vmax.f32 %v1642, %v1643
        %v1645 = vrot.slane %v1644, 2
        %v1646 = vmax.f32 %v1644, %v1645
        %v1647 = vrot.slane %v1646, 1
        %v1648 = vmax.f32 %v1646, %v1647
        %v1649 = vmax.f32 %v1386, %v1388
        %v1650 = vmax.f32 %v1649, %v1390
        %v1651 = vmax.f32 %v1650, %v1392
        %v1652 = vrot.slane %v1651, 4
        %v1653 = vmax.f32 %v1651, %v1652
        %v1654 = vrot.slane %v1653, 2
        %v1655 = vmax.f32 %v1653, %v1654
        %v1656 = vrot.slane %v1655, 1
        %v1657 = vmax.f32 %v1655, %v1656
        %v1658 = vmax.f32 %v1393, %v1395
        %v1659 = vmax.f32 %v1658, %v1397
        %v1660 = vmax.f32 %v1659, %v1399
        %v1661 = vrot.slane %v1660, 4
        %v1662 = vmax.f32 %v1660, %v1661
        %v1663 = vrot.slane %v1662, 2
        %v1664 = vmax.f32 %v1662, %v1663
        %v1665 = vrot.slane %v1664, 1
        %v1666 = vmax.f32 %v1664, %v1665
        %v1667 = vmax.f32 %v1394, %v1396
        %v1668 = vmax.f32 %v1667, %v1398
        %v1669 = vmax.f32 %v1668, %v1400
        %v1670 = vrot.slane %v1669, 4
        %v1671 = vmax.f32 %v1669, %v1670
        %v1672 = vrot.slane %v1671, 2
        %v1673 = vmax.f32 %v1671, %v1672
        %v1674 = vrot.slane %v1673, 1
        %v1675 = vmax.f32 %v1673, %v1674
        %v1676 = vmax.f32 %v1401, %v1403
        %v1677 = vmax.f32 %v1676, %v1405
        %v1678 = vmax.f32 %v1677, %v1407
        %v1679 = vrot.slane %v1678, 4
        %v1680 = vmax.f32 %v1678, %v1679
        %v1681 = vrot.slane %v1680, 2
        %v1682 = vmax.f32 %v1680, %v1681
        %v1683 = vrot.slane %v1682, 1
        %v1684 = vmax.f32 %v1682, %v1683
        %v1685 = vmax.f32 %v1402, %v1404
        %v1686 = vmax.f32 %v1685, %v1406
        %v1687 = vmax.f32 %v1686, %v1408
        %v1688 = vrot.slane %v1687, 4
        %v1689 = vmax.f32 %v1687, %v1688
        %v1690 = vrot.slane %v1689, 2
        %v1691 = vmax.f32 %v1689, %v1690
        %v1692 = vrot.slane %v1691, 1
        %v1693 = vmax.f32 %v1691, %v1692
        %v1694 = vmax.f32 %v1409, %v1411
        %v1695 = vmax.f32 %v1694, %v1413
        %v1696 = vmax.f32 %v1695, %v1415
        %v1697 = vrot.slane %v1696, 4
        %v1698 = vmax.f32 %v1696, %v1697
        %v1699 = vrot.slane %v1698, 2
        %v1700 = vmax.f32 %v1698, %v1699
        %v1701 = vrot.slane %v1700, 1
        %v1702 = vmax.f32 %v1700, %v1701
        %v1703 = vmax.f32 %v1410, %v1412
        %v1704 = vmax.f32 %v1703, %v1414
        %v1705 = vmax.f32 %v1704, %v1416
        %v1706 = vrot.slane %v1705, 4
        %v1707 = vmax.f32 %v1705, %v1706
        %v1708 = vrot.slane %v1707, 2
        %v1709 = vmax.f32 %v1707, %v1708
        %v1710 = vrot.slane %v1709, 1
        %v1711 = vmax.f32 %v1709, %v1710
        %v1712 = vmax.f32 %v1417, %v1419
        %v1713 = vmax.f32 %v1712, %v1421
        %v1714 = vmax.f32 %v1713, %v1423
        %v1715 = vrot.slane %v1714, 4
        %v1716 = vmax.f32 %v1714, %v1715
        %v1717 = vrot.slane %v1716, 2
        %v1718 = vmax.f32 %v1716, %v1717
        %v1719 = vrot.slane %v1718, 1
        %v1720 = vmax.f32 %v1718, %v1719
        %v1721 = vmax.f32 %v1418, %v1420
        %v1722 = vmax.f32 %v1721, %v1422
        %v1723 = vmax.f32 %v1722, %v1424
        %v1724 = vrot.slane %v1723, 4
        %v1725 = vmax.f32 %v1723, %v1724
        %v1726 = vrot.slane %v1725, 2
        %v1727 = vmax.f32 %v1725, %v1726
        %v1728 = vrot.slane %v1727, 1
        %v1729 = vmax.f32 %v1727, %v1728
        %v1730 = vld [vmem:[#allocation5] sm:$0xff]
        %v1731 = vld [vmem:[#allocation5 + $0x8] sm:$0xff]
        %v1732 = vld [vmem:[#allocation5 + $0x10] sm:$0xff]
        %v1733 = vld [vmem:[#allocation5 + $0x18] sm:$0xff]
        %v1734 = vld [vmem:[#allocation5 + $0x20] sm:$0xff]
        %v1735 = vld [vmem:[#allocation5 + $0x28] sm:$0xff]
        %v1736 = vld [vmem:[#allocation5 + $0x30] sm:$0xff]
        %v1737 = vld [vmem:[#allocation5 + $0x38] sm:$0xff]
        %v1738 = vld [vmem:[#allocation5 + $0x40] sm:$0xff]
        %v1739 = vld [vmem:[#allocation5 + $0x48] sm:$0xff]
        %v1740 = vld [vmem:[#allocation5 + $0x50] sm:$0xff]
        %v1741 = vld [vmem:[#allocation5 + $0x58] sm:$0xff]
        %v1742 = vld [vmem:[#allocation5 + $0x60] sm:$0xff]
        %v1743 = vld [vmem:[#allocation5 + $0x68] sm:$0xff]
        %v1744 = vld [vmem:[#allocation5 + $0x70] sm:$0xff]
        %v1745 = vld [vmem:[#allocation5 + $0x78] sm:$0xff]
        %v1746 = vld [vmem:[#allocation5 + $0x80] sm:$0xff]
        %v1747 = vld [vmem:[#allocation5 + $0x88] sm:$0xff]
        %v1748 = vld [vmem:[#allocation5 + $0x90] sm:$0xff]
        %v1749 = vld [vmem:[#allocation5 + $0x98] sm:$0xff]
        %v1750 = vld [vmem:[#allocation5 + $0xa0] sm:$0xff]
        %v1751 = vld [vmem:[#allocation5 + $0xa8] sm:$0xff]
        %v1752 = vld [vmem:[#allocation5 + $0xb0] sm:$0xff]
        %v1753 = vld [vmem:[#allocation5 + $0xb8] sm:$0xff]
        %v1754 = vld [vmem:[#allocation5 + $0xc0] sm:$0xff]
        %v1755 = vld [vmem:[#allocation5 + $0xc8] sm:$0xff]
        %v1756 = vld [vmem:[#allocation5 + $0xd0] sm:$0xff]
        %v1757 = vld [vmem:[#allocation5 + $0xd8] sm:$0xff]
        %v1758 = vld [vmem:[#allocation5 + $0xe0] sm:$0xff]
        %v1759 = vld [vmem:[#allocation5 + $0xe8] sm:$0xff]
        %v1760 = vld [vmem:[#allocation5 + $0xf0] sm:$0xff]
        %v1761 = vld [vmem:[#allocation5 + $0xf8] sm:$0xff]
        %v1762 = vld [vmem:[#allocation5 + $0x100] sm:$0xff]
        %v1763 = vld [vmem:[#allocation5 + $0x108] sm:$0xff]
        %v1764 = vld [vmem:[#allocation5 + $0x110] sm:$0xff]
        %v1765 = vld [vmem:[#allocation5 + $0x118] sm:$0xff]
        %v1766 = vld [vmem:[#allocation5 + $0x120] sm:$0xff]
        %v1767 = vld [vmem:[#allocation5 + $0x128] sm:$0xff]
        %v1768 = vld [vmem:[#allocation5 + $0x130] sm:$0xff]
        %v1769 = vld [vmem:[#allocation5 + $0x138] sm:$0xff]
        %v1770 = vld [vmem:[#allocation5 + $0x140] sm:$0xff]
        %v1771 = vld [vmem:[#allocation5 + $0x148] sm:$0xff]
        %v1772 = vld [vmem:[#allocation5 + $0x150] sm:$0xff]
        %v1773 = vld [vmem:[#allocation5 + $0x158] sm:$0xff]
        %v1774 = vld [vmem:[#allocation5 + $0x160] sm:$0xff]
        %v1775 = vld [vmem:[#allocation5 + $0x168] sm:$0xff]
        %v1776 = vld [vmem:[#allocation5 + $0x170] sm:$0xff]
        %v1777 = vld [vmem:[#allocation5 + $0x178] sm:$0xff]
        %v1778 = vld [vmem:[#allocation5 + $0x180] sm:$0xff]
        %v1779 = vld [vmem:[#allocation5 + $0x188] sm:$0xff]
        %v1780 = vld [vmem:[#allocation5 + $0x190] sm:$0xff]
        %v1781 = vld [vmem:[#allocation5 + $0x198] sm:$0xff]
        %v1782 = vld [vmem:[#allocation5 + $0x1a0] sm:$0xff]
        %v1783 = vld [vmem:[#allocation5 + $0x1a8] sm:$0xff]
        %v1784 = vld [vmem:[#allocation5 + $0x1b0] sm:$0xff]
        %v1785 = vld [vmem:[#allocation5 + $0x1b8] sm:$0xff]
        %v1786 = vld [vmem:[#allocation5 + $0x1c0] sm:$0xff]
        %v1787 = vld [vmem:[#allocation5 + $0x1c8] sm:$0xff]
        %v1788 = vld [vmem:[#allocation5 + $0x1d0] sm:$0xff]
        %v1789 = vld [vmem:[#allocation5 + $0x1d8] sm:$0xff]
        %v1790 = vld [vmem:[#allocation5 + $0x1e0] sm:$0xff]
        %v1791 = vld [vmem:[#allocation5 + $0x1e8] sm:$0xff]
        %v1792 = vld [vmem:[#allocation5 + $0x1f0] sm:$0xff]
        %v1793 = vld [vmem:[#allocation5 + $0x1f8] sm:$0xff]
        %v1794 = vld [vmem:[#allocation7] sm:$0xff]
        %v1795 = vld [vmem:[#allocation7 + $0x8] sm:$0xff]
        %v1796 = vld [vmem:[#allocation7 + $0x10] sm:$0xff]
        %v1797 = vld [vmem:[#allocation7 + $0x18] sm:$0xff]
        %v1798 = vld [vmem:[#allocation7 + $0x20] sm:$0xff]
        %v1799 = vld [vmem:[#allocation7 + $0x28] sm:$0xff]
        %v1800 = vld [vmem:[#allocation7 + $0x30] sm:$0xff]
        %v1801 = vld [vmem:[#allocation7 + $0x38] sm:$0xff]
        %v1802 = vld [vmem:[#allocation7 + $0x40] sm:$0xff]
        %v1803 = vld [vmem:[#allocation7 + $0x48] sm:$0xff]
        %v1804 = vld [vmem:[#allocation7 + $0x50] sm:$0xff]
        %v1805 = vld [vmem:[#allocation7 + $0x58] sm:$0xff]
        %v1806 = vld [vmem:[#allocation7 + $0x60] sm:$0xff]
        %v1807 = vld [vmem:[#allocation7 + $0x68] sm:$0xff]
        %v1808 = vld [vmem:[#allocation7 + $0x70] sm:$0xff]
        %v1809 = vld [vmem:[#allocation7 + $0x78] sm:$0xff]
        %v1810 = vld [vmem:[#allocation7 + $0x80] sm:$0xff]
        %v1811 = vld [vmem:[#allocation7 + $0x88] sm:$0xff]
        %v1812 = vld [vmem:[#allocation7 + $0x90] sm:$0xff]
        %v1813 = vld [vmem:[#allocation7 + $0x98] sm:$0xff]
        %v1814 = vld [vmem:[#allocation7 + $0xa0] sm:$0xff]
        %v1815 = vld [vmem:[#allocation7 + $0xa8] sm:$0xff]
        %v1816 = vld [vmem:[#allocation7 + $0xb0] sm:$0xff]
        %v1817 = vld [vmem:[#allocation7 + $0xb8] sm:$0xff]
        %v1818 = vld [vmem:[#allocation7 + $0xc0] sm:$0xff]
        %v1819 = vld [vmem:[#allocation7 + $0xc8] sm:$0xff]
        %v1820 = vld [vmem:[#allocation7 + $0xd0] sm:$0xff]
        %v1821 = vld [vmem:[#allocation7 + $0xd8] sm:$0xff]
        %v1822 = vld [vmem:[#allocation7 + $0xe0] sm:$0xff]
        %v1823 = vld [vmem:[#allocation7 + $0xe8] sm:$0xff]
        %v1824 = vld [vmem:[#allocation7 + $0xf0] sm:$0xff]
        %v1825 = vld [vmem:[#allocation7 + $0xf8] sm:$0xff]
        %v1826 = vld [vmem:[#allocation7 + $0x100] sm:$0xff]
        %v1827 = vld [vmem:[#allocation7 + $0x108] sm:$0xff]
        %v1828 = vld [vmem:[#allocation7 + $0x110] sm:$0xff]
        %v1829 = vld [vmem:[#allocation7 + $0x118] sm:$0xff]
        %v1830 = vld [vmem:[#allocation7 + $0x120] sm:$0xff]
        %v1831 = vld [vmem:[#allocation7 + $0x128] sm:$0xff]
        %v1832 = vld [vmem:[#allocation7 + $0x130] sm:$0xff]
        %v1833 = vld [vmem:[#allocation7 + $0x138] sm:$0xff]
        %v1834 = vld [vmem:[#allocation7 + $0x140] sm:$0xff]
        %v1835 = vld [vmem:[#allocation7 + $0x148] sm:$0xff]
        %v1836 = vld [vmem:[#allocation7 + $0x150] sm:$0xff]
        %v1837 = vld [vmem:[#allocation7 + $0x158] sm:$0xff]
        %v1838 = vld [vmem:[#allocation7 + $0x160] sm:$0xff]
        %v1839 = vld [vmem:[#allocation7 + $0x168] sm:$0xff]
        %v1840 = vld [vmem:[#allocation7 + $0x170] sm:$0xff]
        %v1841 = vld [vmem:[#allocation7 + $0x178] sm:$0xff]
        %v1842 = vld [vmem:[#allocation7 + $0x180] sm:$0xff]
        %v1843 = vld [vmem:[#allocation7 + $0x188] sm:$0xff]
        %v1844 = vld [vmem:[#allocation7 + $0x190] sm:$0xff]
        %v1845 = vld [vmem:[#allocation7 + $0x198] sm:$0xff]
        %v1846 = vld [vmem:[#allocation7 + $0x1a0] sm:$0xff]
        %v1847 = vld [vmem:[#allocation7 + $0x1a8] sm:$0xff]
        %v1848 = vld [vmem:[#allocation7 + $0x1b0] sm:$0xff]
        %v1849 = vld [vmem:[#allocation7 + $0x1b8] sm:$0xff]
        %v1850 = vld [vmem:[#allocation7 + $0x1c0] sm:$0xff]
        %v1851 = vld [vmem:[#allocation7 + $0x1c8] sm:$0xff]
        %v1852 = vld [vmem:[#allocation7 + $0x1d0] sm:$0xff]
        %v1853 = vld [vmem:[#allocation7 + $0x1d8] sm:$0xff]
        %v1854 = vld [vmem:[#allocation7 + $0x1e0] sm:$0xff]
        %v1855 = vld [vmem:[#allocation7 + $0x1e8] sm:$0xff]
        %v1856 = vld [vmem:[#allocation7 + $0x1f0] sm:$0xff]
        %v1857 = vld [vmem:[#allocation7 + $0x1f8] sm:$0xff]
        %v1874 = vsel %vm810, %v1612, %v1594
        %v1875 = vsel %vm812, %v1630, %v1874
        %v1876 = vsel %vm814, %v1648, %v1875
        %v1877 = vsel %vm816, %v1666, %v1876
        %v1878 = vsel %vm818, %v1684, %v1877
        %v1879 = vsel %vm820, %v1702, %v1878
        %v1880 = vsel %vm822, %v1720, %v1879
        %v1881 = vsel %vm810, %v1621, %v1603
        %v1882 = vsel %vm812, %v1639, %v1881
        %v1883 = vsel %vm814, %v1657, %v1882
        %v1884 = vsel %vm816, %v1675, %v1883
        %v1885 = vsel %vm818, %v1693, %v1884
        %v1886 = vsel %vm820, %v1711, %v1885
        %v1887 = vsel %vm822, %v1729, %v1886
        %1890 = vmatprep.subr.mxu0 %v1795
        %1891 = vmatpush1.msra.mxu0 %v1794
        %1892 = vmatprep.subr.mxu0 %v1797
        %1893 = vmatpush1.msra.mxu0 %v1796
        %1894 = vmatprep.subr.mxu0 %v1799
        %1895 = vmatpush1.msra.mxu0 %v1798
        %1896 = vmatprep.subr.mxu0 %v1801
        %1897 = vmatpush1.msra.mxu0 %v1800
        %1898 = vmatprep.subr.mxu0 %v1803
        %1899 = vmatpush1.msra.mxu0 %v1802
        %1900 = vmatprep.subr.mxu0 %v1805
        %1901 = vmatpush1.msra.mxu0 %v1804
        %1902 = vmatprep.subr.mxu0 %v1807
        %1903 = vmatpush1.msra.mxu0 %v1806
        %1904 = vmatprep.subr.mxu0 %v1809
        %1905 = vmatpush1.msra.mxu0 %v1808
        %1906 = vmatprep.subr.mxu0 %v1811
        %1907 = vmatpush1.msra.mxu0 %v1810
        %1908 = vmatprep.subr.mxu0 %v1813
        %1909 = vmatpush1.msra.mxu0 %v1812
        %1910 = vmatprep.subr.mxu0 %v1815
        %1911 = vmatpush1.msra.mxu0 %v1814
        %1912 = vmatprep.subr.mxu0 %v1817
        %1913 = vmatpush1.msra.mxu0 %v1816
        %1914 = vmatprep.subr.mxu0 %v1819
        %1915 = vmatpush1.msra.mxu0 %v1818
        %1916 = vmatprep.subr.mxu0 %v1821
        %1917 = vmatpush1.msra.mxu0 %v1820
        %1918 = vmatprep.subr.mxu0 %v1823
        %1919 = vmatpush1.msra.mxu0 %v1822
        %1920 = vmatprep.subr.mxu0 %v1825
        %1921 = vmatpush1.msra.mxu0 %v1824
        %1922 = vmatprep.subr.mxu0 %v1827
        %1923 = vmatpush1.msra.mxu0 %v1826
        %1924 = vmatprep.subr.mxu0 %v1829
        %1925 = vmatpush1.msra.mxu0 %v1828
        %1926 = vmatprep.subr.mxu0 %v1831
        %1927 = vmatpush1.msra.mxu0 %v1830
        %1928 = vmatprep.subr.mxu0 %v1833
        %1929 = vmatpush1.msra.mxu0 %v1832
        %1930 = vmatprep.subr.mxu0 %v1835
        %1931 = vmatpush1.msra.mxu0 %v1834
        %1932 = vmatprep.subr.mxu0 %v1837
        %1933 = vmatpush1.msra.mxu0 %v1836
        %1934 = vmatprep.subr.mxu0 %v1839
        %1935 = vmatpush1.msra.mxu0 %v1838
        %1936 = vmatprep.subr.mxu0 %v1841
        %1937 = vmatpush1.msra.mxu0 %v1840
        %1938 = vmatprep.subr.mxu0 %v1843
        %1939 = vmatpush1.msra.mxu0 %v1842
        %1940 = vmatprep.subr.mxu0 %v1845
        %1941 = vmatpush1.msra.mxu0 %v1844
        %1942 = vmatprep.subr.mxu0 %v1847
        %1943 = vmatpush1.msra.mxu0 %v1846
        %1944 = vmatprep.subr.mxu0 %v1849
        %1945 = vmatpush1.msra.mxu0 %v1848
        %1946 = vmatprep.subr.mxu0 %v1851
        %1947 = vmatpush1.msra.mxu0 %v1850
        %1948 = vmatprep.subr.mxu0 %v1853
        %1949 = vmatpush1.msra.mxu0 %v1852
        %1950 = vmatprep.subr.mxu0 %v1855
        %1951 = vmatpush1.msra.mxu0 %v1854
        %1952 = vmatprep.subr.mxu0 %v1857
        %1953 = vmatpush1.msra.mxu0 %v1856
        %1954 = vmatprep.mubr.f32.mxu0 %v1887
        %1955 = vmatmul.mubr.f32.gmra.mrb[0].mxu0 %v1880
        %v1956 = vpop.f32.mrb[0].mxu0
        %v1957 = vadd.f32 0.0, %v1956
        %v1958 = vpop.f32.mrb[0].mxu0
        %v1959 = vadd.f32 0.0, %v1958
        %1960 = vdwg.mxu0
        %v1977 = vsel %vm810, %v1572, %v1570
        %v1978 = vsel %vm812, %v1574, %v1977
        %v1979 = vsel %vm814, %v1576, %v1978
        %v1980 = vsel %vm816, %v1578, %v1979
        %v1981 = vsel %vm818, %v1580, %v1980
        %v1982 = vsel %vm820, %v1582, %v1981
        %v1983 = vsel %vm822, %v1584, %v1982
        %v1984 = vsel %vm810, %v1573, %v1571
        %v1985 = vsel %vm812, %v1575, %v1984
        %v1986 = vsel %vm814, %v1577, %v1985
        %v1987 = vsel %vm816, %v1579, %v1986
        %v1988 = vsel %vm818, %v1581, %v1987
        %v1989 = vsel %vm820, %v1583, %v1988
        %v1990 = vsel %vm822, %v1585, %v1989
        %1993 = vmatprep.subr.mxu0 %v1731
        %1994 = vmatpush1.msra.mxu0 %v1730
        %1995 = vmatprep.subr.mxu0 %v1733
        %1996 = vmatpush1.msra.mxu0 %v1732
        %1997 = vmatprep.subr.mxu0 %v1735
        %1998 = vmatpush1.msra.mxu0 %v1734
        %1999 = vmatprep.subr.mxu0 %v1737
        %2000 = vmatpush1.msra.mxu0 %v1736
        %2001 = vmatprep.subr.mxu0 %v1739
        %2002 = vmatpush1.msra.mxu0 %v1738
        %2003 = vmatprep.subr.mxu0 %v1741
        %2004 = vmatpush1.msra.mxu0 %v1740
        %2005 = vmatprep.subr.mxu0 %v1743
        %2006 = vmatpush1.msra.mxu0 %v1742
        %2007 = vmatprep.subr.mxu0 %v1745
        %2008 = vmatpush1.msra.mxu0 %v1744
        %2009 = vmatprep.subr.mxu0 %v1747
        %2010 = vmatpush1.msra.mxu0 %v1746
        %2011 = vmatprep.subr.mxu0 %v1749
        %2012 = vmatpush1.msra.mxu0 %v1748
        %2013 = vmatprep.subr.mxu0 %v1751
        %2014 = vmatpush1.msra.mxu0 %v1750
        %2015 = vmatprep.subr.mxu0 %v1753
        %2016 = vmatpush1.msra.mxu0 %v1752
        %2017 = vmatprep.subr.mxu0 %v1755
        %2018 = vmatpush1.msra.mxu0 %v1754
        %2019 = vmatprep.subr.mxu0 %v1757
        %2020 = vmatpush1.msra.mxu0 %v1756
        %2021 = vmatprep.subr.mxu0 %v1759
        %2022 = vmatpush1.msra.mxu0 %v1758
        %2023 = vmatprep.subr.mxu0 %v1761
        %2024 = vmatpush1.msra.mxu0 %v1760
        %2025 = vmatprep.subr.mxu0 %v1763
        %2026 = vmatpush1.msra.mxu0 %v1762
        %2027 = vmatprep.subr.mxu0 %v1765
        %2028 = vmatpush1.msra.mxu0 %v1764
        %2029 = vmatprep.subr.mxu0 %v1767
        %2030 = vmatpush1.msra.mxu0 %v1766
        %2031 = vmatprep.subr.mxu0 %v1769
        %2032 = vmatpush1.msra.mxu0 %v1768
        %2033 = vmatprep.subr.mxu0 %v1771
        %2034 = vmatpush1.msra.mxu0 %v1770
        %2035 = vmatprep.subr.mxu0 %v1773
        %2036 = vmatpush1.msra.mxu0 %v1772
        %2037 = vmatprep.subr.mxu0 %v1775
        %2038 = vmatpush1.msra.mxu0 %v1774
        %2039 = vmatprep.subr.mxu0 %v1777
        %2040 = vmatpush1.msra.mxu0 %v1776
        %2041 = vmatprep.subr.mxu0 %v1779
        %2042 = vmatpush1.msra.mxu0 %v1778
        %2043 = vmatprep.subr.mxu0 %v1781
        %2044 = vmatpush1.msra.mxu0 %v1780
        %2045 = vmatprep.subr.mxu0 %v1783
        %2046 = vmatpush1.msra.mxu0 %v1782
        %2047 = vmatprep.subr.mxu0 %v1785
        %2048 = vmatpush1.msra.mxu0 %v1784
        %2049 = vmatprep.subr.mxu0 %v1787
        %2050 = vmatpush1.msra.mxu0 %v1786
        %2051 = vmatprep.subr.mxu0 %v1789
        %2052 = vmatpush1.msra.mxu0 %v1788
        %2053 = vmatprep.subr.mxu0 %v1791
        %2054 = vmatpush1.msra.mxu0 %v1790
        %2055 = vmatprep.subr.mxu0 %v1793
        %2056 = vmatpush1.msra.mxu0 %v1792
        %2057 = vmatprep.mubr.f32.mxu0 %v1990
        %2058 = vmatmul.mubr.f32.gmra.mrb[0].mxu0 %v1983
        %v2059 = vpop.f32.mrb[0].mxu0
        %v2060 = vadd.f32 %v1957, %v2059
        %v2061 = vpop.f32.mrb[0].mxu0
        %v2062 = vadd.f32 %v1959, %v2061
        %2063 = vdwg.mxu0
        %v2064 = vxor.u32 %v2060, 2147483648
        %v2065 = vxor.u32 %v2062, 2147483648
        %v2066 = vmul.f32 %v2064, 1.442695
        %v2067 = vpow.pop %v2066
        %v2068 = vmul.f32 %v2065, 1.442695
        %v2069 = vpow.pop %v2068
        %v2070 = vadd.f32 %v2067, 1.0
        %v2071 = vadd.f32 %v2069, 1.0
        %v2072 = vrcp.pop %v2070
        %v2073 = vmul.f32 1.0, %v2072
        %v2074 = vrcp.pop %v2071
        %v2075 = vmul.f32 1.0, %v2074
        %v2078 = vcombine.low %v2073, %v2075
        %v2079 = vcombine.high %v2073, %v2075
        %v2081 = vunpack.c.l.s4 1966171168
        %v2082 = vunpack.c.0.s8 %v2081
        %v2083 = vlaneseq
        %v2084 = vshrl.u32 %v2083, 7
        %v2085 = vsub.s32 %v2082, %v2084
        %v2086 = vrot.slane %v2078, %v2085
        %v2088 = vunpack.c.l.s4 1966171168
        %v2089 = vunpack.c.0.s8 %v2088
        %v2090 = vlaneseq
        %v2091 = vshrl.u32 %v2090, 7
        %v2092 = vsub.s32 %v2089, %v2091
        %v2093 = vrot.slane %v2079, %v2092
        %v2094 = vcombine.high %v2086, %v2086
        %v2095 = vcombine.high %v2093, %v2093
        %v2097 = vunpack.c.l.s4 1966171168
        %v2098 = vunpack.c.0.s8 %v2097
        %v2099 = vlaneseq
        %v2100 = vshrl.u32 %v2099, 7
        %v2101 = vsub.s32 %v2098, %v2100
        %v2102 = vrot.slane %v2086, %v2101
        %v2104 = vunpack.c.l.s4 1966171168
        %v2105 = vunpack.c.0.s8 %v2104
        %v2106 = vlaneseq
        %v2107 = vshrl.u32 %v2106, 7
        %v2108 = vsub.s32 %v2105, %v2107
        %v2109 = vrot.slane %v2093, %v2108
        %v2111 = vunpack.c.l.s4 1966171168
        %v2112 = vunpack.c.0.s8 %v2111
        %v2113 = vlaneseq
        %v2114 = vshrl.u32 %v2113, 7
        %v2115 = vsub.s32 %v2112, %v2114
        %v2116 = vrot.slane %v2094, %v2115
        %v2118 = vunpack.c.l.s4 1966171168
        %v2119 = vunpack.c.0.s8 %v2118
        %v2120 = vlaneseq
        %v2121 = vshrl.u32 %v2120, 7
        %v2122 = vsub.s32 %v2119, %v2121
        %v2123 = vrot.slane %v2095, %v2122
        %v2124 = vcombine.high %v2102, %v2102
        %v2125 = vcombine.high %v2109, %v2109
        %v2126 = vcombine.high %v2116, %v2116
        %v2127 = vcombine.high %v2123, %v2123
        %v2128 = vlaneseq
        %v2129 = vshrl.u32 %v2128, 7
        %v2130 = vsub.s32 0, %v2129
        %v2131 = vrot.slane %v2102, %v2130
        %v2132 = vlaneseq
        %v2133 = vshrl.u32 %v2132, 7
        %v2134 = vsub.s32 1, %v2133
        %v2135 = vrot.slane %v2102, %v2134
        %v2136 = vlaneseq
        %v2137 = vshrl.u32 %v2136, 7
        %v2138 = vsub.s32 0, %v2137
        %v2139 = vrot.slane %v2116, %v2138
        %v2140 = vlaneseq
        %v2141 = vshrl.u32 %v2140, 7
        %v2142 = vsub.s32 1, %v2141
        %v2143 = vrot.slane %v2116, %v2142
        %v2144 = vlaneseq
        %v2145 = vshrl.u32 %v2144, 7
        %v2146 = vsub.s32 0, %v2145
        %v2147 = vrot.slane %v2124, %v2146
        %v2148 = vlaneseq
        %v2149 = vshrl.u32 %v2148, 7
        %v2150 = vsub.s32 1, %v2149
        %v2151 = vrot.slane %v2124, %v2150
        %v2152 = vlaneseq
        %v2153 = vshrl.u32 %v2152, 7
        %v2154 = vsub.s32 0, %v2153
        %v2155 = vrot.slane %v2126, %v2154
        %v2156 = vlaneseq
        %v2157 = vshrl.u32 %v2156, 7
        %v2158 = vsub.s32 1, %v2157
        %v2159 = vrot.slane %v2126, %v2158
        %v2160 = vlaneseq
        %v2161 = vshrl.u32 %v2160, 7
        %v2162 = vsub.s32 0, %v2161
        %v2163 = vrot.slane %v2109, %v2162
        %v2164 = vlaneseq
        %v2165 = vshrl.u32 %v2164, 7
        %v2166 = vsub.s32 1, %v2165
        %v2167 = vrot.slane %v2109, %v2166
        %v2168 = vlaneseq
        %v2169 = vshrl.u32 %v2168, 7
        %v2170 = vsub.s32 0, %v2169
        %v2171 = vrot.slane %v2123, %v2170
        %v2172 = vlaneseq
        %v2173 = vshrl.u32 %v2172, 7
        %v2174 = vsub.s32 1, %v2173
        %v2175 = vrot.slane %v2123, %v2174
        %v2176 = vlaneseq
        %v2177 = vshrl.u32 %v2176, 7
        %v2178 = vsub.s32 0, %v2177
        %v2179 = vrot.slane %v2125, %v2178
        %v2180 = vlaneseq
        %v2181 = vshrl.u32 %v2180, 7
        %v2182 = vsub.s32 1, %v2181
        %v2183 = vrot.slane %v2125, %v2182
        %v2184 = vlaneseq
        %v2185 = vshrl.u32 %v2184, 7
        %v2186 = vsub.s32 0, %v2185
        %v2187 = vrot.slane %v2127, %v2186
        %v2188 = vlaneseq
        %v2189 = vshrl.u32 %v2188, 7
        %v2190 = vsub.s32 1, %v2189
        %v2191 = vrot.slane %v2127, %v2190
        %v2208 = vmul.f32 %v1361, %v2131
        %v2209 = vmul.f32 %v1362, %v2135
        %v2210 = vmul.f32 %v1363, %v2131
        %v2211 = vmul.f32 %v1364, %v2135
        %v2212 = vmul.f32 %v1365, %v2131
        %v2213 = vmul.f32 %v1366, %v2135
        %v2214 = vmul.f32 %v1367, %v2131
        %v2215 = vmul.f32 %v1368, %v2135
        %v2216 = vmul.f32 %v1369, %v2139
        %v2217 = vmul.f32 %v1370, %v2143
        %v2218 = vmul.f32 %v1371, %v2139
        %v2219 = vmul.f32 %v1372, %v2143
        %v2220 = vmul.f32 %v1373, %v2139
        %v2221 = vmul.f32 %v1374, %v2143
        %v2222 = vmul.f32 %v1375, %v2139
        %v2223 = vmul.f32 %v1376, %v2143
        %v2224 = vmul.f32 %v1377, %v2147
        %v2225 = vmul.f32 %v1378, %v2151
        %v2226 = vmul.f32 %v1379, %v2147
        %v2227 = vmul.f32 %v1380, %v2151
        %v2228 = vmul.f32 %v1381, %v2147
        %v2229 = vmul.f32 %v1382, %v2151
        %v2230 = vmul.f32 %v1383, %v2147
        %v2231 = vmul.f32 %v1384, %v2151
        %v2232 = vmul.f32 %v1385, %v2155
        %v2233 = vmul.f32 %v1386, %v2159
        %v2234 = vmul.f32 %v1387, %v2155
        %v2235 = vmul.f32 %v1388, %v2159
        %v2236 = vmul.f32 %v1389, %v2155
        %v2237 = vmul.f32 %v1390, %v2159
        %v2238 = vmul.f32 %v1391, %v2155
        %v2239 = vmul.f32 %v1392, %v2159
        %v2240 = vmul.f32 %v1393, %v2163
        %v2241 = vmul.f32 %v1394, %v2167
        %v2242 = vmul.f32 %v1395, %v2163
        %v2243 = vmul.f32 %v1396, %v2167
        %v2244 = vmul.f32 %v1397, %v2163
        %v2245 = vmul.f32 %v1398, %v2167
        %v2246 = vmul.f32 %v1399, %v2163
        %v2247 = vmul.f32 %v1400, %v2167
        %v2248 = vmul.f32 %v1401, %v2171
        %v2249 = vmul.f32 %v1402, %v2175
        %v2250 = vmul.f32 %v1403, %v2171
        %v2251 = vmul.f32 %v1404, %v2175
        %v2252 = vmul.f32 %v1405, %v2171
        %v2253 = vmul.f32 %v1406, %v2175
        %v2254 = vmul.f32 %v1407, %v2171
        %v2255 = vmul.f32 %v1408, %v2175
        %v2256 = vmul.f32 %v1409, %v2179
        %v2257 = vmul.f32 %v1410, %v2183
        %v2258 = vmul.f32 %v1411, %v2179
        %v2259 = vmul.f32 %v1412, %v2183
        %v2260 = vmul.f32 %v1413, %v2179
        %v2261 = vmul.f32 %v1414, %v2183
        %v2262 = vmul.f32 %v1415, %v2179
        %v2263 = vmul.f32 %v1416, %v2183
        %v2264 = vmul.f32 %v1417, %v2187
        %v2265 = vmul.f32 %v1418, %v2191
        %v2266 = vmul.f32 %v1419, %v2187
        %v2267 = vmul.f32 %v1420, %v2191
        %v2268 = vmul.f32 %v1421, %v2187
        %v2269 = vmul.f32 %v1422, %v2191
        %v2270 = vmul.f32 %v1423, %v2187
        %v2271 = vmul.f32 %v1424, %v2191
        %2272 = vst [vmem:[%s326] sm:$0xff] %v2208
        %2273 = vst [vmem:[%s326 + $0x8] sm:$0xff] %v2209
        %2274 = vst [vmem:[%s326 + $0x10] sm:$0xff] %v2210
        %2275 = vst [vmem:[%s326 + $0x18] sm:$0xff] %v2211
        %2276 = vst [vmem:[%s326 + $0x20] sm:$0xff] %v2212
        %2277 = vst [vmem:[%s326 + $0x28] sm:$0xff] %v2213
        %2278 = vst [vmem:[%s326 + $0x30] sm:$0xff] %v2214
        %2279 = vst [vmem:[%s326 + $0x38] sm:$0xff] %v2215
        %2280 = vst [vmem:[%s326 + $0x40] sm:$0xff] %v2216
        %2281 = vst [vmem:[%s326 + $0x48] sm:$0xff] %v2217
        %2282 = vst [vmem:[%s326 + $0x50] sm:$0xff] %v2218
        %2283 = vst [vmem:[%s326 + $0x58] sm:$0xff] %v2219
        %2284 = vst [vmem:[%s326 + $0x60] sm:$0xff] %v2220
        %2285 = vst [vmem:[%s326 + $0x68] sm:$0xff] %v2221
        %2286 = vst [vmem:[%s326 + $0x70] sm:$0xff] %v2222
        %2287 = vst [vmem:[%s326 + $0x78] sm:$0xff] %v2223
        %2288 = vst [vmem:[%s326 + $0x80] sm:$0xff] %v2224
        %2289 = vst [vmem:[%s326 + $0x88] sm:$0xff] %v2225
        %2290 = vst [vmem:[%s326 + $0x90] sm:$0xff] %v2226
        %2291 = vst [vmem:[%s326 + $0x98] sm:$0xff] %v2227
        %2292 = vst [vmem:[%s326 + $0xa0] sm:$0xff] %v2228
        %2293 = vst [vmem:[%s326 + $0xa8] sm:$0xff] %v2229
        %2294 = vst [vmem:[%s326 + $0xb0] sm:$0xff] %v2230
        %2295 = vst [vmem:[%s326 + $0xb8] sm:$0xff] %v2231
        %2296 = vst [vmem:[%s326 + $0xc0] sm:$0xff] %v2232
        %2297 = vst [vmem:[%s326 + $0xc8] sm:$0xff] %v2233
        %2298 = vst [vmem:[%s326 + $0xd0] sm:$0xff] %v2234
        %2299 = vst [vmem:[%s326 + $0xd8] sm:$0xff] %v2235
        %2300 = vst [vmem:[%s326 + $0xe0] sm:$0xff] %v2236
        %2301 = vst [vmem:[%s326 + $0xe8] sm:$0xff] %v2237
        %2302 = vst [vmem:[%s326 + $0xf0] sm:$0xff] %v2238
        %2303 = vst [vmem:[%s326 + $0xf8] sm:$0xff] %v2239
        %2304 = vst [vmem:[%s326 + $0x100] sm:$0xff] %v2240
        %2305 = vst [vmem:[%s326 + $0x108] sm:$0xff] %v2241
        %2306 = vst [vmem:[%s326 + $0x110] sm:$0xff] %v2242
        %2307 = vst [vmem:[%s326 + $0x118] sm:$0xff] %v2243
        %2308 = vst [vmem:[%s326 + $0x120] sm:$0xff] %v2244
        %2309 = vst [vmem:[%s326 + $0x128] sm:$0xff] %v2245
        %2310 = vst [vmem:[%s326 + $0x130] sm:$0xff] %v2246
        %2311 = vst [vmem:[%s326 + $0x138] sm:$0xff] %v2247
        %2312 = vst [vmem:[%s326 + $0x140] sm:$0xff] %v2248
        %2313 = vst [vmem:[%s326 + $0x148] sm:$0xff] %v2249
        %2314 = vst [vmem:[%s326 + $0x150] sm:$0xff] %v2250
        %2315 = vst [vmem:[%s326 + $0x158] sm:$0xff] %v2251
        %2316 = vst [vmem:[%s326 + $0x160] sm:$0xff] %v2252
        %2317 = vst [vmem:[%s326 + $0x168] sm:$0xff] %v2253
        %2318 = vst [vmem:[%s326 + $0x170] sm:$0xff] %v2254
        %2319 = vst [vmem:[%s326 + $0x178] sm:$0xff] %v2255
        %2320 = vst [vmem:[%s326 + $0x180] sm:$0xff] %v2256
        %2321 = vst [vmem:[%s326 + $0x188] sm:$0xff] %v2257
        %2322 = vst [vmem:[%s326 + $0x190] sm:$0xff] %v2258
        %2323 = vst [vmem:[%s326 + $0x198] sm:$0xff] %v2259
        %2324 = vst [vmem:[%s326 + $0x1a0] sm:$0xff] %v2260
        %2325 = vst [vmem:[%s326 + $0x1a8] sm:$0xff] %v2261
        %2326 = vst [vmem:[%s326 + $0x1b0] sm:$0xff] %v2262
        %2327 = vst [vmem:[%s326 + $0x1b8] sm:$0xff] %v2263
        %2328 = vst [vmem:[%s326 + $0x1c0] sm:$0xff] %v2264
        %2329 = vst [vmem:[%s326 + $0x1c8] sm:$0xff] %v2265
        %2330 = vst [vmem:[%s326 + $0x1d0] sm:$0xff] %v2266
        %2331 = vst [vmem:[%s326 + $0x1d8] sm:$0xff] %v2267
        %2332 = vst [vmem:[%s326 + $0x1e0] sm:$0xff] %v2268
        %2333 = vst [vmem:[%s326 + $0x1e8] sm:$0xff] %v2269
        %2334 = vst [vmem:[%s326 + $0x1f0] sm:$0xff] %v2270
        %2335 = vst [vmem:[%s326 + $0x1f8] sm:$0xff] %v2271
        %s2336 = sand.u32 %s185, 1
        %s2337 = scalar_lea.sflag [#allocation4], %s2336
        %s2338 = sand.u32 %s185, 1
        %s2339 = smul.addr %s2338, 512
        %s2340 = scalar_lea.vmem [#allocation8], %s2339
        // Predicated region
        $region61: #{tpu_custom_call.1} parent=47 // pred_check
          %p2341 = pneg %p195
        $region62: #{tpu_custom_call.1} parent=47 // pred_check_branch
          %2343 = sbr.rel (%p2341) target = $region64
        $region63: #{tpu_custom_call.1} parent=47 // pred_region
          %s2344 = smul.u32 8, %s25
          %s2346 = ssub.s32 8192, 8192
          %2347 = vsyncadd %s2337, %s2346
          %s2348 = smul.addr %s2344, 8
          %s2349 = smul.addr %s2348, 128
          %s2350 = scalar_lea.hbm %s7, %s2349
          %s2351 = sshll.u32 %s2340, 4
          %s2352 = int_to_ptr.vmem [resolvable:$true] %s2351
          %2357 = dma.vmem_to_hbm [thread:$0]  %s2352, 8192, %s2350, %s2337, 256, 256, 16
        $region64: #{tpu_custom_call.1} parent=47 // pred_fallthru
          _
      $region48: #{tpu_custom_call.1} parent=5 // pred_fallthru
        _
      %p2358 = scmp.le.s32.totalorder 2, %s20
      // Predicated region
      $region65: #{tpu_custom_call.1} parent=5 // pred_check
        %p2359 = pneg %p2358
      $region66: #{tpu_custom_call.1} parent=5 // pred_check_branch
        %2361 = sbr.rel (%p2359) target = $region68
      $region67: #{tpu_custom_call.1} parent=5 // pred_region
        %s2362 = ssub.s32 %s20, 2
        // Predicated region
        $region69: #{tpu_custom_call.1} parent=67 // pred_check
          %p2363 = pneg %p201
        $region70: #{tpu_custom_call.1} parent=67 // pred_check_branch
          %2365 = sbr.rel (%p2363) target = $region72
        $region71: #{tpu_custom_call.1} parent=67 // pred_region
          %s2366 = sand.u32 %s186, 1
          %s2367 = scalar_lea.sflag [#allocation4], %s2366
          %s2368 = sand.u32 %s186, 1
          %s2369 = smul.addr %s2368, 512
          %s2370 = scalar_lea.vmem [#allocation8], %s2369
          %2371 = dma.done %s2367, 8192
        $region72: #{tpu_custom_call.1} parent=67 // pred_fallthru
          _
      $region68: #{tpu_custom_call.1} parent=5 // pred_fallthru
        _
    $region6: #{tpu_custom_call.1} parent=1 // loop_footer
      %s24 = sadd.s32 1, %s20
    $region7: #{tpu_custom_call.1} parent=1 // loop_footer_branch
      %19 = sbr.rel target = $region3
    $region8: #{tpu_custom_call.1} parent=1 // loop_exit
      _
    %2372 = vsyncpa [#allocation3], 1
    %s2373 = scalar_lea.sflag [#allocation3], 1
    %2374 = vsyncpa %s2373, 1
    %2375 = vsyncpa [#allocation6], 1
    %2376 = vsyncpa [#allocation4], 1
    %s2377 = scalar_lea.sflag [#allocation4], 1
    %2378 = vsyncpa %s2377, 1

</llo_original>
